<compile_context>
chip_gen: v6e
topology: v6e:2x2x1
jax: 0.10.0
libtpu: 0.0.40
codegen_flags: <defaults>
</compile_context>

<pallas_src>
import functools

import jax
import jax.numpy as jnp
import numpy as np
from jax import lax
from jax.experimental import pallas as pl
from jax.experimental.pallas import tpu as pltpu


# ----------------------------------------------------------------------------
# Pallas kernels
# ----------------------------------------------------------------------------
def _stem_kernel(x0_ref, x1_ref, x2_ref, wa_ref, w4_ref, ba_ref, b4_ref,
                 o_ref, dmax_ref, *, Wp, rows):
    """Fused 1x1x1 branches + maxpool3d(3,1,1)+1x1x1 branch, one (n, d) plane.

    x{0,1,2}_ref: (L, Cin) bf16 flattened (-1e30)-padded planes at depths
                  d, d+1, d+2 (halo for the pool).
    wa_ref: (Cin, c1+c2a+c3a) bf16  -- w1 | w2a | w3a concatenated along Cout.
    w4_ref: (Cin, c4) bf16.
    o_ref:  (rows, c1+c2a+c3a+c4) bf16, rows = H * Wp (junk width columns are
            sliced away by the wrapper).
    """
    # --- three 1x1 convs on the same input: one lane-dense bf16 matmul -------
    center = x1_ref[Wp + 1:Wp + 1 + rows, :]            # original x values
    ya = jnp.dot(center, wa_ref[...], preferred_element_type=jnp.float32)
    ya = jnp.maximum(ya + ba_ref[...], 0.0)

    # --- 3x3x3 max pool (stride 1, pad 1) from the three halo planes ---------
    dmax_ref[...] = jnp.maximum(jnp.maximum(x0_ref[...], x1_ref[...]),
                                x2_ref[...])
    pooled = None
    for kh in range(3):
        for kw in range(3):
            s = kh * Wp + kw
            tap = dmax_ref[s:s + rows, :]
            pooled = tap if pooled is None else jnp.maximum(pooled, tap)
    y4 = jnp.dot(pooled, w4_ref[...], preferred_element_type=jnp.float32)
    y4 = jnp.maximum(y4 + b4_ref[...], 0.0)

    # --- single fused bf16 store: [p1 | h2 | h3 | p4] along channels ----------
    o_ref[...] = jnp.concatenate(
        [ya.astype(o_ref.dtype), y4.astype(o_ref.dtype)], axis=1)


def _conv_tap_kernel(h_ref, w_ref, b_ref, o_ref, *, K, Wp, rows):
    """KxKxK conv + bias + relu for one (n, d) output plane; kd = grid reduction.

    h_ref:  (L, Cin) bf16 flattened zero-padded plane at depth d + kd.
    w_ref:  (K, K*K*Cin, Cout) bf16 -- full weight, resident; w_ref[kd] is the
            tap block for this depth offset.
    o_ref:  (rows, Cout) f32, VMEM-resident across kd (accumulator), rows = H*Wp.
    """
    kd = pl.program_id(2)

    @pl.when(kd == 0)
    def _():                                    # fold the bias into the init
        o_ref[...] = jnp.broadcast_to(b_ref[...], o_ref.shape)

    # Fold the K*K in-plane taps into one deep-contraction matmul.
    taps = [h_ref[kh * Wp + kw: kh * Wp + kw + rows, :]
            for kh in range(K) for kw in range(K)]
    slab = jnp.concatenate(taps, axis=1)        # (rows, K*K*Cin) bf16
    o_ref[...] += jnp.dot(slab, w_ref[kd], preferred_element_type=jnp.float32)

    @pl.when(kd == K - 1)
    def _():
        o_ref[...] = jnp.maximum(o_ref[...], 0.0)


# ----------------------------------------------------------------------------
# Layout helpers (weight packing, padded flattened planes)
# ----------------------------------------------------------------------------
def _w1x1(w):
    """PyTorch Conv3d 1x1x1 weight (Cout, Cin, 1, 1, 1) -> (Cin, Cout)."""
    co, ci = w.shape[0], w.shape[1]
    return jnp.transpose(w.reshape(co, ci), (1, 0))


def _wtaps(w):
    """PyTorch Conv3d weight (Cout, Cin, K, K, K) -> (K, K, K, Cin, Cout)."""
    return jnp.transpose(w, (2, 3, 4, 1, 0))


def _pad_flatten(x_ndhwc, K, pad_value):
    """(N, D, H, W, C) -> bf16 (N, D+K-1, (H+K)*(W+K-1), C).

    Depth/width padded by K//2 on both sides, height by (K//2, K//2 + 1) so
    every in-kernel tap slice [kh*Wp+kw : kh*Wp+kw + H*Wp) stays in bounds.
    Output position q = h*Wp + w (valid columns w < W, the rest is junk that
    the wrapper slices away).
    """
    N, D, H, W, C = x_ndhwc.shape
    p = K // 2
    xp = jnp.pad(x_ndhwc.astype(jnp.bfloat16),
                 ((0, 0), (p, p), (p, p + 1), (p, p), (0, 0)),
                 constant_values=pad_value)
    Wp = W + 2 * p
    return xp.reshape(N, D + 2 * p, (H + K) * Wp, C)


# ----------------------------------------------------------------------------
# pallas_call wrappers
# ----------------------------------------------------------------------------
def fused_stem(xflat, wa, w4, ba, b4, *, H, W):
    """relu(x @ [w1|w2a|w3a] + b) and relu(maxpool3d(x,3,1,1) @ w4 + b4), fused
    into one bf16 output with channels [c1 | c2a | c3a | c4]."""
    N, Dext, L, Cin = xflat.shape
    D = Dext - 2
    Wp = W + 2
    rows = H * Wp
    C123, C4 = wa.shape[1], w4.shape[1]
    Ctot = C123 + C4

    def plane_spec(kd):
        def imap(n, d):
            return (n, d + kd, 0, 0)
        return pl.BlockSpec((None, None, L, Cin), imap)

    return pl.pallas_call(
        functools.partial(_stem_kernel, Wp=Wp, rows=rows),
        out_shape=jax.ShapeDtypeStruct((N, D, rows, Ctot), jnp.bfloat16),
        grid_spec=pltpu.PrefetchScalarGridSpec(
            num_scalar_prefetch=0,
            grid=(N, D),
            in_specs=[
                plane_spec(0), plane_spec(1), plane_spec(2),
                pl.BlockSpec((Cin, C123), lambda n, d: (0, 0)),
                pl.BlockSpec((Cin, C4), lambda n, d: (0, 0)),
                pl.BlockSpec((1, C123), lambda n, d: (0, 0)),
                pl.BlockSpec((1, C4), lambda n, d: (0, 0)),
            ],
            out_specs=pl.BlockSpec((None, None, rows, Ctot),
                                   lambda n, d: (n, d, 0, 0)),
            scratch_shapes=[pltpu.VMEM((L, Cin), jnp.bfloat16)],
        ),
        compiler_params=pltpu.CompilerParams(
            dimension_semantics=("parallel", "parallel")),
    )(xflat, xflat, xflat, wa, w4, ba, b4)


def conv3d_bias_relu(h_ndhwc, w, b, K):
    """relu(conv3d(h, w, padding=K//2, stride=1) + b) via in-kernel tap folding."""
    N, D, H, W, Cin = h_ndhwc.shape
    Cout = w.shape[0]
    p = K // 2
    Wp = W + 2 * p
    rows = H * Wp
    KKC = K * K * Cin

    hflat = _pad_flatten(h_ndhwc, K, 0.0)            # (N, D+2p, L, Cin) bf16
    L = hflat.shape[2]
    # (Cout, Cin, K, K, K) -> (K, K, K, Cin, Cout) -> (K, K*K*Cin, Cout)
    wt = _wtaps(w).astype(jnp.bfloat16).reshape(K, KKC, Cout)
    b2 = b.reshape(1, Cout).astype(jnp.float32)

    out = pl.pallas_call(
        functools.partial(_conv_tap_kernel, K=K, Wp=Wp, rows=rows),
        out_shape=jax.ShapeDtypeStruct((N, D, rows, Cout), jnp.float32),
        grid_spec=pltpu.PrefetchScalarGridSpec(
            num_scalar_prefetch=0,
            grid=(N, D, K),
            in_specs=[
                pl.BlockSpec((None, None, L, Cin),
                             lambda n, d, kd: (n, d + kd, 0, 0)),
                # full weight, constant block index -> stays VMEM-resident
                pl.BlockSpec((K, KKC, Cout), lambda n, d, kd: (0, 0, 0)),
                pl.BlockSpec((1, Cout), lambda n, d, kd: (0, 0)),
            ],
            out_specs=pl.BlockSpec((None, None, rows, Cout),
                                   lambda n, d, kd: (n, d, 0, 0)),
        ),
        compiler_params=pltpu.CompilerParams(
            dimension_semantics=("parallel", "parallel", "arbitrary")),
    )(hflat, wt, b2)

    # drop the K-1 junk columns that come from flat-plane tap addressing
    return out.reshape(N, D, H, Wp, Cout)[:, :, :, :W, :]


def inception_pallas(x_ncdhw, params):
    """Forward pass of the Inception 3D block.  Input/output layout: NCDHW."""
    N, Cin, D, H, W = x_ncdhw.shape
    x = jnp.transpose(x_ncdhw, (0, 2, 3, 4, 1))         # NDHWC

    c1 = params["w1"].shape[0]
    c2a = params["w2a"].shape[0]
    c3a = params["w3a"].shape[0]

    # fused 1x1 weights (w1 | w2a | w3a) along Cout
    wa = jnp.concatenate(
        [_w1x1(params["w1"]), _w1x1(params["w2a"]), _w1x1(params["w3a"])],
        axis=1).astype(jnp.bfloat16)
    ba = jnp.concatenate(
        [params["b1"], params["b2a"], params["b3a"]]
    ).reshape(1, -1).astype(jnp.float32)
    w4 = _w1x1(params["w4"]).astype(jnp.bfloat16)
    b4 = params["b4"].reshape(1, -1).astype(jnp.float32)

    # stem: pool halo planes padded with a very negative (never-selected) value
    xflat = _pad_flatten(x, 3, -1e30)
    o = fused_stem(xflat, wa, w4, ba, b4, H=H, W=W)      # (N, D, rows, Ctot) bf16

    Wp = W + 2
    o = o.reshape(N, D, H, Wp, -1)[:, :, :, :W, :]       # drop junk width cols

    p1 = o[..., :c1].astype(jnp.float32)
    h2 = o[..., c1:c1 + c2a]                              # bf16, conv-ready
    h3 = o[..., c1 + c2a:c1 + c2a + c3a]                  # bf16, conv-ready
    p4 = o[..., c1 + c2a + c3a:].astype(jnp.float32)

    # branch 2/3: 3x3x3 and 5x5x5 convs with tap-folded single matmul per kd
    p2 = conv3d_bias_relu(h2, params["w2b"], params["b2b"], 3)
    p3 = conv3d_bias_relu(h3, params["w3b"], params["b3b"], 5)

    y = jnp.concatenate([p1, p2, p3, p4], axis=-1)       # channels-last concat
    return jnp.transpose(y, (0, 4, 1, 2, 3))             # single NCDHW transpose


# ----------------------------------------------------------------------------
# Pure-JAX reference (bf16 operands / f32 accumulation, matching the kernels)
# ----------------------------------------------------------------------------
def inception_ref(x, params):
    def conv(xx, w, b, pad):
        y = lax.conv_general_dilated(
            xx.astype(jnp.bfloat16), w.astype(jnp.bfloat16),
            window_strides=(1, 1, 1), padding=[(pad, pad)] * 3,
            dimension_numbers=("NCDHW", "OIDHW", "NCDHW"),
            preferred_element_type=jnp.float32)
        return y + b.reshape(1, -1, 1, 1, 1)

    relu = lambda v: jnp.maximum(v, 0.0)
    p1 = relu(conv(x, params["w1"], params["b1"], 0))
    p2 = relu(conv(relu(conv(x, params["w2a"], params["b2a"], 0)),
                   params["w2b"], params["b2b"], 1))
    p3 = relu(conv(relu(conv(x, params["w3a"], params["b3a"], 0)),
                   params["w3b"], params["b3b"], 2))
    pooled = lax.reduce_window(
        x, -jnp.inf, lax.max, (1, 1, 3, 3, 3), (1, 1, 1, 1, 1),
        [(0, 0), (0, 0), (1, 1), (1, 1), (1, 1)])
    p4 = relu(conv(pooled, params["w4"], params["b4"], 0))
    return jnp.concatenate([p1, p2, p3, p4], axis=1)


# ----------------------------------------------------------------------------
# Deterministic parameter init (shapes follow the nn.Module __init__)
# ----------------------------------------------------------------------------
def init_params(key, cin, c1, c2, c3, c4):
    ks = jax.random.split(key, 12)
    w = lambda k, s: jax.random.normal(k, s, jnp.float32) * 0.1
    b = lambda k, n: jax.random.normal(k, (n,), jnp.float32) * 0.05
    return dict(
        w1=w(ks[0], (c1, cin, 1, 1, 1)), b1=b(ks[1], c1),
        w2a=w(ks[2], (c2[0], cin, 1, 1, 1)), b2a=b(ks[3], c2[0]),
        w2b=w(ks[4], (c2[1], c2[0], 3, 3, 3)), b2b=b(ks[5], c2[1]),
        w3a=w(ks[6], (c3[0], cin, 1, 1, 1)), b3a=b(ks[7], c3[0]),
        w3b=w(ks[8], (c3[1], c3[0], 5, 5, 5)), b3b=b(ks[9], c3[1]),
        w4=w(ks[10], (c4, cin, 1, 1, 1)), b4=b(ks[11], c4),
    )


if __name__ == "__main__":
    key = jax.random.PRNGKey(0)
    kx, kp = jax.random.split(key)

    # small shapes: batch=2, in_channel=4, D=H=W=8
    N, Cin, D, H, W = 2, 4, 8, 8, 8
    x = jax.random.normal(kx, (N, Cin, D, H, W), jnp.float32)
    params = init_params(kp, cin=Cin, c1=4, c2=(4, 8), c3=(2, 4), c4=4)

    fwd = jax.jit(inception_pallas)
    out = jax.block_until_ready(fwd(x, params))

    ref = inception_ref(x, params)
    assert out.shape == ref.shape == (N, 4 + 8 + 4 + 4, D, H, W)
    np.testing.assert_allclose(np.asarray(out), np.asarray(ref),
                               rtol=1e-2, atol=1e-2)
    print("KERNEL_OK")
</pallas_src>

<mosaic_0001>
module attributes {stable_mosaic.version = 11 : i64} {
  func.func @_stem_kernel(%arg0: i32, %arg1: i32, %arg2: memref<1x1x110x4xbf16, #tpu.memory_space<vmem>>, %arg3: memref<1x1x110x4xbf16, #tpu.memory_space<vmem>>, %arg4: memref<1x1x110x4xbf16, #tpu.memory_space<vmem>>, %arg5: memref<4x10xbf16, #tpu.memory_space<vmem>>, %arg6: memref<4x4xbf16, #tpu.memory_space<vmem>>, %arg7: memref<1x10xf32, #tpu.memory_space<vmem>>, %arg8: memref<1x4xf32, #tpu.memory_space<vmem>>, %arg9: memref<1x1x80x14xbf16, #tpu.memory_space<vmem>>, %arg10: memref<110x4xbf16, #tpu.memory_space<vmem>>) attributes {dimension_semantics = [#tpu.dimension_semantics<parallel>, #tpu.dimension_semantics<parallel>], iteration_bounds = array<i64: 2, 8>, scalar_prefetch = 0 : i64, scratch_operands = 1 : i64, tpu.core_type = #tpu.core_type<tc>, window_params = [{transform_indices = @transform_0, window_bounds = array<i64: 1, 1, 110, 4>}, {transform_indices = @transform_1, window_bounds = array<i64: 1, 1, 110, 4>}, {transform_indices = @transform_2, window_bounds = array<i64: 1, 1, 110, 4>}, {pipeline_mode = #tpu.pipeline_mode<synchronous>, transform_indices = @transform_3, window_bounds = array<i64: 4, 10>}, {pipeline_mode = #tpu.pipeline_mode<synchronous>, transform_indices = @transform_4, window_bounds = array<i64: 4, 4>}, {pipeline_mode = #tpu.pipeline_mode<synchronous>, transform_indices = @transform_5, window_bounds = array<i64: 1, 10>}, {pipeline_mode = #tpu.pipeline_mode<synchronous>, transform_indices = @transform_6, window_bounds = array<i64: 1, 4>}, {transform_indices = @transform_7, window_bounds = array<i64: 1, 1, 80, 14>}]} {
    %c0 = arith.constant 0 : index
    %c0_0 = arith.constant 0 : index
    %c11 = arith.constant 11 : index
    %c0_1 = arith.constant 0 : index
    %0 = vector.load %arg3[%c0, %c0_0, %c11, %c0_1] : memref<1x1x110x4xbf16, #tpu.memory_space<vmem>>, vector<1x1x80x4xbf16>
    %1 = vector.shape_cast %0 : vector<1x1x80x4xbf16> to vector<80x4xbf16>
    %c0_2 = arith.constant 0 : index
    %c0_3 = arith.constant 0 : index
    %2 = vector.load %arg5[%c0_2, %c0_3] : memref<4x10xbf16, #tpu.memory_space<vmem>>, vector<4x10xbf16>
    %cst = arith.constant dense<0.000000e+00> : vector<80x10xf32>
    %3 = tpu.matmul %1, %2, %cst {dimension_numbers = #tpu.dot_dimension_numbers<[1], [0], [0], [1], [0, 0, 1, 1], [], []>} : vector<80x4xbf16>, vector<4x10xbf16>, vector<80x10xf32> -> vector<80x10xf32>
    %c0_4 = arith.constant 0 : index
    %c0_5 = arith.constant 0 : index
    %4 = vector.load %arg7[%c0_4, %c0_5] : memref<1x10xf32, #tpu.memory_space<vmem>>, vector<1x10xf32>
    %5 = vector.broadcast %4 : vector<1x10xf32> to vector<80x10xf32>
    %6 = arith.addf %3, %5 : vector<80x10xf32>
    %cst_6 = arith.constant 0.000000e+00 : f32
    %7 = vector.broadcast %cst_6 : f32 to vector<80x10xf32>
    %8 = arith.maximumf %6, %7 : vector<80x10xf32>
    %c0_7 = arith.constant 0 : index
    %c0_8 = arith.constant 0 : index
    %c0_9 = arith.constant 0 : index
    %c0_10 = arith.constant 0 : index
    %9 = vector.load %arg2[%c0_7, %c0_8, %c0_9, %c0_10] : memref<1x1x110x4xbf16, #tpu.memory_space<vmem>>, vector<1x1x110x4xbf16>
    %10 = vector.shape_cast %9 : vector<1x1x110x4xbf16> to vector<110x4xbf16>
    %c0_11 = arith.constant 0 : index
    %c0_12 = arith.constant 0 : index
    %c0_13 = arith.constant 0 : index
    %c0_14 = arith.constant 0 : index
    %11 = vector.load %arg3[%c0_11, %c0_12, %c0_13, %c0_14] : memref<1x1x110x4xbf16, #tpu.memory_space<vmem>>, vector<1x1x110x4xbf16>
    %12 = vector.shape_cast %11 : vector<1x1x110x4xbf16> to vector<110x4xbf16>
    %13 = arith.maximumf %10, %12 : vector<110x4xbf16>
    %c0_15 = arith.constant 0 : index
    %c0_16 = arith.constant 0 : index
    %c0_17 = arith.constant 0 : index
    %c0_18 = arith.constant 0 : index
    %14 = vector.load %arg4[%c0_15, %c0_16, %c0_17, %c0_18] : memref<1x1x110x4xbf16, #tpu.memory_space<vmem>>, vector<1x1x110x4xbf16>
    %15 = vector.shape_cast %14 : vector<1x1x110x4xbf16> to vector<110x4xbf16>
    %16 = arith.maximumf %13, %15 : vector<110x4xbf16>
    %c0_19 = arith.constant 0 : index
    %c0_20 = arith.constant 0 : index
    %17 = vector.load %arg10[%c0_19, %c0_20] : memref<110x4xbf16, #tpu.memory_space<vmem>>, vector<110x4xbf16>
    tpu.vector_store %arg10[%c0_19, %c0_20], %16 {strides = array<i32>} : memref<110x4xbf16, #tpu.memory_space<vmem>>, vector<110x4xbf16>,
    %c0_21 = arith.constant 0 : index
    %c0_22 = arith.constant 0 : index
    %18 = vector.load %arg10[%c0_21, %c0_22] : memref<110x4xbf16, #tpu.memory_space<vmem>>, vector<80x4xbf16>
    %c1 = arith.constant 1 : index
    %c0_23 = arith.constant 0 : index
    %19 = vector.load %arg10[%c1, %c0_23] : memref<110x4xbf16, #tpu.memory_space<vmem>>, vector<80x4xbf16>
    %20 = arith.maximumf %18, %19 : vector<80x4xbf16>
    %c2 = arith.constant 2 : index
    %c0_24 = arith.constant 0 : index
    %21 = vector.load %arg10[%c2, %c0_24] : memref<110x4xbf16, #tpu.memory_space<vmem>>, vector<80x4xbf16>
    %22 = arith.maximumf %20, %21 : vector<80x4xbf16>
    %c10 = arith.constant 10 : index
    %c0_25 = arith.constant 0 : index
    %23 = vector.load %arg10[%c10, %c0_25] : memref<110x4xbf16, #tpu.memory_space<vmem>>, vector<80x4xbf16>
    %24 = arith.maximumf %22, %23 : vector<80x4xbf16>
    %c11_26 = arith.constant 11 : index
    %c0_27 = arith.constant 0 : index
    %25 = vector.load %arg10[%c11_26, %c0_27] : memref<110x4xbf16, #tpu.memory_space<vmem>>, vector<80x4xbf16>
    %26 = arith.maximumf %24, %25 : vector<80x4xbf16>
    %c12 = arith.constant 12 : index
    %c0_28 = arith.constant 0 : index
    %27 = vector.load %arg10[%c12, %c0_28] : memref<110x4xbf16, #tpu.memory_space<vmem>>, vector<80x4xbf16>
    %28 = arith.maximumf %26, %27 : vector<80x4xbf16>
    %c20 = arith.constant 20 : index
    %c0_29 = arith.constant 0 : index
    %29 = vector.load %arg10[%c20, %c0_29] : memref<110x4xbf16, #tpu.memory_space<vmem>>, vector<80x4xbf16>
    %30 = arith.maximumf %28, %29 : vector<80x4xbf16>
    %c21 = arith.constant 21 : index
    %c0_30 = arith.constant 0 : index
    %31 = vector.load %arg10[%c21, %c0_30] : memref<110x4xbf16, #tpu.memory_space<vmem>>, vector<80x4xbf16>
    %32 = arith.maximumf %30, %31 : vector<80x4xbf16>
    %c22 = arith.constant 22 : index
    %c0_31 = arith.constant 0 : index
    %33 = vector.load %arg10[%c22, %c0_31] : memref<110x4xbf16, #tpu.memory_space<vmem>>, vector<80x4xbf16>
    %34 = arith.maximumf %32, %33 : vector<80x4xbf16>
    %c0_32 = arith.constant 0 : index
    %c0_33 = arith.constant 0 : index
    %35 = vector.load %arg6[%c0_32, %c0_33] : memref<4x4xbf16, #tpu.memory_space<vmem>>, vector<4x4xbf16>
    %cst_34 = arith.constant dense<0.000000e+00> : vector<80x4xf32>
    %36 = tpu.matmul %34, %35, %cst_34 {dimension_numbers = #tpu.dot_dimension_numbers<[1], [0], [0], [1], [0, 0, 1, 1], [], []>} : vector<80x4xbf16>, vector<4x4xbf16>, vector<80x4xf32> -> vector<80x4xf32>
    %c0_35 = arith.constant 0 : index
    %c0_36 = arith.constant 0 : index
    %37 = vector.load %arg8[%c0_35, %c0_36] : memref<1x4xf32, #tpu.memory_space<vmem>>, vector<1x4xf32>
    %38 = vector.broadcast %37 : vector<1x4xf32> to vector<80x4xf32>
    %39 = arith.addf %36, %38 : vector<80x4xf32>
    %cst_37 = arith.constant 0.000000e+00 : f32
    %40 = vector.broadcast %cst_37 : f32 to vector<80x4xf32>
    %41 = arith.maximumf %39, %40 : vector<80x4xf32>
    %42 = arith.truncf %8 : vector<80x10xf32> to vector<80x10xbf16>
    %43 = arith.truncf %41 : vector<80x4xf32> to vector<80x4xbf16>
    %44 = tpu.concatenate %42, %43 in 1 : vector<80x10xbf16>, vector<80x4xbf16> -> vector<80x14xbf16>
    %c0_38 = arith.constant 0 : index
    %c0_39 = arith.constant 0 : index
    %c0_40 = arith.constant 0 : index
    %c0_41 = arith.constant 0 : index
    %45 = vector.load %arg9[%c0_38, %c0_39, %c0_40, %c0_41] : memref<1x1x80x14xbf16, #tpu.memory_space<vmem>>, vector<1x1x80x14xbf16>
    %46 = vector.shape_cast %45 : vector<1x1x80x14xbf16> to vector<80x14xbf16>
    %47 = vector.shape_cast %44 : vector<80x14xbf16> to vector<1x1x80x14xbf16>
    tpu.vector_store %arg9[%c0_38, %c0_39, %c0_40, %c0_41], %47 {strides = array<i32>} : memref<1x1x80x14xbf16, #tpu.memory_space<vmem>>, vector<1x1x80x14xbf16>,
    return
  }
  func.func @transform_0(%arg0: i32, %arg1: i32) -> (i32, i32, i32, i32) {
    %c0_i32 = arith.constant 0 : i32
    %0 = arith.addi %arg1, %c0_i32 : i32
    %c0_i32_0 = arith.constant 0 : i32
    %c0_i32_1 = arith.constant 0 : i32
    %c0_i32_2 = arith.constant 0 : i32
    return %arg0, %0, %c0_i32_0, %c0_i32_1 : i32, i32, i32, i32
  }
  func.func @transform_1(%arg0: i32, %arg1: i32) -> (i32, i32, i32, i32) {
    %c1_i32 = arith.constant 1 : i32
    %0 = arith.addi %arg1, %c1_i32 : i32
    %c0_i32 = arith.constant 0 : i32
    %c0_i32_0 = arith.constant 0 : i32
    %c0_i32_1 = arith.constant 0 : i32
    return %arg0, %0, %c0_i32, %c0_i32_0 : i32, i32, i32, i32
  }
  func.func @transform_2(%arg0: i32, %arg1: i32) -> (i32, i32, i32, i32) {
    %c2_i32 = arith.constant 2 : i32
    %0 = arith.addi %arg1, %c2_i32 : i32
    %c0_i32 = arith.constant 0 : i32
    %c0_i32_0 = arith.constant 0 : i32
    %c0_i32_1 = arith.constant 0 : i32
    return %arg0, %0, %c0_i32, %c0_i32_0 : i32, i32, i32, i32
  }
  func.func @transform_3(%arg0: i32, %arg1: i32) -> (i32, i32) {
    %c0_i32 = arith.constant 0 : i32
    %c0_i32_0 = arith.constant 0 : i32
    %c0_i32_1 = arith.constant 0 : i32
    return %c0_i32, %c0_i32_0 : i32, i32
  }
  func.func @transform_4(%arg0: i32, %arg1: i32) -> (i32, i32) {
    %c0_i32 = arith.constant 0 : i32
    %c0_i32_0 = arith.constant 0 : i32
    %c0_i32_1 = arith.constant 0 : i32
    return %c0_i32, %c0_i32_0 : i32, i32
  }
  func.func @transform_5(%arg0: i32, %arg1: i32) -> (i32, i32) {
    %c0_i32 = arith.constant 0 : i32
    %c0_i32_0 = arith.constant 0 : i32
    %c0_i32_1 = arith.constant 0 : i32
    return %c0_i32, %c0_i32_0 : i32, i32
  }
  func.func @transform_6(%arg0: i32, %arg1: i32) -> (i32, i32) {
    %c0_i32 = arith.constant 0 : i32
    %c0_i32_0 = arith.constant 0 : i32
    %c0_i32_1 = arith.constant 0 : i32
    return %c0_i32, %c0_i32_0 : i32, i32
  }
  func.func @transform_7(%arg0: i32, %arg1: i32) -> (i32, i32, i32, i32) {
    %c0_i32 = arith.constant 0 : i32
    %c0_i32_0 = arith.constant 0 : i32
    %c0_i32_1 = arith.constant 0 : i32
    return %arg0, %arg1, %c0_i32, %c0_i32_0 : i32, i32, i32, i32
  }
}

module attributes {stable_mosaic.version = 11 : i64} {
  func.func @_conv_tap_kernel(%arg0: i32, %arg1: i32, %arg2: i32, %arg3: memref<1x1x156x2xbf16, #tpu.memory_space<vmem>>, %arg4: memref<5x50x4xbf16, #tpu.memory_space<vmem>>, %arg5: memref<1x4xf32, #tpu.memory_space<vmem>>, %arg6: memref<1x1x96x4xf32, #tpu.memory_space<vmem>>) attributes {dimension_semantics = [#tpu.dimension_semantics<parallel>, #tpu.dimension_semantics<parallel>, #tpu.dimension_semantics<arbitrary>], iteration_bounds = array<i64: 2, 8, 5>, scalar_prefetch = 0 : i64, scratch_operands = 0 : i64, tpu.core_type = #tpu.core_type<tc>, window_params = [{transform_indices = @transform_0, window_bounds = array<i64: 1, 1, 156, 2>}, {pipeline_mode = #tpu.pipeline_mode<synchronous>, transform_indices = @transform_1, window_bounds = array<i64: 5, 50, 4>}, {pipeline_mode = #tpu.pipeline_mode<synchronous>, transform_indices = @transform_2, window_bounds = array<i64: 1, 4>}, {transform_indices = @transform_3, window_bounds = array<i64: 1, 1, 96, 4>}]} {
    %c0_i32 = arith.constant 0 : i32
    %0 = arith.cmpi eq, %arg2, %c0_i32 : i32
    %1 = arith.extui %0 : i1 to i32
    %c0_i32_0 = arith.constant 0 : i32
    %2 = arith.cmpi ne, %1, %c0_i32_0 : i32
    scf.if %2 {
      %c0_87 = arith.constant 0 : index
      %c0_88 = arith.constant 0 : index
      %69 = vector.load %arg5[%c0_87, %c0_88] : memref<1x4xf32, #tpu.memory_space<vmem>>, vector<1x4xf32>
      %70 = vector.shape_cast %69 : vector<1x4xf32> to vector<1x4xf32>
      %71 = vector.broadcast %70 : vector<1x4xf32> to vector<96x4xf32>
      %c0_89 = arith.constant 0 : index
      %c0_90 = arith.constant 0 : index
      %c0_91 = arith.constant 0 : index
      %c0_92 = arith.constant 0 : index
      %72 = vector.load %arg6[%c0_89, %c0_90, %c0_91, %c0_92] : memref<1x1x96x4xf32, #tpu.memory_space<vmem>>, vector<1x1x96x4xf32>
      %73 = vector.shape_cast %72 : vector<1x1x96x4xf32> to vector<96x4xf32>
      %74 = vector.shape_cast %71 : vector<96x4xf32> to vector<1x1x96x4xf32>
      tpu.vector_store %arg6[%c0_89, %c0_90, %c0_91, %c0_92], %74 {strides = array<i32>} : memref<1x1x96x4xf32, #tpu.memory_space<vmem>>, vector<1x1x96x4xf32>,
    } else {
    }
    %c0 = arith.constant 0 : index
    %c0_1 = arith.constant 0 : index
    %c0_2 = arith.constant 0 : index
    %c0_3 = arith.constant 0 : index
    %3 = vector.load %arg3[%c0, %c0_1, %c0_2, %c0_3] : memref<1x1x156x2xbf16, #tpu.memory_space<vmem>>, vector<1x1x96x2xbf16>
    %4 = vector.shape_cast %3 : vector<1x1x96x2xbf16> to vector<96x2xbf16>
    %c0_4 = arith.constant 0 : index
    %c0_5 = arith.constant 0 : index
    %c1 = arith.constant 1 : index
    %c0_6 = arith.constant 0 : index
    %5 = vector.load %arg3[%c0_4, %c0_5, %c1, %c0_6] : memref<1x1x156x2xbf16, #tpu.memory_space<vmem>>, vector<1x1x96x2xbf16>
    %6 = vector.shape_cast %5 : vector<1x1x96x2xbf16> to vector<96x2xbf16>
    %c0_7 = arith.constant 0 : index
    %c0_8 = arith.constant 0 : index
    %c2 = arith.constant 2 : index
    %c0_9 = arith.constant 0 : index
    %7 = vector.load %arg3[%c0_7, %c0_8, %c2, %c0_9] : memref<1x1x156x2xbf16, #tpu.memory_space<vmem>>, vector<1x1x96x2xbf16>
    %8 = vector.shape_cast %7 : vector<1x1x96x2xbf16> to vector<96x2xbf16>
    %c0_10 = arith.constant 0 : index
    %c0_11 = arith.constant 0 : index
    %c3 = arith.constant 3 : index
    %c0_12 = arith.constant 0 : index
    %9 = vector.load %arg3[%c0_10, %c0_11, %c3, %c0_12] : memref<1x1x156x2xbf16, #tpu.memory_space<vmem>>, vector<1x1x96x2xbf16>
    %10 = vector.shape_cast %9 : vector<1x1x96x2xbf16> to vector<96x2xbf16>
    %c0_13 = arith.constant 0 : index
    %c0_14 = arith.constant 0 : index
    %c4 = arith.constant 4 : index
    %c0_15 = arith.constant 0 : index
    %11 = vector.load %arg3[%c0_13, %c0_14, %c4, %c0_15] : memref<1x1x156x2xbf16, #tpu.memory_space<vmem>>, vector<1x1x96x2xbf16>
    %12 = vector.shape_cast %11 : vector<1x1x96x2xbf16> to vector<96x2xbf16>
    %c0_16 = arith.constant 0 : index
    %c0_17 = arith.constant 0 : index
    %c12 = arith.constant 12 : index
    %c0_18 = arith.constant 0 : index
    %13 = vector.load %arg3[%c0_16, %c0_17, %c12, %c0_18] : memref<1x1x156x2xbf16, #tpu.memory_space<vmem>>, vector<1x1x96x2xbf16>
    %14 = vector.shape_cast %13 : vector<1x1x96x2xbf16> to vector<96x2xbf16>
    %c0_19 = arith.constant 0 : index
    %c0_20 = arith.constant 0 : index
    %c13 = arith.constant 13 : index
    %c0_21 = arith.constant 0 : index
    %15 = vector.load %arg3[%c0_19, %c0_20, %c13, %c0_21] : memref<1x1x156x2xbf16, #tpu.memory_space<vmem>>, vector<1x1x96x2xbf16>
    %16 = vector.shape_cast %15 : vector<1x1x96x2xbf16> to vector<96x2xbf16>
    %c0_22 = arith.constant 0 : index
    %c0_23 = arith.constant 0 : index
    %c14 = arith.constant 14 : index
    %c0_24 = arith.constant 0 : index
    %17 = vector.load %arg3[%c0_22, %c0_23, %c14, %c0_24] : memref<1x1x156x2xbf16, #tpu.memory_space<vmem>>, vector<1x1x96x2xbf16>
    %18 = vector.shape_cast %17 : vector<1x1x96x2xbf16> to vector<96x2xbf16>
    %c0_25 = arith.constant 0 : index
    %c0_26 = arith.constant 0 : index
    %c15 = arith.constant 15 : index
    %c0_27 = arith.constant 0 : index
    %19 = vector.load %arg3[%c0_25, %c0_26, %c15, %c0_27] : memref<1x1x156x2xbf16, #tpu.memory_space<vmem>>, vector<1x1x96x2xbf16>
    %20 = vector.shape_cast %19 : vector<1x1x96x2xbf16> to vector<96x2xbf16>
    %c0_28 = arith.constant 0 : index
    %c0_29 = arith.constant 0 : index
    %c16 = arith.constant 16 : index
    %c0_30 = arith.constant 0 : index
    %21 = vector.load %arg3[%c0_28, %c0_29, %c16, %c0_30] : memref<1x1x156x2xbf16, #tpu.memory_space<vmem>>, vector<1x1x96x2xbf16>
    %22 = vector.shape_cast %21 : vector<1x1x96x2xbf16> to vector<96x2xbf16>
    %c0_31 = arith.constant 0 : index
    %c0_32 = arith.constant 0 : index
    %c24 = arith.constant 24 : index
    %c0_33 = arith.constant 0 : index
    %23 = vector.load %arg3[%c0_31, %c0_32, %c24, %c0_33] : memref<1x1x156x2xbf16, #tpu.memory_space<vmem>>, vector<1x1x96x2xbf16>
    %24 = vector.shape_cast %23 : vector<1x1x96x2xbf16> to vector<96x2xbf16>
    %c0_34 = arith.constant 0 : index
    %c0_35 = arith.constant 0 : index
    %c25 = arith.constant 25 : index
    %c0_36 = arith.constant 0 : index
    %25 = vector.load %arg3[%c0_34, %c0_35, %c25, %c0_36] : memref<1x1x156x2xbf16, #tpu.memory_space<vmem>>, vector<1x1x96x2xbf16>
    %26 = vector.shape_cast %25 : vector<1x1x96x2xbf16> to vector<96x2xbf16>
    %c0_37 = arith.constant 0 : index
    %c0_38 = arith.constant 0 : index
    %c26 = arith.constant 26 : index
    %c0_39 = arith.constant 0 : index
    %27 = vector.load %arg3[%c0_37, %c0_38, %c26, %c0_39] : memref<1x1x156x2xbf16, #tpu.memory_space<vmem>>, vector<1x1x96x2xbf16>
    %28 = vector.shape_cast %27 : vector<1x1x96x2xbf16> to vector<96x2xbf16>
    %c0_40 = arith.constant 0 : index
    %c0_41 = arith.constant 0 : index
    %c27 = arith.constant 27 : index
    %c0_42 = arith.constant 0 : index
    %29 = vector.load %arg3[%c0_40, %c0_41, %c27, %c0_42] : memref<1x1x156x2xbf16, #tpu.memory_space<vmem>>, vector<1x1x96x2xbf16>
    %30 = vector.shape_cast %29 : vector<1x1x96x2xbf16> to vector<96x2xbf16>
    %c0_43 = arith.constant 0 : index
    %c0_44 = arith.constant 0 : index
    %c28 = arith.constant 28 : index
    %c0_45 = arith.constant 0 : index
    %31 = vector.load %arg3[%c0_43, %c0_44, %c28, %c0_45] : memref<1x1x156x2xbf16, #tpu.memory_space<vmem>>, vector<1x1x96x2xbf16>
    %32 = vector.shape_cast %31 : vector<1x1x96x2xbf16> to vector<96x2xbf16>
    %c0_46 = arith.constant 0 : index
    %c0_47 = arith.constant 0 : index
    %c36 = arith.constant 36 : index
    %c0_48 = arith.constant 0 : index
    %33 = vector.load %arg3[%c0_46, %c0_47, %c36, %c0_48] : memref<1x1x156x2xbf16, #tpu.memory_space<vmem>>, vector<1x1x96x2xbf16>
    %34 = vector.shape_cast %33 : vector<1x1x96x2xbf16> to vector<96x2xbf16>
    %c0_49 = arith.constant 0 : index
    %c0_50 = arith.constant 0 : index
    %c37 = arith.constant 37 : index
    %c0_51 = arith.constant 0 : index
    %35 = vector.load %arg3[%c0_49, %c0_50, %c37, %c0_51] : memref<1x1x156x2xbf16, #tpu.memory_space<vmem>>, vector<1x1x96x2xbf16>
    %36 = vector.shape_cast %35 : vector<1x1x96x2xbf16> to vector<96x2xbf16>
    %c0_52 = arith.constant 0 : index
    %c0_53 = arith.constant 0 : index
    %c38 = arith.constant 38 : index
    %c0_54 = arith.constant 0 : index
    %37 = vector.load %arg3[%c0_52, %c0_53, %c38, %c0_54] : memref<1x1x156x2xbf16, #tpu.memory_space<vmem>>, vector<1x1x96x2xbf16>
    %38 = vector.shape_cast %37 : vector<1x1x96x2xbf16> to vector<96x2xbf16>
    %c0_55 = arith.constant 0 : index
    %c0_56 = arith.constant 0 : index
    %c39 = arith.constant 39 : index
    %c0_57 = arith.constant 0 : index
    %39 = vector.load %arg3[%c0_55, %c0_56, %c39, %c0_57] : memref<1x1x156x2xbf16, #tpu.memory_space<vmem>>, vector<1x1x96x2xbf16>
    %40 = vector.shape_cast %39 : vector<1x1x96x2xbf16> to vector<96x2xbf16>
    %c0_58 = arith.constant 0 : index
    %c0_59 = arith.constant 0 : index
    %c40 = arith.constant 40 : index
    %c0_60 = arith.constant 0 : index
    %41 = vector.load %arg3[%c0_58, %c0_59, %c40, %c0_60] : memref<1x1x156x2xbf16, #tpu.memory_space<vmem>>, vector<1x1x96x2xbf16>
    %42 = vector.shape_cast %41 : vector<1x1x96x2xbf16> to vector<96x2xbf16>
    %c0_61 = arith.constant 0 : index
    %c0_62 = arith.constant 0 : index
    %c48 = arith.constant 48 : index
    %c0_63 = arith.constant 0 : index
    %43 = vector.load %arg3[%c0_61, %c0_62, %c48, %c0_63] : memref<1x1x156x2xbf16, #tpu.memory_space<vmem>>, vector<1x1x96x2xbf16>
    %44 = vector.shape_cast %43 : vector<1x1x96x2xbf16> to vector<96x2xbf16>
    %c0_64 = arith.constant 0 : index
    %c0_65 = arith.constant 0 : index
    %c49 = arith.constant 49 : index
    %c0_66 = arith.constant 0 : index
    %45 = vector.load %arg3[%c0_64, %c0_65, %c49, %c0_66] : memref<1x1x156x2xbf16, #tpu.memory_space<vmem>>, vector<1x1x96x2xbf16>
    %46 = vector.shape_cast %45 : vector<1x1x96x2xbf16> to vector<96x2xbf16>
    %c0_67 = arith.constant 0 : index
    %c0_68 = arith.constant 0 : index
    %c50 = arith.constant 50 : index
    %c0_69 = arith.constant 0 : index
    %47 = vector.load %arg3[%c0_67, %c0_68, %c50, %c0_69] : memref<1x1x156x2xbf16, #tpu.memory_space<vmem>>, vector<1x1x96x2xbf16>
    %48 = vector.shape_cast %47 : vector<1x1x96x2xbf16> to vector<96x2xbf16>
    %c0_70 = arith.constant 0 : index
    %c0_71 = arith.constant 0 : index
    %c51 = arith.constant 51 : index
    %c0_72 = arith.constant 0 : index
    %49 = vector.load %arg3[%c0_70, %c0_71, %c51, %c0_72] : memref<1x1x156x2xbf16, #tpu.memory_space<vmem>>, vector<1x1x96x2xbf16>
    %50 = vector.shape_cast %49 : vector<1x1x96x2xbf16> to vector<96x2xbf16>
    %c0_73 = arith.constant 0 : index
    %c0_74 = arith.constant 0 : index
    %c52 = arith.constant 52 : index
    %c0_75 = arith.constant 0 : index
    %51 = vector.load %arg3[%c0_73, %c0_74, %c52, %c0_75] : memref<1x1x156x2xbf16, #tpu.memory_space<vmem>>, vector<1x1x96x2xbf16>
    %52 = vector.shape_cast %51 : vector<1x1x96x2xbf16> to vector<96x2xbf16>
    %53 = tpu.concatenate %4, %6, %8, %10, %12, %14, %16, %18, %20, %22, %24, %26, %28, %30, %32, %34 in 1 : vector<96x2xbf16>, vector<96x2xbf16>, vector<96x2xbf16>, vector<96x2xbf16>, vector<96x2xbf16>, vector<96x2xbf16>, vector<96x2xbf16>, vector<96x2xbf16>, vector<96x2xbf16>, vector<96x2xbf16>, vector<96x2xbf16>, vector<96x2xbf16>, vector<96x2xbf16>, vector<96x2xbf16>, vector<96x2xbf16>, vector<96x2xbf16> -> vector<96x32xbf16>
    %54 = tpu.concatenate %36, %38, %40, %42, %44, %46, %48, %50, %52 in 1 : vector<96x2xbf16>, vector<96x2xbf16>, vector<96x2xbf16>, vector<96x2xbf16>, vector<96x2xbf16>, vector<96x2xbf16>, vector<96x2xbf16>, vector<96x2xbf16>, vector<96x2xbf16> -> vector<96x18xbf16>
    %55 = tpu.concatenate %53, %54 in 1 : vector<96x32xbf16>, vector<96x18xbf16> -> vector<96x50xbf16>
    %c0_76 = arith.constant 0 : index
    %c0_77 = arith.constant 0 : index
    %c0_78 = arith.constant 0 : index
    %c0_79 = arith.constant 0 : index
    %56 = vector.load %arg6[%c0_76, %c0_77, %c0_78, %c0_79] : memref<1x1x96x4xf32, #tpu.memory_space<vmem>>, vector<1x1x96x4xf32>
    %57 = vector.shape_cast %56 : vector<1x1x96x4xf32> to vector<96x4xf32>
    %58 = arith.index_cast %arg2 : i32 to index
    %c0_80 = arith.constant 0 : index
    %c0_81 = arith.constant 0 : index
    %59 = vector.load %arg4[%58, %c0_80, %c0_81] : memref<5x50x4xbf16, #tpu.memory_space<vmem>>, vector<1x50x4xbf16>
    %60 = vector.shape_cast %59 : vector<1x50x4xbf16> to vector<50x4xbf16>
    %cst = arith.constant dense<0.000000e+00> : vector<96x4xf32>
    %61 = tpu.matmul %55, %60, %cst {dimension_numbers = #tpu.dot_dimension_numbers<[1], [0], [0], [1], [0, 0, 1, 1], [], []>} : vector<96x50xbf16>, vector<50x4xbf16>, vector<96x4xf32> -> vector<96x4xf32>
    %62 = arith.addf %57, %61 : vector<96x4xf32>
    %c0_82 = arith.constant 0 : index
    %c0_83 = arith.constant 0 : index
    %c0_84 = arith.constant 0 : index
    %c0_85 = arith.constant 0 : index
    %63 = vector.load %arg6[%c0_82, %c0_83, %c0_84, %c0_85] : memref<1x1x96x4xf32, #tpu.memory_space<vmem>>, vector<1x1x96x4xf32>
    %64 = vector.shape_cast %63 : vector<1x1x96x4xf32> to vector<96x4xf32>
    %65 = vector.shape_cast %62 : vector<96x4xf32> to vector<1x1x96x4xf32>
    tpu.vector_store %arg6[%c0_82, %c0_83, %c0_84, %c0_85], %65 {strides = array<i32>} : memref<1x1x96x4xf32, #tpu.memory_space<vmem>>, vector<1x1x96x4xf32>,
    %c4_i32 = arith.constant 4 : i32
    %66 = arith.cmpi eq, %arg2, %c4_i32 : i32
    %67 = arith.extui %66 : i1 to i32
    %c0_i32_86 = arith.constant 0 : i32
    %68 = arith.cmpi ne, %67, %c0_i32_86 : i32
    scf.if %68 {
      %c0_87 = arith.constant 0 : index
      %c0_88 = arith.constant 0 : index
      %c0_89 = arith.constant 0 : index
      %c0_90 = arith.constant 0 : index
      %69 = vector.load %arg6[%c0_87, %c0_88, %c0_89, %c0_90] : memref<1x1x96x4xf32, #tpu.memory_space<vmem>>, vector<1x1x96x4xf32>
      %70 = vector.shape_cast %69 : vector<1x1x96x4xf32> to vector<96x4xf32>
      %cst_91 = arith.constant 0.000000e+00 : f32
      %71 = vector.broadcast %cst_91 : f32 to vector<96x4xf32>
      %72 = arith.maximumf %70, %71 : vector<96x4xf32>
      %c0_92 = arith.constant 0 : index
      %c0_93 = arith.constant 0 : index
      %c0_94 = arith.constant 0 : index
      %c0_95 = arith.constant 0 : index
      %73 = vector.load %arg6[%c0_92, %c0_93, %c0_94, %c0_95] : memref<1x1x96x4xf32, #tpu.memory_space<vmem>>, vector<1x1x96x4xf32>
      %74 = vector.shape_cast %73 : vector<1x1x96x4xf32> to vector<96x4xf32>
      %75 = vector.shape_cast %72 : vector<96x4xf32> to vector<1x1x96x4xf32>
      tpu.vector_store %arg6[%c0_92, %c0_93, %c0_94, %c0_95], %75 {strides = array<i32>} : memref<1x1x96x4xf32, #tpu.memory_space<vmem>>, vector<1x1x96x4xf32>,
    } else {
    }
    return
  }
  func.func @transform_0(%arg0: i32, %arg1: i32, %arg2: i32) -> (i32, i32, i32, i32) {
    %0 = arith.addi %arg1, %arg2 : i32
    %c0_i32 = arith.constant 0 : i32
    %c0_i32_0 = arith.constant 0 : i32
    %c0_i32_1 = arith.constant 0 : i32
    return %arg0, %0, %c0_i32, %c0_i32_0 : i32, i32, i32, i32
  }
  func.func @transform_1(%arg0: i32, %arg1: i32, %arg2: i32) -> (i32, i32, i32) {
    %c0_i32 = arith.constant 0 : i32
    %c0_i32_0 = arith.constant 0 : i32
    %c0_i32_1 = arith.constant 0 : i32
    %c0_i32_2 = arith.constant 0 : i32
    return %c0_i32, %c0_i32_0, %c0_i32_1 : i32, i32, i32
  }
  func.func @transform_2(%arg0: i32, %arg1: i32, %arg2: i32) -> (i32, i32) {
    %c0_i32 = arith.constant 0 : i32
    %c0_i32_0 = arith.constant 0 : i32
    %c0_i32_1 = arith.constant 0 : i32
    return %c0_i32, %c0_i32_0 : i32, i32
  }
  func.func @transform_3(%arg0: i32, %arg1: i32, %arg2: i32) -> (i32, i32, i32, i32) {
    %c0_i32 = arith.constant 0 : i32
    %c0_i32_0 = arith.constant 0 : i32
    %c0_i32_1 = arith.constant 0 : i32
    return %arg0, %arg1, %c0_i32, %c0_i32_0 : i32, i32, i32, i32
  }
}

module attributes {stable_mosaic.version = 11 : i64} {
  func.func @_conv_tap_kernel(%arg0: i32, %arg1: i32, %arg2: i32, %arg3: memref<1x1x110x4xbf16, #tpu.memory_space<vmem>>, %arg4: memref<3x36x8xbf16, #tpu.memory_space<vmem>>, %arg5: memref<1x8xf32, #tpu.memory_space<vmem>>, %arg6: memref<1x1x80x8xf32, #tpu.memory_space<vmem>>) attributes {dimension_semantics = [#tpu.dimension_semantics<parallel>, #tpu.dimension_semantics<parallel>, #tpu.dimension_semantics<arbitrary>], iteration_bounds = array<i64: 2, 8, 3>, scalar_prefetch = 0 : i64, scratch_operands = 0 : i64, tpu.core_type = #tpu.core_type<tc>, window_params = [{transform_indices = @transform_0, window_bounds = array<i64: 1, 1, 110, 4>}, {pipeline_mode = #tpu.pipeline_mode<synchronous>, transform_indices = @transform_1, window_bounds = array<i64: 3, 36, 8>}, {pipeline_mode = #tpu.pipeline_mode<synchronous>, transform_indices = @transform_2, window_bounds = array<i64: 1, 8>}, {transform_indices = @transform_3, window_bounds = array<i64: 1, 1, 80, 8>}]} {
    %c0_i32 = arith.constant 0 : i32
    %0 = arith.cmpi eq, %arg2, %c0_i32 : i32
    %1 = arith.extui %0 : i1 to i32
    %c0_i32_0 = arith.constant 0 : i32
    %2 = arith.cmpi ne, %1, %c0_i32_0 : i32
    scf.if %2 {
      %c0_39 = arith.constant 0 : index
      %c0_40 = arith.constant 0 : index
      %35 = vector.load %arg5[%c0_39, %c0_40] : memref<1x8xf32, #tpu.memory_space<vmem>>, vector<1x8xf32>
      %36 = vector.shape_cast %35 : vector<1x8xf32> to vector<1x8xf32>
      %37 = vector.broadcast %36 : vector<1x8xf32> to vector<80x8xf32>
      %c0_41 = arith.constant 0 : index
      %c0_42 = arith.constant 0 : index
      %c0_43 = arith.constant 0 : index
      %c0_44 = arith.constant 0 : index
      %38 = vector.load %arg6[%c0_41, %c0_42, %c0_43, %c0_44] : memref<1x1x80x8xf32, #tpu.memory_space<vmem>>, vector<1x1x80x8xf32>
      %39 = vector.shape_cast %38 : vector<1x1x80x8xf32> to vector<80x8xf32>
      %40 = vector.shape_cast %37 : vector<80x8xf32> to vector<1x1x80x8xf32>
      tpu.vector_store %arg6[%c0_41, %c0_42, %c0_43, %c0_44], %40 {strides = array<i32>} : memref<1x1x80x8xf32, #tpu.memory_space<vmem>>, vector<1x1x80x8xf32>,
    } else {
    }
    %c0 = arith.constant 0 : index
    %c0_1 = arith.constant 0 : index
    %c0_2 = arith.constant 0 : index
    %c0_3 = arith.constant 0 : index
    %3 = vector.load %arg3[%c0, %c0_1, %c0_2, %c0_3] : memref<1x1x110x4xbf16, #tpu.memory_space<vmem>>, vector<1x1x80x4xbf16>
    %4 = vector.shape_cast %3 : vector<1x1x80x4xbf16> to vector<80x4xbf16>
    %c0_4 = arith.constant 0 : index
    %c0_5 = arith.constant 0 : index
    %c1 = arith.constant 1 : index
    %c0_6 = arith.constant 0 : index
    %5 = vector.load %arg3[%c0_4, %c0_5, %c1, %c0_6] : memref<1x1x110x4xbf16, #tpu.memory_space<vmem>>, vector<1x1x80x4xbf16>
    %6 = vector.shape_cast %5 : vector<1x1x80x4xbf16> to vector<80x4xbf16>
    %c0_7 = arith.constant 0 : index
    %c0_8 = arith.constant 0 : index
    %c2 = arith.constant 2 : index
    %c0_9 = arith.constant 0 : index
    %7 = vector.load %arg3[%c0_7, %c0_8, %c2, %c0_9] : memref<1x1x110x4xbf16, #tpu.memory_space<vmem>>, vector<1x1x80x4xbf16>
    %8 = vector.shape_cast %7 : vector<1x1x80x4xbf16> to vector<80x4xbf16>
    %c0_10 = arith.constant 0 : index
    %c0_11 = arith.constant 0 : index
    %c10 = arith.constant 10 : index
    %c0_12 = arith.constant 0 : index
    %9 = vector.load %arg3[%c0_10, %c0_11, %c10, %c0_12] : memref<1x1x110x4xbf16, #tpu.memory_space<vmem>>, vector<1x1x80x4xbf16>
    %10 = vector.shape_cast %9 : vector<1x1x80x4xbf16> to vector<80x4xbf16>
    %c0_13 = arith.constant 0 : index
    %c0_14 = arith.constant 0 : index
    %c11 = arith.constant 11 : index
    %c0_15 = arith.constant 0 : index
    %11 = vector.load %arg3[%c0_13, %c0_14, %c11, %c0_15] : memref<1x1x110x4xbf16, #tpu.memory_space<vmem>>, vector<1x1x80x4xbf16>
    %12 = vector.shape_cast %11 : vector<1x1x80x4xbf16> to vector<80x4xbf16>
    %c0_16 = arith.constant 0 : index
    %c0_17 = arith.constant 0 : index
    %c12 = arith.constant 12 : index
    %c0_18 = arith.constant 0 : index
    %13 = vector.load %arg3[%c0_16, %c0_17, %c12, %c0_18] : memref<1x1x110x4xbf16, #tpu.memory_space<vmem>>, vector<1x1x80x4xbf16>
    %14 = vector.shape_cast %13 : vector<1x1x80x4xbf16> to vector<80x4xbf16>
    %c0_19 = arith.constant 0 : index
    %c0_20 = arith.constant 0 : index
    %c20 = arith.constant 20 : index
    %c0_21 = arith.constant 0 : index
    %15 = vector.load %arg3[%c0_19, %c0_20, %c20, %c0_21] : memref<1x1x110x4xbf16, #tpu.memory_space<vmem>>, vector<1x1x80x4xbf16>
    %16 = vector.shape_cast %15 : vector<1x1x80x4xbf16> to vector<80x4xbf16>
    %c0_22 = arith.constant 0 : index
    %c0_23 = arith.constant 0 : index
    %c21 = arith.constant 21 : index
    %c0_24 = arith.constant 0 : index
    %17 = vector.load %arg3[%c0_22, %c0_23, %c21, %c0_24] : memref<1x1x110x4xbf16, #tpu.memory_space<vmem>>, vector<1x1x80x4xbf16>
    %18 = vector.shape_cast %17 : vector<1x1x80x4xbf16> to vector<80x4xbf16>
    %c0_25 = arith.constant 0 : index
    %c0_26 = arith.constant 0 : index
    %c22 = arith.constant 22 : index
    %c0_27 = arith.constant 0 : index
    %19 = vector.load %arg3[%c0_25, %c0_26, %c22, %c0_27] : memref<1x1x110x4xbf16, #tpu.memory_space<vmem>>, vector<1x1x80x4xbf16>
    %20 = vector.shape_cast %19 : vector<1x1x80x4xbf16> to vector<80x4xbf16>
    %21 = tpu.concatenate %4, %6, %8, %10, %12, %14, %16, %18, %20 in 1 : vector<80x4xbf16>, vector<80x4xbf16>, vector<80x4xbf16>, vector<80x4xbf16>, vector<80x4xbf16>, vector<80x4xbf16>, vector<80x4xbf16>, vector<80x4xbf16>, vector<80x4xbf16> -> vector<80x36xbf16>
    %c0_28 = arith.constant 0 : index
    %c0_29 = arith.constant 0 : index
    %c0_30 = arith.constant 0 : index
    %c0_31 = arith.constant 0 : index
    %22 = vector.load %arg6[%c0_28, %c0_29, %c0_30, %c0_31] : memref<1x1x80x8xf32, #tpu.memory_space<vmem>>, vector<1x1x80x8xf32>
    %23 = vector.shape_cast %22 : vector<1x1x80x8xf32> to vector<80x8xf32>
    %24 = arith.index_cast %arg2 : i32 to index
    %c0_32 = arith.constant 0 : index
    %c0_33 = arith.constant 0 : index
    %25 = vector.load %arg4[%24, %c0_32, %c0_33] : memref<3x36x8xbf16, #tpu.memory_space<vmem>>, vector<1x36x8xbf16>
    %26 = vector.shape_cast %25 : vector<1x36x8xbf16> to vector<36x8xbf16>
    %cst = arith.constant dense<0.000000e+00> : vector<80x8xf32>
    %27 = tpu.matmul %21, %26, %cst {dimension_numbers = #tpu.dot_dimension_numbers<[1], [0], [0], [1], [0, 0, 1, 1], [], []>} : vector<80x36xbf16>, vector<36x8xbf16>, vector<80x8xf32> -> vector<80x8xf32>
    %28 = arith.addf %23, %27 : vector<80x8xf32>
    %c0_34 = arith.constant 0 : index
    %c0_35 = arith.constant 0 : index
    %c0_36 = arith.constant 0 : index
    %c0_37 = arith.constant 0 : index
    %29 = vector.load %arg6[%c0_34, %c0_35, %c0_36, %c0_37] : memref<1x1x80x8xf32, #tpu.memory_space<vmem>>, vector<1x1x80x8xf32>
    %30 = vector.shape_cast %29 : vector<1x1x80x8xf32> to vector<80x8xf32>
    %31 = vector.shape_cast %28 : vector<80x8xf32> to vector<1x1x80x8xf32>
    tpu.vector_store %arg6[%c0_34, %c0_35, %c0_36, %c0_37], %31 {strides = array<i32>} : memref<1x1x80x8xf32, #tpu.memory_space<vmem>>, vector<1x1x80x8xf32>,
    %c2_i32 = arith.constant 2 : i32
    %32 = arith.cmpi eq, %arg2, %c2_i32 : i32
    %33 = arith.extui %32 : i1 to i32
    %c0_i32_38 = arith.constant 0 : i32
    %34 = arith.cmpi ne, %33, %c0_i32_38 : i32
    scf.if %34 {
      %c0_39 = arith.constant 0 : index
      %c0_40 = arith.constant 0 : index
      %c0_41 = arith.constant 0 : index
      %c0_42 = arith.constant 0 : index
      %35 = vector.load %arg6[%c0_39, %c0_40, %c0_41, %c0_42] : memref<1x1x80x8xf32, #tpu.memory_space<vmem>>, vector<1x1x80x8xf32>
      %36 = vector.shape_cast %35 : vector<1x1x80x8xf32> to vector<80x8xf32>
      %cst_43 = arith.constant 0.000000e+00 : f32
      %37 = vector.broadcast %cst_43 : f32 to vector<80x8xf32>
      %38 = arith.maximumf %36, %37 : vector<80x8xf32>
      %c0_44 = arith.constant 0 : index
      %c0_45 = arith.constant 0 : index
      %c0_46 = arith.constant 0 : index
      %c0_47 = arith.constant 0 : index
      %39 = vector.load %arg6[%c0_44, %c0_45, %c0_46, %c0_47] : memref<1x1x80x8xf32, #tpu.memory_space<vmem>>, vector<1x1x80x8xf32>
      %40 = vector.shape_cast %39 : vector<1x1x80x8xf32> to vector<80x8xf32>
      %41 = vector.shape_cast %38 : vector<80x8xf32> to vector<1x1x80x8xf32>
      tpu.vector_store %arg6[%c0_44, %c0_45, %c0_46, %c0_47], %41 {strides = array<i32>} : memref<1x1x80x8xf32, #tpu.memory_space<vmem>>, vector<1x1x80x8xf32>,
    } else {
    }
    return
  }
  func.func @transform_0(%arg0: i32, %arg1: i32, %arg2: i32) -> (i32, i32, i32, i32) {
    %0 = arith.addi %arg1, %arg2 : i32
    %c0_i32 = arith.constant 0 : i32
    %c0_i32_0 = arith.constant 0 : i32
    %c0_i32_1 = arith.constant 0 : i32
    return %arg0, %0, %c0_i32, %c0_i32_0 : i32, i32, i32, i32
  }
  func.func @transform_1(%arg0: i32, %arg1: i32, %arg2: i32) -> (i32, i32, i32) {
    %c0_i32 = arith.constant 0 : i32
    %c0_i32_0 = arith.constant 0 : i32
    %c0_i32_1 = arith.constant 0 : i32
    %c0_i32_2 = arith.constant 0 : i32
    return %c0_i32, %c0_i32_0, %c0_i32_1 : i32, i32, i32
  }
  func.func @transform_2(%arg0: i32, %arg1: i32, %arg2: i32) -> (i32, i32) {
    %c0_i32 = arith.constant 0 : i32
    %c0_i32_0 = arith.constant 0 : i32
    %c0_i32_1 = arith.constant 0 : i32
    return %c0_i32, %c0_i32_0 : i32, i32
  }
  func.func @transform_3(%arg0: i32, %arg1: i32, %arg2: i32) -> (i32, i32, i32, i32) {
    %c0_i32 = arith.constant 0 : i32
    %c0_i32_0 = arith.constant 0 : i32
    %c0_i32_1 = arith.constant 0 : i32
    return %arg0, %arg1, %c0_i32, %c0_i32_0 : i32, i32, i32, i32
  }
}

</mosaic_0001>

<llo_original>
// kernel: inception_pallas.3
$region0: #{inception_pallas.3}
  #allocation0 [shape = 'u32[]', space=smem, size = 0x4, offset = 0x4, fixed_abs, tag = 'smem constant byte address 0x4 - core index']
  #allocation1 [shape = 'u32[144,128]{1,0:T(1,128)}', space=vmem, size = 0x12000, scoped, tag = 'internal scratch']
  #allocation2 [shape = 'bf16[110,4]{1,0:T(8,128)(2,1)}', space=vmem, size = 0x7000, scoped, tag = 'scratch operand']
  %s0 = inlined_call_operand.vmem [shape: bf16[2,10,110,4], index: 0, kind: input, shape index: {}, may-alias: {0,1,2}]
  %s1 = inlined_call_operand.vmem [shape: bf16[2,10,110,4], index: 1, kind: input, shape index: {}, may-alias: {0,1,2}]
  %s2 = inlined_call_operand.vmem [shape: bf16[2,10,110,4], index: 2, kind: input, shape index: {}, may-alias: {0,1,2}]
  %s3 = inlined_call_operand.vmem [shape: bf16[4,10], index: 3, kind: input, shape index: {}]
  %s4 = inlined_call_operand.vmem [shape: bf16[4,4], index: 4, kind: input, shape index: {}]
  %s5 = inlined_call_operand.vmem [shape: f32[1,10], index: 5, kind: input, shape index: {}]
  %s6 = inlined_call_operand.vmem [shape: f32[1,4], index: 6, kind: input, shape index: {}]
  %s7 = inlined_call_operand.vmem [shape: bf16[2,8,80,14], index: 7, kind: output, shape index: {}]
  %s8 = sld [smem:[#allocation0]]
  $region61: #{inception_pallas.3} parent=0
    _
  %s10 = ssub.s32 1, %s8
  %s11 = scalar_select 0, %s10, %s8
  loop: start=0, step=1, limit=18
  $region2: #{inception_pallas.3} parent=0 // loop_pre_header
    _
  $region3: #{inception_pallas.3} parent=0 // loop_header
    %s13 = sphi 0, %s17
    %p14 = scmp.ge.s32.totalorder %s13, 18
    %s20 = sphi 0, %s32
    %s21 = sphi 0, %s28
    %s22 = sphi 0, %s20
    %s23 = sphi 0, %s21
    %s24 = sphi 0, %s22
    %s25 = sphi 0, %s23
    %s37 = sphi 0, %s39
    %s40 = sphi 0, %s37
    %s41 = sphi 0, %s40
    %s57 = sphi 0, %s41
    %s67 = sphi 0, %s69
    %s70 = sphi 0, %s67
    %s71 = sphi 0, %s70
    %s87 = sphi 0, %s71
    %s97 = sphi 0, %s99
    %s100 = sphi 0, %s97
    %s101 = sphi 0, %s100
    %s117 = sphi 0, %s101
    %s121 = sphi 0, %s121
    %s123 = sphi 0, %s121
    %s124 = sphi 0, %s123
    %s138 = sphi 0, %s124
    %s142 = sphi 0, %s142
    %s144 = sphi 0, %s142
    %s145 = sphi 0, %s144
    %s159 = sphi 0, %s145
    %s163 = sphi 0, %s163
    %s165 = sphi 0, %s163
    %s166 = sphi 0, %s165
    %s180 = sphi 0, %s166
    %s184 = sphi 0, %s184
    %s186 = sphi 0, %s184
    %s187 = sphi 0, %s186
    %s201 = sphi 0, %s187
    %s209 = sphi 0, %s211
    %s212 = sphi 0, %s209
    %s213 = sphi 0, %s212
    %s229 = sphi 0, %s213
  $region4: #{inception_pallas.3} parent=0 // loop_header_branch
    %16 = sbr.rel (%p14) target = $region8
  $region5: #{inception_pallas.3} parent=0 // loop_body
    %s18 = ssub.s32 %s13, 1
    %s19 = ssub.s32 %s13, 2
    %s26 = sadd.s32 1, %s21
    %p27 = scmp.ge.s32.totalorder %s26, 8
    %s28 = scalar_select %p27, 0, %s26
    %s29 = sadd.s32 1, %s20
    %s30 = scalar_select %p27, %s29, %s20
    %p31 = scmp.ge.s32.totalorder %s30, 2
    %s32 = scalar_select %p31, 0, %s30
    %s33 = ssub.s32 %s20, %s32
    %s34 = ssub.s32 %s21, %s28
    %s35 = sor.u32 %s33, %s34
    %p36 = scmp.eq.s32.totalorder %s35, 0
    %s38 = sadd.s32 %s37, 1
    %s39 = scalar_select %p36, %s37, %s38
    %p42 = pneg %p36
    %p43 = scmp.eq.s32.totalorder %s13, 15
    %p44 = por %p42, %p43
    %p45 = scmp.ne.s32.totalorder %s37, %s40
    %p46 = scmp.eq.s32.totalorder %s13, 0
    %p47 = por %p45, %p46
    %p48 = scmp.ne.s32.totalorder %s37, %s40
    %p49 = scmp.eq.s32.totalorder %s18, 15
    %p50 = por %p48, %p49
    %p51 = scmp.ne.s32.totalorder %s40, %s41
    %p52 = scmp.eq.s32.totalorder %s18, 0
    %p53 = por %p51, %p52
    %p54 = scmp.ne.s32.totalorder %s40, %s41
    %p55 = scmp.eq.s32.totalorder %s19, 15
    %p56 = por %p54, %p55
    %p58 = scmp.ne.s32.totalorder %s41, %s57
    %p59 = scmp.eq.s32.totalorder %s19, 0
    %p60 = por %p58, %p59
    %s61 = sadd.s32 %s21, 1
    %s62 = sadd.s32 %s28, 1
    %s63 = ssub.s32 %s20, %s32
    %s64 = ssub.s32 %s61, %s62
    %s65 = sor.u32 %s63, %s64
    %p66 = scmp.eq.s32.totalorder %s65, 0
    %s68 = sadd.s32 %s67, 1
    %s69 = scalar_select %p66, %s67, %s68
    %p72 = pneg %p66
    %p73 = scmp.eq.s32.totalorder %s13, 15
    %p74 = por %p72, %p73
    %p75 = scmp.ne.s32.totalorder %s67, %s70
    %p76 = scmp.eq.s32.totalorder %s13, 0
    %p77 = por %p75, %p76
    %p78 = scmp.ne.s32.totalorder %s67, %s70
    %p79 = scmp.eq.s32.totalorder %s18, 15
    %p80 = por %p78, %p79
    %p81 = scmp.ne.s32.totalorder %s70, %s71
    %p82 = scmp.eq.s32.totalorder %s18, 0
    %p83 = por %p81, %p82
    %p84 = scmp.ne.s32.totalorder %s70, %s71
    %p85 = scmp.eq.s32.totalorder %s19, 15
    %p86 = por %p84, %p85
    %p88 = scmp.ne.s32.totalorder %s71, %s87
    %p89 = scmp.eq.s32.totalorder %s19, 0
    %p90 = por %p88, %p89
    %s91 = sadd.s32 %s21, 2
    %s92 = sadd.s32 %s28, 2
    %s93 = ssub.s32 %s20, %s32
    %s94 = ssub.s32 %s91, %s92
    %s95 = sor.u32 %s93, %s94
    %p96 = scmp.eq.s32.totalorder %s95, 0
    %s98 = sadd.s32 %s97, 1
    %s99 = scalar_select %p96, %s97, %s98
    %p102 = pneg %p96
    %p103 = scmp.eq.s32.totalorder %s13, 15
    %p104 = por %p102, %p103
    %p105 = scmp.ne.s32.totalorder %s97, %s100
    %p106 = scmp.eq.s32.totalorder %s13, 0
    %p107 = por %p105, %p106
    %p108 = scmp.ne.s32.totalorder %s97, %s100
    %p109 = scmp.eq.s32.totalorder %s18, 15
    %p110 = por %p108, %p109
    %p111 = scmp.ne.s32.totalorder %s100, %s101
    %p112 = scmp.eq.s32.totalorder %s18, 0
    %p113 = por %p111, %p112
    %p114 = scmp.ne.s32.totalorder %s100, %s101
    %p115 = scmp.eq.s32.totalorder %s19, 15
    %p116 = por %p114, %p115
    %p118 = scmp.ne.s32.totalorder %s101, %s117
    %p119 = scmp.eq.s32.totalorder %s19, 0
    %p120 = por %p118, %p119
    %s122 = sadd.s32 %s121, 1
    %p125 = scmp.eq.s32.totalorder %s13, 15
    %p126 = scmp.ne.s32.totalorder %s121, %s123
    %p127 = scmp.eq.s32.totalorder %s13, 0
    %p128 = por %p126, %p127
    %p129 = scmp.ne.s32.totalorder %s121, %s123
    %p130 = scmp.eq.s32.totalorder %s18, 15
    %p131 = por %p129, %p130
    %p132 = scmp.ne.s32.totalorder %s123, %s124
    %p133 = scmp.eq.s32.totalorder %s18, 0
    %p134 = por %p132, %p133
    %p135 = scmp.ne.s32.totalorder %s123, %s124
    %p136 = scmp.eq.s32.totalorder %s19, 15
    %p137 = por %p135, %p136
    %p139 = scmp.ne.s32.totalorder %s124, %s138
    %p140 = scmp.eq.s32.totalorder %s19, 0
    %p141 = por %p139, %p140
    %s143 = sadd.s32 %s142, 1
    %p146 = scmp.eq.s32.totalorder %s13, 15
    %p147 = scmp.ne.s32.totalorder %s142, %s144
    %p148 = scmp.eq.s32.totalorder %s13, 0
    %p149 = por %p147, %p148
    %p150 = scmp.ne.s32.totalorder %s142, %s144
    %p151 = scmp.eq.s32.totalorder %s18, 15
    %p152 = por %p150, %p151
    %p153 = scmp.ne.s32.totalorder %s144, %s145
    %p154 = scmp.eq.s32.totalorder %s18, 0
    %p155 = por %p153, %p154
    %p156 = scmp.ne.s32.totalorder %s144, %s145
    %p157 = scmp.eq.s32.totalorder %s19, 15
    %p158 = por %p156, %p157
    %p160 = scmp.ne.s32.totalorder %s145, %s159
    %p161 = scmp.eq.s32.totalorder %s19, 0
    %p162 = por %p160, %p161
    %s164 = sadd.s32 %s163, 1
    %p167 = scmp.eq.s32.totalorder %s13, 15
    %p168 = scmp.ne.s32.totalorder %s163, %s165
    %p169 = scmp.eq.s32.totalorder %s13, 0
    %p170 = por %p168, %p169
    %p171 = scmp.ne.s32.totalorder %s163, %s165
    %p172 = scmp.eq.s32.totalorder %s18, 15
    %p173 = por %p171, %p172
    %p174 = scmp.ne.s32.totalorder %s165, %s166
    %p175 = scmp.eq.s32.totalorder %s18, 0
    %p176 = por %p174, %p175
    %p177 = scmp.ne.s32.totalorder %s165, %s166
    %p178 = scmp.eq.s32.totalorder %s19, 15
    %p179 = por %p177, %p178
    %p181 = scmp.ne.s32.totalorder %s166, %s180
    %p182 = scmp.eq.s32.totalorder %s19, 0
    %p183 = por %p181, %p182
    %s185 = sadd.s32 %s184, 1
    %p188 = scmp.eq.s32.totalorder %s13, 15
    %p189 = scmp.ne.s32.totalorder %s184, %s186
    %p190 = scmp.eq.s32.totalorder %s13, 0
    %p191 = por %p189, %p190
    %p192 = scmp.ne.s32.totalorder %s184, %s186
    %p193 = scmp.eq.s32.totalorder %s18, 15
    %p194 = por %p192, %p193
    %p195 = scmp.ne.s32.totalorder %s186, %s187
    %p196 = scmp.eq.s32.totalorder %s18, 0
    %p197 = por %p195, %p196
    %p198 = scmp.ne.s32.totalorder %s186, %s187
    %p199 = scmp.eq.s32.totalorder %s19, 15
    %p200 = por %p198, %p199
    %p202 = scmp.ne.s32.totalorder %s187, %s201
    %p203 = scmp.eq.s32.totalorder %s19, 0
    %p204 = por %p202, %p203
    %s205 = ssub.s32 %s20, %s32
    %s206 = ssub.s32 %s21, %s28
    %s207 = sor.u32 %s205, %s206
    %p208 = scmp.eq.s32.totalorder %s207, 0
    %s210 = sadd.s32 %s209, 1
    %s211 = scalar_select %p208, %s209, %s210
    %p214 = pneg %p208
    %p215 = scmp.eq.s32.totalorder %s13, 15
    %p216 = por %p214, %p215
    %p217 = scmp.ne.s32.totalorder %s209, %s212
    %p218 = scmp.eq.s32.totalorder %s13, 0
    %p219 = por %p217, %p218
    %p220 = scmp.ne.s32.totalorder %s209, %s212
    %p221 = scmp.eq.s32.totalorder %s18, 15
    %p222 = por %p220, %p221
    %p223 = scmp.ne.s32.totalorder %s212, %s213
    %p224 = scmp.eq.s32.totalorder %s18, 0
    %p225 = por %p223, %p224
    %p226 = scmp.ne.s32.totalorder %s212, %s213
    %p227 = scmp.eq.s32.totalorder %s19, 15
    %p228 = por %p226, %p227
    %p230 = scmp.ne.s32.totalorder %s213, %s229
    %p231 = scmp.eq.s32.totalorder %s19, 0
    %p232 = por %p230, %p231
    %p233 = scmp.le.s32.totalorder 1, %s13
    %p234 = scmp.lt.s32.totalorder %s13, 17
    %p235 = pnand %p233, %p234
    %p236 = pneg %p235
    // Predicated region
    $region9: #{inception_pallas.3} parent=5 // pred_check
      _
    $region10: #{inception_pallas.3} parent=5 // pred_check_branch
      %238 = sbr.rel (%p235) target = $region12
    $region11: #{inception_pallas.3} parent=5 // pred_region
      %s239 = ssub.s32 %s13, 1
      // Predicated region
      $region13: #{inception_pallas.3} parent=11 // pred_check
        %p240 = pneg %p134
      $region14: #{inception_pallas.3} parent=11 // pred_check_branch
        %242 = sbr.rel (%p240) target = $region16
      $region15: #{inception_pallas.3} parent=11 // pred_region
        _
      $region16: #{inception_pallas.3} parent=11 // pred_fallthru
        _
      // Predicated region
      $region17: #{inception_pallas.3} parent=11 // pred_check
        %p243 = pneg %p155
      $region18: #{inception_pallas.3} parent=11 // pred_check_branch
        %245 = sbr.rel (%p243) target = $region20
      $region19: #{inception_pallas.3} parent=11 // pred_region
        _
      $region20: #{inception_pallas.3} parent=11 // pred_fallthru
        _
      // Predicated region
      $region21: #{inception_pallas.3} parent=11 // pred_check
        %p246 = pneg %p176
      $region22: #{inception_pallas.3} parent=11 // pred_check_branch
        %248 = sbr.rel (%p246) target = $region24
      $region23: #{inception_pallas.3} parent=11 // pred_region
        _
      $region24: #{inception_pallas.3} parent=11 // pred_fallthru
        _
      // Predicated region
      $region25: #{inception_pallas.3} parent=11 // pred_check
        %p249 = pneg %p197
      $region26: #{inception_pallas.3} parent=11 // pred_check_branch
        %251 = sbr.rel (%p249) target = $region28
      $region27: #{inception_pallas.3} parent=11 // pred_region
        _
      $region28: #{inception_pallas.3} parent=11 // pred_fallthru
        _
    $region12: #{inception_pallas.3} parent=5 // pred_fallthru
      _
    %p252 = scmp.lt.s32.totalorder %s13, 16
    // Predicated region
    $region29: #{inception_pallas.3} parent=5 // pred_check
      %p253 = pneg %p252
    $region30: #{inception_pallas.3} parent=5 // pred_check_branch
      %255 = sbr.rel (%p253) target = $region32
    $region31: #{inception_pallas.3} parent=5 // pred_region
      // Predicated region
      $region33: #{inception_pallas.3} parent=31 // pred_check
        %p256 = pneg %p47
      $region34: #{inception_pallas.3} parent=31 // pred_check_branch
        %258 = sbr.rel (%p256) target = $region36
      $region35: #{inception_pallas.3} parent=31 // pred_region
        %p259 = scmp.lt.s32.totalorder %s20, 1
        %s260 = scalar_select %p259, %s20, 1
        %p261 = scmp.lt.s32.totalorder %s21, 9
        %s262 = scalar_select %p261, %s21, 9
        %s263 = smul.addr %s262, 14
        %s264 = smul.addr %s260, 140
        %s265 = sadd.s32 %s263, %s264
        %s266 = smul.addr %s265, 4
        %s267 = scalar_lea.vmem %s0, %s266
      $region36: #{inception_pallas.3} parent=31 // pred_fallthru
        _
      // Predicated region
      $region37: #{inception_pallas.3} parent=31 // pred_check
        %p268 = pneg %p77
      $region38: #{inception_pallas.3} parent=31 // pred_check_branch
        %270 = sbr.rel (%p268) target = $region40
      $region39: #{inception_pallas.3} parent=31 // pred_region
        %s271 = sadd.s32 %s21, 1
        %p272 = scmp.lt.s32.totalorder %s20, 1
        %s273 = scalar_select %p272, %s20, 1
        %p274 = scmp.lt.s32.totalorder %s271, 9
        %s275 = scalar_select %p274, %s271, 9
        %s276 = smul.addr %s275, 14
        %s277 = smul.addr %s273, 140
        %s278 = sadd.s32 %s276, %s277
        %s279 = smul.addr %s278, 4
        %s280 = scalar_lea.vmem %s1, %s279
        %s281 = sadd.s32 %s21, 1
      $region40: #{inception_pallas.3} parent=31 // pred_fallthru
        _
      // Predicated region
      $region41: #{inception_pallas.3} parent=31 // pred_check
        %p282 = pneg %p107
      $region42: #{inception_pallas.3} parent=31 // pred_check_branch
        %284 = sbr.rel (%p282) target = $region44
      $region43: #{inception_pallas.3} parent=31 // pred_region
        %s285 = sadd.s32 %s21, 2
        %p286 = scmp.lt.s32.totalorder %s20, 1
        %s287 = scalar_select %p286, %s20, 1
        %p288 = scmp.lt.s32.totalorder %s285, 9
        %s289 = scalar_select %p288, %s285, 9
        %s290 = smul.addr %s289, 14
        %s291 = smul.addr %s287, 140
        %s292 = sadd.s32 %s290, %s291
        %s293 = smul.addr %s292, 4
        %s294 = scalar_lea.vmem %s2, %s293
        %s295 = sadd.s32 %s21, 2
      $region44: #{inception_pallas.3} parent=31 // pred_fallthru
        _
    $region32: #{inception_pallas.3} parent=5 // pred_fallthru
      _
    %p296 = scmp.le.s32.totalorder 1, %s13
    %p297 = scmp.lt.s32.totalorder %s13, 17
    %p298 = pnand %p296, %p297
    %p299 = pneg %p298
    // Predicated region
    $region45: #{inception_pallas.3} parent=5 // pred_check
      _
    $region46: #{inception_pallas.3} parent=5 // pred_check_branch
      %301 = sbr.rel (%p298) target = $region48
    $region47: #{inception_pallas.3} parent=5 // pred_region
      %s302 = ssub.s32 %s13, 1
      %p303 = scmp.lt.s32.totalorder %s22, 1
      %s304 = scalar_select %p303, %s22, 1
      %p305 = scmp.lt.s32.totalorder %s23, 9
      %s306 = scalar_select %p305, %s23, 9
      %s307 = smul.addr %s306, 14
      %s308 = smul.addr %s304, 140
      %s309 = sadd.s32 %s307, %s308
      %s310 = smul.addr %s309, 4
      %s311 = scalar_lea.vmem %s0, %s310
      %p312 = pneg %p53
      %p313 = pneg %p50
      %s314 = sadd.s32 %s23, 1
      %p315 = scmp.lt.s32.totalorder %s22, 1
      %s316 = scalar_select %p315, %s22, 1
      %p317 = scmp.lt.s32.totalorder %s314, 9
      %s318 = scalar_select %p317, %s314, 9
      %s319 = smul.addr %s318, 14
      %s320 = smul.addr %s316, 140
      %s321 = sadd.s32 %s319, %s320
      %s322 = smul.addr %s321, 4
      %s323 = scalar_lea.vmem %s1, %s322
      %p324 = pneg %p83
      %p325 = pneg %p80
      %s326 = sadd.s32 %s23, 2
      %p327 = scmp.lt.s32.totalorder %s22, 1
      %s328 = scalar_select %p327, %s22, 1
      %p329 = scmp.lt.s32.totalorder %s326, 9
      %s330 = scalar_select %p329, %s326, 9
      %s331 = smul.addr %s330, 14
      %s332 = smul.addr %s328, 140
      %s333 = sadd.s32 %s331, %s332
      %s334 = smul.addr %s333, 4
      %s335 = scalar_lea.vmem %s2, %s334
      %p336 = pneg %p113
      %p337 = pneg %p110
      %p338 = pneg %p134
      %p339 = pneg %p131
      %p340 = pneg %p155
      %p341 = pneg %p152
      %p342 = pneg %p176
      %p343 = pneg %p173
      %p344 = pneg %p197
      %p345 = pneg %p194
      %p346 = pneg %p225
      %p347 = pneg %p222
      %p348 = scmp.lt.s32.totalorder %s22, 1
      %s349 = scalar_select %p348, %s22, 1
      %p350 = scmp.lt.s32.totalorder %s23, 7
      %s351 = scalar_select %p350, %s23, 7
      %s352 = smul.addr %s351, 10
      %s353 = smul.addr %s349, 80
      %s354 = sadd.s32 %s352, %s353
      %s355 = smul.addr %s354, 4
      %s356 = scalar_lea.vmem %s7, %s355
      %p357 = scmp.lt.s32.totalorder %s22, 1
      %s358 = scalar_select %p357, %s22, 1
      %p359 = scmp.lt.s32.totalorder %s23, 9
      %s360 = scalar_select %p359, %s23, 9
      %s361 = smul.addr %s360, 14
      %s362 = smul.addr %s358, 140
      %s363 = sadd.s32 %s361, %s362
      %s364 = smul.addr %s363, 4
      %s365 = scalar_lea.vmem %s0, %s364
      %s366 = sadd.s32 %s23, 1
      %p367 = scmp.lt.s32.totalorder %s22, 1
      %s368 = scalar_select %p367, %s22, 1
      %p369 = scmp.lt.s32.totalorder %s366, 9
      %s370 = scalar_select %p369, %s366, 9
      %s371 = smul.addr %s370, 14
      %s372 = smul.addr %s368, 140
      %s373 = sadd.s32 %s371, %s372
      %s374 = smul.addr %s373, 4
      %s375 = scalar_lea.vmem %s1, %s374
      %s376 = sadd.s32 %s23, 1
      %s377 = sadd.s32 %s23, 2
      %p378 = scmp.lt.s32.totalorder %s22, 1
      %s379 = scalar_select %p378, %s22, 1
      %p380 = scmp.lt.s32.totalorder %s377, 9
      %s381 = scalar_select %p380, %s377, 9
      %s382 = smul.addr %s381, 14
      %s383 = smul.addr %s379, 140
      %s384 = sadd.s32 %s382, %s383
      %s385 = smul.addr %s384, 4
      %s386 = scalar_lea.vmem %s2, %s385
      %s387 = sadd.s32 %s23, 2
      %p388 = scmp.lt.s32.totalorder %s22, 1
      %s389 = scalar_select %p388, %s22, 1
      %p390 = scmp.lt.s32.totalorder %s23, 7
      %s391 = scalar_select %p390, %s23, 7
      %s392 = smul.addr %s391, 10
      %s393 = smul.addr %s389, 80
      %s394 = sadd.s32 %s392, %s393
      %s395 = smul.addr %s394, 4
      %s396 = scalar_lea.vmem %s7, %s395
      %v398 = vld [vmem:[%s375 + $0x4] sm:$0xe]
      %v399 = vld [vmem:[%s375 + $0x8] sm:$0xf]
      %v400 = vld [vmem:[%s375 + $0xc] sm:$0xf]
      %v401 = vld [vmem:[%s375 + $0x10] sm:$0xf]
      %v402 = vld [vmem:[%s375 + $0x14] sm:$0xf]
      %v403 = vld [vmem:[%s375 + $0x18] sm:$0xf]
      %v404 = vld [vmem:[%s375 + $0x1c] sm:$0xf]
      %v405 = vld [vmem:[%s375 + $0x20] sm:$0xf]
      %v406 = vld [vmem:[%s375 + $0x24] sm:$0xf]
      %v407 = vld [vmem:[%s375 + $0x28] sm:$0xf]
      %v408 = vld [vmem:[%s375 + $0x2c] sm:$0x3]
      %v409 = vld [vmem:[%s3] sm:$0x3]
      %v410 = vld [vmem:[%s5] sm:$0x1]
      %v412 = vlaneseq
      %v413 = vshrl.u32 %v412, 7
      %v414 = vsub.s32 0, %v413
      %v415 = vrot.slane %v410, %v414
      %v428 = vunpack.c.l.b16 %v398
      %v429 = vunpack.c.l.b16 %v399
      %v430 = vunpack.c.l.b16 %v400
      %v431 = vunpack.c.l.b16 %v401
      %v432 = vunpack.c.l.b16 %v402
      %v433 = vunpack.c.l.b16 %v403
      %v434 = vunpack.c.l.b16 %v404
      %v435 = vunpack.c.l.b16 %v405
      %v436 = vunpack.c.l.b16 %v406
      %v437 = vunpack.c.l.b16 %v407
      %v438 = vunpack.c.l.b16 %v408
      %v439 = vpack.c.b16 %v429, %v428
      %v440 = vpack.c.b16 %v431, %v430
      %v441 = vpack.c.b16 %v433, %v432
      %v442 = vpack.c.b16 %v435, %v434
      %v443 = vpack.c.b16 %v437, %v436
      %v444 = vpack.c.b16 %v438, %v438
      %vm445 = vsmask.f32 6400
      %v447 = vshrl.u32 %v439, 16
      %v449 = vrot.slane %v447, 1
      %v450 = vshll.u32 %v439, 16
      %v452 = vrot.slane %v450, 2
      %v453 = vor.u32 %v449, %v452
      %v455 = vshrl.u32 %v440, 16
      %v457 = vrot.slane %v455, 1
      %v458 = vshll.u32 %v440, 16
      %v460 = vrot.slane %v458, 2
      %v461 = vor.u32 %v457, %v460
      %v462 = vsel %vm445, %v453, %v461
      %v464 = vshrl.u32 %v441, 16
      %v466 = vrot.slane %v464, 1
      %v467 = vshll.u32 %v441, 16
      %v469 = vrot.slane %v467, 2
      %v470 = vor.u32 %v466, %v469
      %v471 = vsel %vm445, %v461, %v470
      %v473 = vshrl.u32 %v442, 16
      %v475 = vrot.slane %v473, 1
      %v476 = vshll.u32 %v442, 16
      %v478 = vrot.slane %v476, 2
      %v479 = vor.u32 %v475, %v478
      %v480 = vsel %vm445, %v470, %v479
      %v482 = vshrl.u32 %v443, 16
      %v484 = vrot.slane %v482, 1
      %v485 = vshll.u32 %v443, 16
      %v487 = vrot.slane %v485, 2
      %v488 = vor.u32 %v484, %v487
      %v489 = vsel %vm445, %v479, %v488
      %v491 = vshrl.u32 %v444, 16
      %v493 = vrot.slane %v491, 1
      %v494 = vshll.u32 %v444, 16
      %v496 = vrot.slane %v494, 2
      %v497 = vor.u32 %v493, %v496
      %v498 = vsel %vm445, %v488, %v497
      %vm499 = vcmask 31744
      %v501 = vsel %vm499, %v462, 0
      %v504 = vsel %vm499, %v471, 0
      %v507 = vsel %vm499, %v480, 0
      %v510 = vsel %vm499, %v489, 0
      %v513 = vsel %vm499, %v498, 0
      %vm515 = vcmask 1041408
      %v517 = vsel %vm515, %v409, 0
      %519 = vmatprep.subr.bf16.mxu0 0
      %520 = vmatpush1.bf16.msra.mxu0 0
      %521 = vmatprep.subr.bf16.mxu0 0
      %522 = vmatpush1.bf16.msra.mxu0 0
      %523 = vmatprep.subr.bf16.mxu0 0
      %524 = vmatpush1.bf16.msra.mxu0 0
      %525 = vmatprep.subr.bf16.mxu0 0
      %526 = vmatpush1.bf16.msra.mxu0 0
      %527 = vmatprep.subr.bf16.mxu0 0
      %528 = vmatpush1.bf16.msra.mxu0 0
      %529 = vmatprep.subr.bf16.mxu0 0
      %530 = vmatpush1.bf16.msra.mxu0 0
      %531 = vmatprep.subr.bf16.mxu0 0
      %532 = vmatpush1.bf16.msra.mxu0 0
      %533 = vmatprep.subr.bf16.mxu0 0
      %534 = vmatpush1.bf16.msra.mxu0 %v517
      %535 = vmatprep.subr.bf16.mxu0 0
      %536 = vmatpush2.bf16.msra.mxu0 0
      %537 = vmatprep.subr.bf16.mxu0 0
      %538 = vmatpush2.bf16.msra.mxu0 0
      %539 = vmatprep.subr.bf16.mxu0 0
      %540 = vmatpush2.bf16.msra.mxu0 0
      %541 = vmatprep.subr.bf16.mxu0 0
      %542 = vmatpush2.bf16.msra.mxu0 0
      %543 = vmatprep.subr.bf16.mxu0 0
      %544 = vmatpush2.bf16.msra.mxu0 0
      %545 = vmatprep.subr.bf16.mxu0 0
      %546 = vmatpush2.bf16.msra.mxu0 0
      %547 = vmatprep.subr.bf16.mxu0 0
      %548 = vmatpush2.bf16.msra.mxu0 0
      %549 = vmatprep.subr.bf16.mxu0 0
      %550 = vmatpush2.bf16.msra.mxu0 0
      %551 = vmatprep.mubr.bf16.mxu0 0
      %552 = vmatmul.mubr.bf16.gmra.mxu0 %v501
      %v553 = vpop.f32.mrf.mxu0
      %v554 = vadd.f32 %v415, %v553
      %v555 = vpop.f32.mrf.mxu0
      %v556 = vpop.f32.mrf.mxu0
      %v557 = vadd.f32 %v415, %v556
      %v558 = vpop.f32.mrf.mxu0
      %559 = vmatprep.mubr.bf16.mxu0 0
      %560 = vmatmul.mubr.bf16.gmra.mxu0 %v504
      %v561 = vpop.f32.mrf.mxu0
      %v562 = vadd.f32 %v415, %v561
      %v563 = vpop.f32.mrf.mxu0
      %v564 = vpop.f32.mrf.mxu0
      %v565 = vadd.f32 %v415, %v564
      %v566 = vpop.f32.mrf.mxu0
      %567 = vmatprep.mubr.bf16.mxu0 0
      %568 = vmatmul.mubr.bf16.gmra.mxu0 %v507
      %v569 = vpop.f32.mrf.mxu0
      %v570 = vadd.f32 %v415, %v569
      %v571 = vpop.f32.mrf.mxu0
      %v572 = vpop.f32.mrf.mxu0
      %v573 = vadd.f32 %v415, %v572
      %v574 = vpop.f32.mrf.mxu0
      %575 = vmatprep.mubr.bf16.mxu0 0
      %576 = vmatmul.mubr.bf16.gmra.mxu0 %v510
      %v577 = vpop.f32.mrf.mxu0
      %v578 = vadd.f32 %v415, %v577
      %v579 = vpop.f32.mrf.mxu0
      %v580 = vpop.f32.mrf.mxu0
      %v581 = vadd.f32 %v415, %v580
      %v582 = vpop.f32.mrf.mxu0
      %583 = vmatprep.mubr.bf16.mxu0 0
      %584 = vmatmul.mubr.bf16.gmra.mxu0 %v513
      %v585 = vpop.f32.mrf.mxu0
      %v586 = vadd.f32 %v415, %v585
      %v587 = vpop.f32.mrf.mxu0
      %v588 = vpop.f32.mrf.mxu0
      %v589 = vadd.f32 %v415, %v588
      %v590 = vpop.f32.mrf.mxu0
      %591 = vdwg.mxu0
      %v592 = vmax.f32 %v554, 0.0
      %v593 = vmax.f32 %v557, 0.0
      %v594 = vmax.f32 %v562, 0.0
      %v595 = vmax.f32 %v565, 0.0
      %v596 = vmax.f32 %v570, 0.0
      %v597 = vmax.f32 %v573, 0.0
      %v598 = vmax.f32 %v578, 0.0
      %v599 = vmax.f32 %v581, 0.0
      %v600 = vmax.f32 %v586, 0.0
      %v601 = vmax.f32 %v589, 0.0
      %v602 = vld [vmem:[%s365] sm:$0xf]
      %v603 = vld [vmem:[%s365 + $0x4] sm:$0xf]
      %v604 = vld [vmem:[%s365 + $0x8] sm:$0xf]
      %v605 = vld [vmem:[%s365 + $0xc] sm:$0xf]
      %v606 = vld [vmem:[%s365 + $0x10] sm:$0xf]
      %v607 = vld [vmem:[%s365 + $0x14] sm:$0xf]
      %v608 = vld [vmem:[%s365 + $0x18] sm:$0xf]
      %v609 = vld [vmem:[%s365 + $0x1c] sm:$0xf]
      %v610 = vld [vmem:[%s365 + $0x20] sm:$0xf]
      %v611 = vld [vmem:[%s365 + $0x24] sm:$0xf]
      %v612 = vld [vmem:[%s365 + $0x28] sm:$0xf]
      %v613 = vld [vmem:[%s365 + $0x2c] sm:$0xf]
      %v614 = vld [vmem:[%s365 + $0x30] sm:$0xf]
      %v615 = vld [vmem:[%s365 + $0x34] sm:$0x7]
      %v616 = vld [vmem:[%s375] sm:$0xf]
      %v617 = vld [vmem:[%s375 + $0x4] sm:$0xf]
      %v618 = vld [vmem:[%s375 + $0x8] sm:$0xf]
      %v619 = vld [vmem:[%s375 + $0xc] sm:$0xf]
      %v620 = vld [vmem:[%s375 + $0x10] sm:$0xf]
      %v621 = vld [vmem:[%s375 + $0x14] sm:$0xf]
      %v622 = vld [vmem:[%s375 + $0x18] sm:$0xf]
      %v623 = vld [vmem:[%s375 + $0x1c] sm:$0xf]
      %v624 = vld [vmem:[%s375 + $0x20] sm:$0xf]
      %v625 = vld [vmem:[%s375 + $0x24] sm:$0xf]
      %v626 = vld [vmem:[%s375 + $0x28] sm:$0xf]
      %v627 = vld [vmem:[%s375 + $0x2c] sm:$0xf]
      %v628 = vld [vmem:[%s375 + $0x30] sm:$0xf]
      %v629 = vld [vmem:[%s375 + $0x34] sm:$0x7]
      %v630 = vmax.bf16 %v602, %v616
      %v631 = vmax.bf16 %v603, %v617
      %v632 = vmax.bf16 %v604, %v618
      %v633 = vmax.bf16 %v605, %v619
      %v634 = vmax.bf16 %v606, %v620
      %v635 = vmax.bf16 %v607, %v621
      %v636 = vmax.bf16 %v608, %v622
      %v637 = vmax.bf16 %v609, %v623
      %v638 = vmax.bf16 %v610, %v624
      %v639 = vmax.bf16 %v611, %v625
      %v640 = vmax.bf16 %v612, %v626
      %v641 = vmax.bf16 %v613, %v627
      %v642 = vmax.bf16 %v614, %v628
      %v643 = vmax.bf16 %v615, %v629
      %v644 = vld [vmem:[%s386] sm:$0xf]
      %v645 = vld [vmem:[%s386 + $0x4] sm:$0xf]
      %v646 = vld [vmem:[%s386 + $0x8] sm:$0xf]
      %v647 = vld [vmem:[%s386 + $0xc] sm:$0xf]
      %v648 = vld [vmem:[%s386 + $0x10] sm:$0xf]
      %v649 = vld [vmem:[%s386 + $0x14] sm:$0xf]
      %v650 = vld [vmem:[%s386 + $0x18] sm:$0xf]
      %v651 = vld [vmem:[%s386 + $0x1c] sm:$0xf]
      %v652 = vld [vmem:[%s386 + $0x20] sm:$0xf]
      %v653 = vld [vmem:[%s386 + $0x24] sm:$0xf]
      %v654 = vld [vmem:[%s386 + $0x28] sm:$0xf]
      %v655 = vld [vmem:[%s386 + $0x2c] sm:$0xf]
      %v656 = vld [vmem:[%s386 + $0x30] sm:$0xf]
      %v657 = vld [vmem:[%s386 + $0x34] sm:$0x7]
      %v658 = vmax.bf16 %v630, %v644
      %v659 = vmax.bf16 %v631, %v645
      %v660 = vmax.bf16 %v632, %v646
      %v661 = vmax.bf16 %v633, %v647
      %v662 = vmax.bf16 %v634, %v648
      %v663 = vmax.bf16 %v635, %v649
      %v664 = vmax.bf16 %v636, %v650
      %v665 = vmax.bf16 %v637, %v651
      %v666 = vmax.bf16 %v638, %v652
      %v667 = vmax.bf16 %v639, %v653
      %v668 = vmax.bf16 %v640, %v654
      %v669 = vmax.bf16 %v641, %v655
      %v670 = vmax.bf16 %v642, %v656
      %v671 = vmax.bf16 %v643, %v657
      %vm672 = vcmask 27648
      %673 = vst.msk [vmem:[#allocation2] sm:$0xf] %vm672, %v658
      %674 = vst.msk [vmem:[#allocation2 + $0x4] sm:$0xf] %vm672, %v659
      %675 = vst.msk [vmem:[#allocation2 + $0x8] sm:$0xf] %vm672, %v660
      %676 = vst.msk [vmem:[#allocation2 + $0xc] sm:$0xf] %vm672, %v661
      %677 = vst.msk [vmem:[#allocation2 + $0x10] sm:$0xf] %vm672, %v662
      %678 = vst.msk [vmem:[#allocation2 + $0x14] sm:$0xf] %vm672, %v663
      %679 = vst.msk [vmem:[#allocation2 + $0x18] sm:$0xf] %vm672, %v664
      %680 = vst.msk [vmem:[#allocation2 + $0x1c] sm:$0xf] %vm672, %v665
      %681 = vst.msk [vmem:[#allocation2 + $0x20] sm:$0xf] %vm672, %v666
      %682 = vst.msk [vmem:[#allocation2 + $0x24] sm:$0xf] %vm672, %v667
      %683 = vst.msk [vmem:[#allocation2 + $0x28] sm:$0xf] %vm672, %v668
      %684 = vst.msk [vmem:[#allocation2 + $0x2c] sm:$0xf] %vm672, %v669
      %685 = vst.msk [vmem:[#allocation2 + $0x30] sm:$0xf] %vm672, %v670
      %vm686 = vcmask 26624
      %687 = vst.msk [vmem:[#allocation2 + $0x34] sm:$0x7] %vm686, %v671
      %v688 = vld [vmem:[#allocation2] sm:$0xf]
      %v689 = vld [vmem:[#allocation2 + $0x4] sm:$0xf]
      %v690 = vld [vmem:[#allocation2 + $0x8] sm:$0xf]
      %v691 = vld [vmem:[#allocation2 + $0xc] sm:$0xf]
      %v692 = vld [vmem:[#allocation2 + $0x10] sm:$0xf]
      %v693 = vld [vmem:[#allocation2 + $0x14] sm:$0xf]
      %v694 = vld [vmem:[#allocation2 + $0x18] sm:$0xf]
      %v695 = vld [vmem:[#allocation2 + $0x1c] sm:$0xf]
      %v696 = vld [vmem:[#allocation2 + $0x20] sm:$0xf]
      %v697 = vld [vmem:[#allocation2 + $0x24] sm:$0xf]
      %v698 = vld [vmem:[#allocation2 + $0x28] sm:$0x1]
      %vm699 = vsmask.f32 3328
      %vm700 = vsmask.f32 7440
      %vm701 = vmor %vm699, %vm700
      %v703 = vshrl.u32 %v688, 16
      %v705 = vrot.slane %v703, 4
      %v706 = vshll.u32 %v688, 16
      %v708 = vrot.slane %v706, 5
      %v709 = vor.u32 %v705, %v708
      %v710 = vrot.slane %v709, 4
      %v712 = vshll.u32 %v689, 16
      %v714 = vrot.slane %v712, 5
      %v715 = vsel %vm701, %v710, %v714
      %v716 = vshrl.u32 %v689, 16
      %v718 = vrot.slane %v716, 4
      %v719 = vor.u32 %v718, %v714
      %v720 = vrot.slane %v719, 4
      %v722 = vshll.u32 %v690, 16
      %v724 = vrot.slane %v722, 5
      %v725 = vsel %vm701, %v720, %v724
      %v726 = vshrl.u32 %v690, 16
      %v728 = vrot.slane %v726, 4
      %v729 = vor.u32 %v728, %v724
      %v730 = vrot.slane %v729, 4
      %v732 = vshll.u32 %v691, 16
      %v734 = vrot.slane %v732, 5
      %v735 = vsel %vm701, %v730, %v734
      %v736 = vshrl.u32 %v691, 16
      %v738 = vrot.slane %v736, 4
      %v739 = vor.u32 %v738, %v734
      %v740 = vrot.slane %v739, 4
      %v742 = vshll.u32 %v692, 16
      %v744 = vrot.slane %v742, 5
      %v745 = vsel %vm701, %v740, %v744
      %v746 = vshrl.u32 %v692, 16
      %v748 = vrot.slane %v746, 4
      %v749 = vor.u32 %v748, %v744
      %v750 = vrot.slane %v749, 4
      %v752 = vshll.u32 %v693, 16
      %v754 = vrot.slane %v752, 5
      %v755 = vsel %vm701, %v750, %v754
      %v756 = vshrl.u32 %v693, 16
      %v758 = vrot.slane %v756, 4
      %v759 = vor.u32 %v758, %v754
      %v760 = vrot.slane %v759, 4
      %v762 = vshll.u32 %v694, 16
      %v764 = vrot.slane %v762, 5
      %v765 = vsel %vm701, %v760, %v764
      %v766 = vshrl.u32 %v694, 16
      %v768 = vrot.slane %v766, 4
      %v769 = vor.u32 %v768, %v764
      %v770 = vrot.slane %v769, 4
      %v772 = vshll.u32 %v695, 16
      %v774 = vrot.slane %v772, 5
      %v775 = vsel %vm701, %v770, %v774
      %v776 = vshrl.u32 %v695, 16
      %v778 = vrot.slane %v776, 4
      %v779 = vor.u32 %v778, %v774
      %v780 = vrot.slane %v779, 4
      %v782 = vshll.u32 %v696, 16
      %v784 = vrot.slane %v782, 5
      %v785 = vsel %vm701, %v780, %v784
      %v786 = vshrl.u32 %v696, 16
      %v788 = vrot.slane %v786, 4
      %v789 = vor.u32 %v788, %v784
      %v790 = vrot.slane %v789, 4
      %v792 = vshll.u32 %v697, 16
      %v794 = vrot.slane %v792, 5
      %v795 = vsel %vm701, %v790, %v794
      %v796 = vshrl.u32 %v697, 16
      %v798 = vrot.slane %v796, 4
      %v799 = vor.u32 %v798, %v794
      %v800 = vrot.slane %v799, 4
      %v802 = vshll.u32 %v698, 16
      %v804 = vrot.slane %v802, 5
      %v805 = vsel %vm701, %v800, %v804
      %v816 = vmax.bf16 %v688, %v715
      %v817 = vmax.bf16 %v689, %v725
      %v818 = vmax.bf16 %v690, %v735
      %v819 = vmax.bf16 %v691, %v745
      %v820 = vmax.bf16 %v692, %v755
      %v821 = vmax.bf16 %v693, %v765
      %v822 = vmax.bf16 %v694, %v775
      %v823 = vmax.bf16 %v695, %v785
      %v824 = vmax.bf16 %v696, %v795
      %v825 = vmax.bf16 %v697, %v805
      %v826 = vld [vmem:[#allocation2] sm:$0xe]
      %vm838 = vcmask 1042432
      %vm839 = vcmask 1046532
      %vm840 = vmor %vm838, %vm839
      %v841 = vrot.slane %v826, 5
      %v842 = vrot.slane %v841, 4
      %v843 = vrot.slane %v689, 5
      %v844 = vsel %vm840, %v842, %v843
      %v845 = vrot.slane %v843, 4
      %v846 = vrot.slane %v690, 5
      %v847 = vsel %vm840, %v845, %v846
      %v848 = vrot.slane %v846, 4
      %v849 = vrot.slane %v691, 5
      %v850 = vsel %vm840, %v848, %v849
      %v851 = vrot.slane %v849, 4
      %v852 = vrot.slane %v692, 5
      %v853 = vsel %vm840, %v851, %v852
      %v854 = vrot.slane %v852, 4
      %v855 = vrot.slane %v693, 5
      %v856 = vsel %vm840, %v854, %v855
      %v857 = vrot.slane %v855, 4
      %v858 = vrot.slane %v694, 5
      %v859 = vsel %vm840, %v857, %v858
      %v860 = vrot.slane %v858, 4
      %v861 = vrot.slane %v695, 5
      %v862 = vsel %vm840, %v860, %v861
      %v863 = vrot.slane %v861, 4
      %v864 = vrot.slane %v696, 5
      %v865 = vsel %vm840, %v863, %v864
      %v866 = vrot.slane %v864, 4
      %v867 = vrot.slane %v697, 5
      %v868 = vsel %vm840, %v866, %v867
      %v869 = vrot.slane %v867, 4
      %v870 = vrot.slane %v698, 5
      %v871 = vsel %vm840, %v869, %v870
      %v882 = vmax.bf16 %v816, %v844
      %v883 = vmax.bf16 %v817, %v847
      %v884 = vmax.bf16 %v818, %v850
      %v885 = vmax.bf16 %v819, %v853
      %v886 = vmax.bf16 %v820, %v856
      %v887 = vmax.bf16 %v821, %v859
      %v888 = vmax.bf16 %v822, %v862
      %v889 = vmax.bf16 %v823, %v865
      %v890 = vmax.bf16 %v824, %v868
      %v891 = vmax.bf16 %v825, %v871
      %v892 = vld [vmem:[#allocation2 + $0x4] sm:$0xe]
      %v893 = vld [vmem:[#allocation2 + $0x28] sm:$0xf]
      %v894 = vld [vmem:[#allocation2 + $0x2c] sm:$0x1]
      %v898 = vrot.slane %v892, 5
      %v899 = vrot.slane %v898, 4
      %v900 = vsel %vm840, %v899, %v846
      %v901 = vrot.slane %v893, 5
      %v902 = vsel %vm840, %v869, %v901
      %v903 = vrot.slane %v901, 4
      %v904 = vrot.slane %v894, 5
      %v905 = vsel %vm840, %v903, %v904
      %v909 = vmax.bf16 %v882, %v900
      %v910 = vmax.bf16 %v883, %v850
      %v911 = vmax.bf16 %v884, %v853
      %v912 = vmax.bf16 %v885, %v856
      %v913 = vmax.bf16 %v886, %v859
      %v914 = vmax.bf16 %v887, %v862
      %v915 = vmax.bf16 %v888, %v865
      %v916 = vmax.bf16 %v889, %v868
      %v917 = vmax.bf16 %v890, %v902
      %v918 = vmax.bf16 %v891, %v905
      %v919 = vld [vmem:[#allocation2 + $0x2c] sm:$0x3]
      %vm920 = vsmask.f32 2304
      %vm921 = vsmask.f32 6416
      %vm922 = vmor %vm920, %vm921
      %v924 = vshrl.u32 %v892, 16
      %v926 = vrot.slane %v924, 5
      %v927 = vshll.u32 %v892, 16
      %v929 = vrot.slane %v927, 6
      %v930 = vor.u32 %v926, %v929
      %v931 = vrot.slane %v930, 4
      %v932 = vrot.slane %v726, 5
      %v933 = vrot.slane %v722, 6
      %v934 = vor.u32 %v932, %v933
      %v935 = vsel %vm922, %v931, %v934
      %v936 = vrot.slane %v934, 4
      %v937 = vrot.slane %v736, 5
      %v938 = vrot.slane %v732, 6
      %v939 = vor.u32 %v937, %v938
      %v940 = vsel %vm922, %v936, %v939
      %v941 = vrot.slane %v939, 4
      %v942 = vrot.slane %v746, 5
      %v943 = vrot.slane %v742, 6
      %v944 = vor.u32 %v942, %v943
      %v945 = vsel %vm922, %v941, %v944
      %v946 = vrot.slane %v944, 4
      %v947 = vrot.slane %v756, 5
      %v948 = vrot.slane %v752, 6
      %v949 = vor.u32 %v947, %v948
      %v950 = vsel %vm922, %v946, %v949
      %v951 = vrot.slane %v949, 4
      %v952 = vrot.slane %v766, 5
      %v953 = vrot.slane %v762, 6
      %v954 = vor.u32 %v952, %v953
      %v955 = vsel %vm922, %v951, %v954
      %v956 = vrot.slane %v954, 4
      %v957 = vrot.slane %v776, 5
      %v958 = vrot.slane %v772, 6
      %v959 = vor.u32 %v957, %v958
      %v960 = vsel %vm922, %v956, %v959
      %v961 = vrot.slane %v959, 4
      %v962 = vrot.slane %v786, 5
      %v963 = vrot.slane %v782, 6
      %v964 = vor.u32 %v962, %v963
      %v965 = vsel %vm922, %v961, %v964
      %v966 = vrot.slane %v964, 4
      %v967 = vrot.slane %v796, 5
      %v968 = vrot.slane %v792, 6
      %v969 = vor.u32 %v967, %v968
      %v970 = vsel %vm922, %v966, %v969
      %v971 = vrot.slane %v969, 4
      %v973 = vshrl.u32 %v893, 16
      %v975 = vrot.slane %v973, 5
      %v976 = vshll.u32 %v893, 16
      %v978 = vrot.slane %v976, 6
      %v979 = vor.u32 %v975, %v978
      %v980 = vsel %vm922, %v971, %v979
      %v981 = vrot.slane %v979, 4
      %v983 = vshrl.u32 %v919, 16
      %v985 = vrot.slane %v983, 5
      %v986 = vshll.u32 %v919, 16
      %v988 = vrot.slane %v986, 6
      %v989 = vor.u32 %v985, %v988
      %v990 = vsel %vm922, %v981, %v989
      %v1001 = vmax.bf16 %v909, %v935
      %v1002 = vmax.bf16 %v910, %v940
      %v1003 = vmax.bf16 %v911, %v945
      %v1004 = vmax.bf16 %v912, %v950
      %v1005 = vmax.bf16 %v913, %v955
      %v1006 = vmax.bf16 %v914, %v960
      %v1007 = vmax.bf16 %v915, %v965
      %v1008 = vmax.bf16 %v916, %v970
      %v1009 = vmax.bf16 %v917, %v980
      %v1010 = vmax.bf16 %v918, %v990
      %v1011 = vld [vmem:[#allocation2 + $0x4] sm:$0xc]
      %vm1014 = vcmask 1041408
      %vm1015 = vcmask 1045508
      %vm1016 = vmor %vm1014, %vm1015
      %v1017 = vrot.slane %v1011, 6
      %v1018 = vrot.slane %v1017, 4
      %v1019 = vrot.slane %v690, 6
      %v1020 = vsel %vm1016, %v1018, %v1019
      %v1021 = vrot.slane %v1019, 4
      %v1022 = vrot.slane %v691, 6
      %v1023 = vsel %vm1016, %v1021, %v1022
      %v1024 = vrot.slane %v1022, 4
      %v1025 = vrot.slane %v692, 6
      %v1026 = vsel %vm1016, %v1024, %v1025
      %v1027 = vrot.slane %v1025, 4
      %v1028 = vrot.slane %v693, 6
      %v1029 = vsel %vm1016, %v1027, %v1028
      %v1030 = vrot.slane %v1028, 4
      %v1031 = vrot.slane %v694, 6
      %v1032 = vsel %vm1016, %v1030, %v1031
      %v1033 = vrot.slane %v1031, 4
      %v1034 = vrot.slane %v695, 6
      %v1035 = vsel %vm1016, %v1033, %v1034
      %v1036 = vrot.slane %v1034, 4
      %v1037 = vrot.slane %v696, 6
      %v1038 = vsel %vm1016, %v1036, %v1037
      %v1039 = vrot.slane %v1037, 4
      %v1040 = vrot.slane %v697, 6
      %v1041 = vsel %vm1016, %v1039, %v1040
      %v1042 = vrot.slane %v1040, 4
      %v1043 = vrot.slane %v893, 6
      %v1044 = vsel %vm1016, %v1042, %v1043
      %v1045 = vrot.slane %v1043, 4
      %v1046 = vrot.slane %v919, 6
      %v1047 = vsel %vm1016, %v1045, %v1046
      %v1058 = vmax.bf16 %v1001, %v1020
      %v1059 = vmax.bf16 %v1002, %v1023
      %v1060 = vmax.bf16 %v1003, %v1026
      %v1061 = vmax.bf16 %v1004, %v1029
      %v1062 = vmax.bf16 %v1005, %v1032
      %v1063 = vmax.bf16 %v1006, %v1035
      %v1064 = vmax.bf16 %v1007, %v1038
      %v1065 = vmax.bf16 %v1008, %v1041
      %v1066 = vmax.bf16 %v1009, %v1044
      %v1067 = vmax.bf16 %v1010, %v1047
      %v1068 = vld [vmem:[#allocation2 + $0x8] sm:$0xc]
      %v1069 = vld [vmem:[#allocation2 + $0x2c] sm:$0xf]
      %v1070 = vld [vmem:[#allocation2 + $0x30] sm:$0x3]
      %v1074 = vrot.slane %v1068, 6
      %v1075 = vrot.slane %v1074, 4
      %v1076 = vsel %vm1016, %v1075, %v1022
      %v1077 = vrot.slane %v1069, 6
      %v1078 = vsel %vm1016, %v1045, %v1077
      %v1079 = vrot.slane %v1077, 4
      %v1080 = vrot.slane %v1070, 6
      %v1081 = vsel %vm1016, %v1079, %v1080
      %v1085 = vmax.bf16 %v1058, %v1076
      %v1086 = vmax.bf16 %v1059, %v1026
      %v1087 = vmax.bf16 %v1060, %v1029
      %v1088 = vmax.bf16 %v1061, %v1032
      %v1089 = vmax.bf16 %v1062, %v1035
      %v1090 = vmax.bf16 %v1063, %v1038
      %v1091 = vmax.bf16 %v1064, %v1041
      %v1092 = vmax.bf16 %v1065, %v1044
      %v1093 = vmax.bf16 %v1066, %v1078
      %v1094 = vmax.bf16 %v1067, %v1081
      %v1095 = vld [vmem:[#allocation2 + $0x30] sm:$0x7]
      %vm1096 = vsmask.f32 1280
      %vm1097 = vsmask.f32 5392
      %vm1098 = vmor %vm1096, %vm1097
      %v1100 = vshrl.u32 %v1068, 16
      %v1102 = vrot.slane %v1100, 6
      %v1103 = vshll.u32 %v1068, 16
      %v1105 = vrot.slane %v1103, 7
      %v1106 = vor.u32 %v1102, %v1105
      %v1107 = vrot.slane %v1106, 4
      %v1108 = vrot.slane %v736, 6
      %v1109 = vrot.slane %v732, 7
      %v1110 = vor.u32 %v1108, %v1109
      %v1111 = vsel %vm1098, %v1107, %v1110
      %v1112 = vrot.slane %v1110, 4
      %v1113 = vrot.slane %v746, 6
      %v1114 = vrot.slane %v742, 7
      %v1115 = vor.u32 %v1113, %v1114
      %v1116 = vsel %vm1098, %v1112, %v1115
      %v1117 = vrot.slane %v1115, 4
      %v1118 = vrot.slane %v756, 6
      %v1119 = vrot.slane %v752, 7
      %v1120 = vor.u32 %v1118, %v1119
      %v1121 = vsel %vm1098, %v1117, %v1120
      %v1122 = vrot.slane %v1120, 4
      %v1123 = vrot.slane %v766, 6
      %v1124 = vrot.slane %v762, 7
      %v1125 = vor.u32 %v1123, %v1124
      %v1126 = vsel %vm1098, %v1122, %v1125
      %v1127 = vrot.slane %v1125, 4
      %v1128 = vrot.slane %v776, 6
      %v1129 = vrot.slane %v772, 7
      %v1130 = vor.u32 %v1128, %v1129
      %v1131 = vsel %vm1098, %v1127, %v1130
      %v1132 = vrot.slane %v1130, 4
      %v1133 = vrot.slane %v786, 6
      %v1134 = vrot.slane %v782, 7
      %v1135 = vor.u32 %v1133, %v1134
      %v1136 = vsel %vm1098, %v1132, %v1135
      %v1137 = vrot.slane %v1135, 4
      %v1138 = vrot.slane %v796, 6
      %v1139 = vrot.slane %v792, 7
      %v1140 = vor.u32 %v1138, %v1139
      %v1141 = vsel %vm1098, %v1137, %v1140
      %v1142 = vrot.slane %v1140, 4
      %v1143 = vrot.slane %v973, 6
      %v1144 = vrot.slane %v976, 7
      %v1145 = vor.u32 %v1143, %v1144
      %v1146 = vsel %vm1098, %v1142, %v1145
      %v1147 = vrot.slane %v1145, 4
      %v1149 = vshrl.u32 %v1069, 16
      %v1151 = vrot.slane %v1149, 6
      %v1152 = vshll.u32 %v1069, 16
      %v1154 = vrot.slane %v1152, 7
      %v1155 = vor.u32 %v1151, %v1154
      %v1156 = vsel %vm1098, %v1147, %v1155
      %v1157 = vrot.slane %v1155, 4
      %v1159 = vshrl.u32 %v1095, 16
      %v1161 = vrot.slane %v1159, 6
      %v1162 = vshll.u32 %v1095, 16
      %v1164 = vrot.slane %v1162, 7
      %v1165 = vor.u32 %v1161, %v1164
      %v1166 = vsel %vm1098, %v1157, %v1165
      %v1177 = vmax.bf16 %v1085, %v1111
      %v1178 = vmax.bf16 %v1086, %v1116
      %v1179 = vmax.bf16 %v1087, %v1121
      %v1180 = vmax.bf16 %v1088, %v1126
      %v1181 = vmax.bf16 %v1089, %v1131
      %v1182 = vmax.bf16 %v1090, %v1136
      %v1183 = vmax.bf16 %v1091, %v1141
      %v1184 = vmax.bf16 %v1092, %v1146
      %v1185 = vmax.bf16 %v1093, %v1156
      %v1186 = vmax.bf16 %v1094, %v1166
      %v1187 = vld [vmem:[#allocation2 + $0x8] sm:$0x8]
      %vm1190 = vcmask 1040384
      %vm1191 = vcmask 1044484
      %vm1192 = vmor %vm1190, %vm1191
      %v1193 = vrot.slane %v1187, 7
      %v1194 = vrot.slane %v1193, 4
      %v1195 = vrot.slane %v691, 7
      %v1196 = vsel %vm1192, %v1194, %v1195
      %v1197 = vrot.slane %v1195, 4
      %v1198 = vrot.slane %v692, 7
      %v1199 = vsel %vm1192, %v1197, %v1198
      %v1200 = vrot.slane %v1198, 4
      %v1201 = vrot.slane %v693, 7
      %v1202 = vsel %vm1192, %v1200, %v1201
      %v1203 = vrot.slane %v1201, 4
      %v1204 = vrot.slane %v694, 7
      %v1205 = vsel %vm1192, %v1203, %v1204
      %v1206 = vrot.slane %v1204, 4
      %v1207 = vrot.slane %v695, 7
      %v1208 = vsel %vm1192, %v1206, %v1207
      %v1209 = vrot.slane %v1207, 4
      %v1210 = vrot.slane %v696, 7
      %v1211 = vsel %vm1192, %v1209, %v1210
      %v1212 = vrot.slane %v1210, 4
      %v1213 = vrot.slane %v697, 7
      %v1214 = vsel %vm1192, %v1212, %v1213
      %v1215 = vrot.slane %v1213, 4
      %v1216 = vrot.slane %v893, 7
      %v1217 = vsel %vm1192, %v1215, %v1216
      %v1218 = vrot.slane %v1216, 4
      %v1219 = vrot.slane %v1069, 7
      %v1220 = vsel %vm1192, %v1218, %v1219
      %v1221 = vrot.slane %v1219, 4
      %v1222 = vrot.slane %v1095, 7
      %v1223 = vsel %vm1192, %v1221, %v1222
      %v1234 = vmax.bf16 %v1177, %v1196
      %v1235 = vmax.bf16 %v1178, %v1199
      %v1236 = vmax.bf16 %v1179, %v1202
      %v1237 = vmax.bf16 %v1180, %v1205
      %v1238 = vmax.bf16 %v1181, %v1208
      %v1239 = vmax.bf16 %v1182, %v1211
      %v1240 = vmax.bf16 %v1183, %v1214
      %v1241 = vmax.bf16 %v1184, %v1217
      %v1242 = vmax.bf16 %v1185, %v1220
      %v1243 = vmax.bf16 %v1186, %v1223
      %v1244 = vld [vmem:[%s4] sm:$0x3]
      %v1245 = vld [vmem:[%s6] sm:$0x1]
      %v1247 = vlaneseq
      %v1248 = vshrl.u32 %v1247, 7
      %v1249 = vsub.s32 0, %v1248
      %v1250 = vrot.slane %v1245, %v1249
      %v1262 = vunpack.c.l.b16 %v1234
      %v1263 = vunpack.c.l.b16 %v1235
      %v1264 = vunpack.c.l.b16 %v1236
      %v1265 = vunpack.c.l.b16 %v1237
      %v1266 = vunpack.c.l.b16 %v1238
      %v1267 = vunpack.c.l.b16 %v1239
      %v1268 = vunpack.c.l.b16 %v1240
      %v1269 = vunpack.c.l.b16 %v1241
      %v1270 = vunpack.c.l.b16 %v1242
      %v1271 = vunpack.c.l.b16 %v1243
      %v1272 = vpack.c.b16 %v1263, %v1262
      %v1273 = vpack.c.b16 %v1265, %v1264
      %v1274 = vpack.c.b16 %v1267, %v1266
      %v1275 = vpack.c.b16 %v1269, %v1268
      %v1276 = vpack.c.b16 %v1271, %v1270
      %v1278 = vsel %vm499, %v1272, 0
      %v1281 = vsel %vm499, %v1273, 0
      %v1284 = vsel %vm499, %v1274, 0
      %v1287 = vsel %vm499, %v1275, 0
      %v1290 = vsel %vm499, %v1276, 0
      %v1293 = vsel %vm515, %v1244, 0
      %1295 = vmatprep.subr.bf16.mxu0 0
      %1296 = vmatpush1.bf16.msra.mxu0 0
      %1297 = vmatprep.subr.bf16.mxu0 0
      %1298 = vmatpush1.bf16.msra.mxu0 0
      %1299 = vmatprep.subr.bf16.mxu0 0
      %1300 = vmatpush1.bf16.msra.mxu0 0
      %1301 = vmatprep.subr.bf16.mxu0 0
      %1302 = vmatpush1.bf16.msra.mxu0 0
      %1303 = vmatprep.subr.bf16.mxu0 0
      %1304 = vmatpush1.bf16.msra.mxu0 0
      %1305 = vmatprep.subr.bf16.mxu0 0
      %1306 = vmatpush1.bf16.msra.mxu0 0
      %1307 = vmatprep.subr.bf16.mxu0 0
      %1308 = vmatpush1.bf16.msra.mxu0 0
      %1309 = vmatprep.subr.bf16.mxu0 0
      %1310 = vmatpush1.bf16.msra.mxu0 %v1293
      %1311 = vmatprep.subr.bf16.mxu0 0
      %1312 = vmatpush2.bf16.msra.mxu0 0
      %1313 = vmatprep.subr.bf16.mxu0 0
      %1314 = vmatpush2.bf16.msra.mxu0 0
      %1315 = vmatprep.subr.bf16.mxu0 0
      %1316 = vmatpush2.bf16.msra.mxu0 0
      %1317 = vmatprep.subr.bf16.mxu0 0
      %1318 = vmatpush2.bf16.msra.mxu0 0
      %1319 = vmatprep.subr.bf16.mxu0 0
      %1320 = vmatpush2.bf16.msra.mxu0 0
      %1321 = vmatprep.subr.bf16.mxu0 0
      %1322 = vmatpush2.bf16.msra.mxu0 0
      %1323 = vmatprep.subr.bf16.mxu0 0
      %1324 = vmatpush2.bf16.msra.mxu0 0
      %1325 = vmatprep.subr.bf16.mxu0 0
      %1326 = vmatpush2.bf16.msra.mxu0 0
      %1327 = vmatprep.mubr.bf16.mxu0 0
      %1328 = vmatmul.mubr.bf16.gmra.mxu0 %v1278
      %v1329 = vpop.f32.mrf.mxu0
      %v1330 = vadd.f32 %v1250, %v1329
      %v1331 = vpop.f32.mrf.mxu0
      %v1332 = vpop.f32.mrf.mxu0
      %v1333 = vadd.f32 %v1250, %v1332
      %v1334 = vpop.f32.mrf.mxu0
      %1335 = vmatprep.mubr.bf16.mxu0 0
      %1336 = vmatmul.mubr.bf16.gmra.mxu0 %v1281
      %v1337 = vpop.f32.mrf.mxu0
      %v1338 = vadd.f32 %v1250, %v1337
      %v1339 = vpop.f32.mrf.mxu0
      %v1340 = vpop.f32.mrf.mxu0
      %v1341 = vadd.f32 %v1250, %v1340
      %v1342 = vpop.f32.mrf.mxu0
      %1343 = vmatprep.mubr.bf16.mxu0 0
      %1344 = vmatmul.mubr.bf16.gmra.mxu0 %v1284
      %v1345 = vpop.f32.mrf.mxu0
      %v1346 = vadd.f32 %v1250, %v1345
      %v1347 = vpop.f32.mrf.mxu0
      %v1348 = vpop.f32.mrf.mxu0
      %v1349 = vadd.f32 %v1250, %v1348
      %v1350 = vpop.f32.mrf.mxu0
      %1351 = vmatprep.mubr.bf16.mxu0 0
      %1352 = vmatmul.mubr.bf16.gmra.mxu0 %v1287
      %v1353 = vpop.f32.mrf.mxu0
      %v1354 = vadd.f32 %v1250, %v1353
      %v1355 = vpop.f32.mrf.mxu0
      %v1356 = vpop.f32.mrf.mxu0
      %v1357 = vadd.f32 %v1250, %v1356
      %v1358 = vpop.f32.mrf.mxu0
      %1359 = vmatprep.mubr.bf16.mxu0 0
      %1360 = vmatmul.mubr.bf16.gmra.mxu0 %v1290
      %v1361 = vpop.f32.mrf.mxu0
      %v1362 = vadd.f32 %v1250, %v1361
      %v1363 = vpop.f32.mrf.mxu0
      %v1364 = vpop.f32.mrf.mxu0
      %v1365 = vadd.f32 %v1250, %v1364
      %v1366 = vpop.f32.mrf.mxu0
      %1367 = vdwg.mxu0
      %v1368 = vmax.f32 %v1330, 0.0
      %v1369 = vmax.f32 %v1333, 0.0
      %v1370 = vmax.f32 %v1338, 0.0
      %v1371 = vmax.f32 %v1341, 0.0
      %v1372 = vmax.f32 %v1346, 0.0
      %v1373 = vmax.f32 %v1349, 0.0
      %v1374 = vmax.f32 %v1354, 0.0
      %v1375 = vmax.f32 %v1357, 0.0
      %v1376 = vmax.f32 %v1362, 0.0
      %v1377 = vmax.f32 %v1365, 0.0
      %v1378 = vpack.c.bf16 %v593, %v592
      %v1379 = vpack.c.bf16 %v595, %v594
      %v1380 = vpack.c.bf16 %v597, %v596
      %v1381 = vpack.c.bf16 %v599, %v598
      %v1382 = vpack.c.bf16 %v601, %v600
      %v1383 = vpack.c.bf16 %v1369, %v1368
      %v1384 = vpack.c.bf16 %v1371, %v1370
      %v1385 = vpack.c.bf16 %v1373, %v1372
      %v1386 = vpack.c.bf16 %v1375, %v1374
      %v1387 = vpack.c.bf16 %v1377, %v1376
      %1393 = vrot.lane.b32.xlu0 %v1383, 10
      %v1394 = vpop.permute.xlu0 %1393
      %1395 = vrot.lane.b32.xlu0 %v1384, 10
      %v1396 = vpop.permute.xlu0 %1395
      %1397 = vrot.lane.b32.xlu0 %v1385, 10
      %v1398 = vpop.permute.xlu0 %1397
      %1399 = vrot.lane.b32.xlu0 %v1386, 10
      %v1400 = vpop.permute.xlu0 %1399
      %1401 = vrot.lane.b32.xlu0 %v1387, 10
      %v1402 = vpop.permute.xlu0 %1401
      %vm1403 = vcmask 80896
      %v1406 = vsel %vm1403, %v1378, %v1394
      %v1409 = vsel %vm1403, %v1379, %v1396
      %v1412 = vsel %vm1403, %v1380, %v1398
      %v1415 = vsel %vm1403, %v1381, %v1400
      %v1418 = vsel %vm1403, %v1382, %v1402
      %v1424 = vunpack.c.l.b16 %v1406
      %v1425 = vunpack.c.h.b16 %v1406
      %v1426 = vunpack.c.l.b16 %v1409
      %v1427 = vunpack.c.h.b16 %v1409
      %v1428 = vunpack.c.l.b16 %v1412
      %v1429 = vunpack.c.h.b16 %v1412
      %v1430 = vunpack.c.l.b16 %v1415
      %v1431 = vunpack.c.h.b16 %v1415
      %v1432 = vunpack.c.l.b16 %v1418
      %v1433 = vunpack.c.h.b16 %v1418
      %v1434 = vpack.c.b16 %v1424, %v1424
      %v1435 = vpack.c.b16 %v1425, %v1425
      %v1436 = vpack.c.b16 %v1426, %v1426
      %v1437 = vpack.c.b16 %v1427, %v1427
      %v1438 = vpack.c.b16 %v1428, %v1428
      %v1439 = vpack.c.b16 %v1429, %v1429
      %v1440 = vpack.c.b16 %v1430, %v1430
      %v1441 = vpack.c.b16 %v1431, %v1431
      %v1442 = vpack.c.b16 %v1432, %v1432
      %v1443 = vpack.c.b16 %v1433, %v1433
      %vm1454 = vcmask 109568
      %1455 = vst.msk [vmem:[%s396] sm:$0xf] %vm1454, %v1434
      %1456 = vst.msk [vmem:[%s396 + $0x4] sm:$0xf] %vm1454, %v1435
      %1457 = vst.msk [vmem:[%s396 + $0x8] sm:$0xf] %vm1454, %v1436
      %1458 = vst.msk [vmem:[%s396 + $0xc] sm:$0xf] %vm1454, %v1437
      %1459 = vst.msk [vmem:[%s396 + $0x10] sm:$0xf] %vm1454, %v1438
      %1460 = vst.msk [vmem:[%s396 + $0x14] sm:$0xf] %vm1454, %v1439
      %1461 = vst.msk [vmem:[%s396 + $0x18] sm:$0xf] %vm1454, %v1440
      %1462 = vst.msk [vmem:[%s396 + $0x1c] sm:$0xf] %vm1454, %v1441
      %1463 = vst.msk [vmem:[%s396 + $0x20] sm:$0xf] %vm1454, %v1442
      %1464 = vst.msk [vmem:[%s396 + $0x24] sm:$0xf] %vm1454, %v1443
      %p1465 = scmp.lt.s32.totalorder %s22, 1
      %s1466 = scalar_select %p1465, %s22, 1
      %p1467 = scmp.lt.s32.totalorder %s23, 7
      %s1468 = scalar_select %p1467, %s23, 7
      %s1469 = smul.addr %s1468, 10
      %s1470 = smul.addr %s1466, 80
      %s1471 = sadd.s32 %s1469, %s1470
      %s1472 = smul.addr %s1471, 4
      %s1473 = scalar_lea.vmem %s7, %s1472
      // Predicated region
      $region49: #{inception_pallas.3} parent=47 // pred_check
        %p1474 = pneg %p222
      $region50: #{inception_pallas.3} parent=47 // pred_check_branch
        %1476 = sbr.rel (%p1474) target = $region52
      $region51: #{inception_pallas.3} parent=47 // pred_region
        _
      $region52: #{inception_pallas.3} parent=47 // pred_fallthru
        _
    $region48: #{inception_pallas.3} parent=5 // pred_fallthru
      _
    %p1477 = scmp.le.s32.totalorder 2, %s13
    // Predicated region
    $region53: #{inception_pallas.3} parent=5 // pred_check
      %p1478 = pneg %p1477
    $region54: #{inception_pallas.3} parent=5 // pred_check_branch
      %1480 = sbr.rel (%p1478) target = $region56
    $region55: #{inception_pallas.3} parent=5 // pred_region
      %s1481 = ssub.s32 %s13, 2
      // Predicated region
      $region57: #{inception_pallas.3} parent=55 // pred_check
        %p1482 = pneg %p228
      $region58: #{inception_pallas.3} parent=55 // pred_check_branch
        %1484 = sbr.rel (%p1482) target = $region60
      $region59: #{inception_pallas.3} parent=55 // pred_region
        %p1485 = scmp.lt.s32.totalorder %s24, 1
        %s1486 = scalar_select %p1485, %s24, 1
        %p1487 = scmp.lt.s32.totalorder %s25, 7
        %s1488 = scalar_select %p1487, %s25, 7
        %s1489 = smul.addr %s1488, 10
        %s1490 = smul.addr %s1486, 80
        %s1491 = sadd.s32 %s1489, %s1490
        %s1492 = smul.addr %s1491, 4
        %s1493 = scalar_lea.vmem %s7, %s1492
      $region60: #{inception_pallas.3} parent=55 // pred_fallthru
        _
    $region56: #{inception_pallas.3} parent=5 // pred_fallthru
      _
  $region6: #{inception_pallas.3} parent=0 // loop_footer
    %s17 = sadd.s32 1, %s13
  $region7: #{inception_pallas.3} parent=0 // loop_footer_branch
    %12 = sbr.rel target = $region3
  $region8: #{inception_pallas.3} parent=0 // loop_exit
    _

// kernel: inception_pallas.4
$region0: #{inception_pallas.4}
  #allocation0 [shape = 'u32[]', space=smem, size = 0x4, offset = 0x4, fixed_abs, tag = 'smem constant byte address 0x4 - core index']
  #allocation1 [shape = 'u32[144,128]{1,0:T(1,128)}', space=vmem, size = 0x12000, scoped, tag = 'internal scratch']
  %s0 = inlined_call_operand.vmem [shape: bf16[2,10,110,4], index: 0, kind: input, shape index: {}]
  %s1 = inlined_call_operand.vmem [shape: bf16[3,36,8], index: 1, kind: input, shape index: {}]
  %s2 = inlined_call_operand.vmem [shape: f32[1,8], index: 2, kind: input, shape index: {}]
  %s3 = inlined_call_operand.vmem [shape: f32[2,8,80,8], index: 3, kind: output, shape index: {}]
  %s4 = sld [smem:[#allocation0]]
  $region53: #{inception_pallas.4} parent=0
    _
  %s6 = ssub.s32 1, %s4
  %s7 = scalar_select 0, %s6, %s4
  loop: start=0, step=1, limit=50
  $region2: #{inception_pallas.4} parent=0 // loop_pre_header
    _
  $region3: #{inception_pallas.4} parent=0 // loop_header
    %s9 = sphi 0, %s13
    %p10 = scmp.ge.s32.totalorder %s9, 50
    %s16 = sphi 0, %s35
    %s17 = sphi 0, %s31
    %s18 = sphi 0, %s27
    %s19 = sphi 0, %s16
    %s20 = sphi 0, %s17
    %s21 = sphi 0, %s18
    %s22 = sphi 0, %s19
    %s23 = sphi 0, %s20
    %s24 = sphi 0, %s21
    %s42 = sphi 0, %s44
    %s45 = sphi 0, %s42
    %s46 = sphi 0, %s45
    %s62 = sphi 0, %s46
    %s66 = sphi 0, %s66
    %s68 = sphi 0, %s66
    %s69 = sphi 0, %s68
    %s83 = sphi 0, %s69
    %s87 = sphi 0, %s87
    %s89 = sphi 0, %s87
    %s90 = sphi 0, %s89
    %s104 = sphi 0, %s90
    %s112 = sphi 0, %s114
    %s115 = sphi 0, %s112
    %s116 = sphi 0, %s115
    %s132 = sphi 0, %s116
  $region4: #{inception_pallas.4} parent=0 // loop_header_branch
    %12 = sbr.rel (%p10) target = $region8
  $region5: #{inception_pallas.4} parent=0 // loop_body
    %s14 = ssub.s32 %s9, 1
    %s15 = ssub.s32 %s9, 2
    %s25 = sadd.s32 1, %s18
    %p26 = scmp.ge.s32.totalorder %s25, 3
    %s27 = scalar_select %p26, 0, %s25
    %s28 = sadd.s32 1, %s17
    %s29 = scalar_select %p26, %s28, %s17
    %p30 = scmp.ge.s32.totalorder %s29, 8
    %s31 = scalar_select %p30, 0, %s29
    %s32 = sadd.s32 1, %s16
    %s33 = scalar_select %p30, %s32, %s16
    %p34 = scmp.ge.s32.totalorder %s33, 2
    %s35 = scalar_select %p34, 0, %s33
    %s36 = sadd.s32 %s17, %s18
    %s37 = sadd.s32 %s31, %s27
    %s38 = ssub.s32 %s16, %s35
    %s39 = ssub.s32 %s36, %s37
    %s40 = sor.u32 %s38, %s39
    %p41 = scmp.eq.s32.totalorder %s40, 0
    %s43 = sadd.s32 %s42, 1
    %s44 = scalar_select %p41, %s42, %s43
    %p47 = pneg %p41
    %p48 = scmp.eq.s32.totalorder %s9, 47
    %p49 = por %p47, %p48
    %p50 = scmp.ne.s32.totalorder %s42, %s45
    %p51 = scmp.eq.s32.totalorder %s9, 0
    %p52 = por %p50, %p51
    %p53 = scmp.ne.s32.totalorder %s42, %s45
    %p54 = scmp.eq.s32.totalorder %s14, 47
    %p55 = por %p53, %p54
    %p56 = scmp.ne.s32.totalorder %s45, %s46
    %p57 = scmp.eq.s32.totalorder %s14, 0
    %p58 = por %p56, %p57
    %p59 = scmp.ne.s32.totalorder %s45, %s46
    %p60 = scmp.eq.s32.totalorder %s15, 47
    %p61 = por %p59, %p60
    %p63 = scmp.ne.s32.totalorder %s46, %s62
    %p64 = scmp.eq.s32.totalorder %s15, 0
    %p65 = por %p63, %p64
    %s67 = sadd.s32 %s66, 1
    %p70 = scmp.eq.s32.totalorder %s9, 47
    %p71 = scmp.ne.s32.totalorder %s66, %s68
    %p72 = scmp.eq.s32.totalorder %s9, 0
    %p73 = por %p71, %p72
    %p74 = scmp.ne.s32.totalorder %s66, %s68
    %p75 = scmp.eq.s32.totalorder %s14, 47
    %p76 = por %p74, %p75
    %p77 = scmp.ne.s32.totalorder %s68, %s69
    %p78 = scmp.eq.s32.totalorder %s14, 0
    %p79 = por %p77, %p78
    %p80 = scmp.ne.s32.totalorder %s68, %s69
    %p81 = scmp.eq.s32.totalorder %s15, 47
    %p82 = por %p80, %p81
    %p84 = scmp.ne.s32.totalorder %s69, %s83
    %p85 = scmp.eq.s32.totalorder %s15, 0
    %p86 = por %p84, %p85
    %s88 = sadd.s32 %s87, 1
    %p91 = scmp.eq.s32.totalorder %s9, 47
    %p92 = scmp.ne.s32.totalorder %s87, %s89
    %p93 = scmp.eq.s32.totalorder %s9, 0
    %p94 = por %p92, %p93
    %p95 = scmp.ne.s32.totalorder %s87, %s89
    %p96 = scmp.eq.s32.totalorder %s14, 47
    %p97 = por %p95, %p96
    %p98 = scmp.ne.s32.totalorder %s89, %s90
    %p99 = scmp.eq.s32.totalorder %s14, 0
    %p100 = por %p98, %p99
    %p101 = scmp.ne.s32.totalorder %s89, %s90
    %p102 = scmp.eq.s32.totalorder %s15, 47
    %p103 = por %p101, %p102
    %p105 = scmp.ne.s32.totalorder %s90, %s104
    %p106 = scmp.eq.s32.totalorder %s15, 0
    %p107 = por %p105, %p106
    %s108 = ssub.s32 %s16, %s35
    %s109 = ssub.s32 %s17, %s31
    %s110 = sor.u32 %s108, %s109
    %p111 = scmp.eq.s32.totalorder %s110, 0
    %s113 = sadd.s32 %s112, 1
    %s114 = scalar_select %p111, %s112, %s113
    %p117 = pneg %p111
    %p118 = scmp.eq.s32.totalorder %s9, 47
    %p119 = por %p117, %p118
    %p120 = scmp.ne.s32.totalorder %s112, %s115
    %p121 = scmp.eq.s32.totalorder %s9, 0
    %p122 = por %p120, %p121
    %p123 = scmp.ne.s32.totalorder %s112, %s115
    %p124 = scmp.eq.s32.totalorder %s14, 47
    %p125 = por %p123, %p124
    %p126 = scmp.ne.s32.totalorder %s115, %s116
    %p127 = scmp.eq.s32.totalorder %s14, 0
    %p128 = por %p126, %p127
    %p129 = scmp.ne.s32.totalorder %s115, %s116
    %p130 = scmp.eq.s32.totalorder %s15, 47
    %p131 = por %p129, %p130
    %p133 = scmp.ne.s32.totalorder %s116, %s132
    %p134 = scmp.eq.s32.totalorder %s15, 0
    %p135 = por %p133, %p134
    %p136 = scmp.le.s32.totalorder 1, %s9
    %p137 = scmp.lt.s32.totalorder %s9, 49
    %p138 = pnand %p136, %p137
    %p139 = pneg %p138
    // Predicated region
    $region9: #{inception_pallas.4} parent=5 // pred_check
      _
    $region10: #{inception_pallas.4} parent=5 // pred_check_branch
      %141 = sbr.rel (%p138) target = $region12
    $region11: #{inception_pallas.4} parent=5 // pred_region
      %s142 = ssub.s32 %s9, 1
      // Predicated region
      $region13: #{inception_pallas.4} parent=11 // pred_check
        %p143 = pneg %p79
      $region14: #{inception_pallas.4} parent=11 // pred_check_branch
        %145 = sbr.rel (%p143) target = $region16
      $region15: #{inception_pallas.4} parent=11 // pred_region
        _
      $region16: #{inception_pallas.4} parent=11 // pred_fallthru
        _
      // Predicated region
      $region17: #{inception_pallas.4} parent=11 // pred_check
        %p146 = pneg %p100
      $region18: #{inception_pallas.4} parent=11 // pred_check_branch
        %148 = sbr.rel (%p146) target = $region20
      $region19: #{inception_pallas.4} parent=11 // pred_region
        _
      $region20: #{inception_pallas.4} parent=11 // pred_fallthru
        _
    $region12: #{inception_pallas.4} parent=5 // pred_fallthru
      _
    %p149 = scmp.lt.s32.totalorder %s9, 48
    // Predicated region
    $region21: #{inception_pallas.4} parent=5 // pred_check
      %p150 = pneg %p149
    $region22: #{inception_pallas.4} parent=5 // pred_check_branch
      %152 = sbr.rel (%p150) target = $region24
    $region23: #{inception_pallas.4} parent=5 // pred_region
      // Predicated region
      $region25: #{inception_pallas.4} parent=23 // pred_check
        %p153 = pneg %p52
      $region26: #{inception_pallas.4} parent=23 // pred_check_branch
        %155 = sbr.rel (%p153) target = $region28
      $region27: #{inception_pallas.4} parent=23 // pred_region
        %s156 = sadd.s32 %s17, %s18
        %p157 = scmp.lt.s32.totalorder %s16, 1
        %s158 = scalar_select %p157, %s16, 1
        %p159 = scmp.lt.s32.totalorder %s156, 9
        %s160 = scalar_select %p159, %s156, 9
        %s161 = smul.addr %s160, 14
        %s162 = smul.addr %s158, 140
        %s163 = sadd.s32 %s161, %s162
        %s164 = smul.addr %s163, 4
        %s165 = scalar_lea.vmem %s0, %s164
        %s166 = sadd.s32 %s17, %s18
      $region28: #{inception_pallas.4} parent=23 // pred_fallthru
        _
    $region24: #{inception_pallas.4} parent=5 // pred_fallthru
      _
    %p167 = scmp.le.s32.totalorder 1, %s9
    %p168 = scmp.lt.s32.totalorder %s9, 49
    %p169 = pnand %p167, %p168
    %p170 = pneg %p169
    // Predicated region
    $region29: #{inception_pallas.4} parent=5 // pred_check
      _
    $region30: #{inception_pallas.4} parent=5 // pred_check_branch
      %172 = sbr.rel (%p169) target = $region32
    $region31: #{inception_pallas.4} parent=5 // pred_region
      %s173 = ssub.s32 %s9, 1
      %s174 = sadd.s32 %s20, %s21
      %p175 = scmp.lt.s32.totalorder %s19, 1
      %s176 = scalar_select %p175, %s19, 1
      %p177 = scmp.lt.s32.totalorder %s174, 9
      %s178 = scalar_select %p177, %s174, 9
      %s179 = smul.addr %s178, 14
      %s180 = smul.addr %s176, 140
      %s181 = sadd.s32 %s179, %s180
      %s182 = smul.addr %s181, 4
      %s183 = scalar_lea.vmem %s0, %s182
      %p184 = pneg %p58
      %p185 = pneg %p55
      %p186 = pneg %p79
      %p187 = pneg %p76
      %p188 = pneg %p100
      %p189 = pneg %p97
      %p190 = pneg %p128
      %p191 = pneg %p125
      %p192 = scmp.lt.s32.totalorder %s19, 1
      %s193 = scalar_select %p192, %s19, 1
      %p194 = scmp.lt.s32.totalorder %s20, 7
      %s195 = scalar_select %p194, %s20, 7
      %s196 = smul.addr %s195, 10
      %s197 = smul.addr %s193, 80
      %s198 = sadd.s32 %s196, %s197
      %s199 = smul.addr %s198, 8
      %s200 = scalar_lea.vmem %s3, %s199
      %s201 = sadd.s32 %s20, %s21
      %p202 = scmp.lt.s32.totalorder %s19, 1
      %s203 = scalar_select %p202, %s19, 1
      %p204 = scmp.lt.s32.totalorder %s201, 9
      %s205 = scalar_select %p204, %s201, 9
      %s206 = smul.addr %s205, 14
      %s207 = smul.addr %s203, 140
      %s208 = sadd.s32 %s206, %s207
      %s209 = smul.addr %s208, 4
      %s210 = scalar_lea.vmem %s0, %s209
      %s211 = sadd.s32 %s20, %s21
      %p212 = scmp.lt.s32.totalorder %s19, 1
      %s213 = scalar_select %p212, %s19, 1
      %p214 = scmp.lt.s32.totalorder %s20, 7
      %s215 = scalar_select %p214, %s20, 7
      %s216 = smul.addr %s215, 10
      %s217 = smul.addr %s213, 80
      %s218 = sadd.s32 %s216, %s217
      %s219 = smul.addr %s218, 8
      %s220 = scalar_lea.vmem %s3, %s219
      %p222 = scmp.eq.s32.totalorder %s21, 0
      // Predicated region
      $region33: #{inception_pallas.4} parent=31 // pred_check
        %p223 = pneg %p222
      $region34: #{inception_pallas.4} parent=31 // pred_check_branch
        %225 = sbr.rel (%p223) target = $region36
      $region35: #{inception_pallas.4} parent=31 // pred_region
        %v226 = vld [vmem:[%s2] sm:$0x1]
        %v228 = vlaneseq
        %v229 = vshrl.u32 %v228, 7
        %v230 = vsub.s32 0, %v229
        %v231 = vrot.slane %v226, %v230
        %vm233 = vcmask 64512
        %234 = vst.msk [vmem:[%s220] sm:$0xff] %vm233, %v231
        %235 = vst.msk [vmem:[%s220 + $0x8] sm:$0xff] %vm233, %v231
        %236 = vst.msk [vmem:[%s220 + $0x10] sm:$0xff] %vm233, %v231
        %237 = vst.msk [vmem:[%s220 + $0x18] sm:$0xff] %vm233, %v231
        %238 = vst.msk [vmem:[%s220 + $0x20] sm:$0xff] %vm233, %v231
        %239 = vst.msk [vmem:[%s220 + $0x28] sm:$0xff] %vm233, %v231
        %240 = vst.msk [vmem:[%s220 + $0x30] sm:$0xff] %vm233, %v231
        %241 = vst.msk [vmem:[%s220 + $0x38] sm:$0xff] %vm233, %v231
        %242 = vst.msk [vmem:[%s220 + $0x40] sm:$0xff] %vm233, %v231
        %243 = vst.msk [vmem:[%s220 + $0x48] sm:$0xff] %vm233, %v231
      $region36: #{inception_pallas.4} parent=31 // pred_fallthru
        _
      %v244 = vld [vmem:[%s210] sm:$0xf]
      %v245 = vld [vmem:[%s210 + $0x4] sm:$0xf]
      %v246 = vld [vmem:[%s210 + $0x8] sm:$0xf]
      %v247 = vld [vmem:[%s210 + $0xc] sm:$0xf]
      %v248 = vld [vmem:[%s210 + $0x10] sm:$0xf]
      %v249 = vld [vmem:[%s210 + $0x14] sm:$0xf]
      %v250 = vld [vmem:[%s210 + $0x18] sm:$0xf]
      %v251 = vld [vmem:[%s210 + $0x1c] sm:$0xf]
      %v252 = vld [vmem:[%s210 + $0x20] sm:$0xf]
      %v253 = vld [vmem:[%s210 + $0x24] sm:$0xf]
      %v254 = vld [vmem:[%s210 + $0x28] sm:$0x1]
      %v255 = vld [vmem:[%s210] sm:$0xe]
      %v256 = vld [vmem:[%s210 + $0x4] sm:$0xe]
      %v257 = vld [vmem:[%s210 + $0x28] sm:$0xf]
      %v258 = vld [vmem:[%s210 + $0x2c] sm:$0x1]
      %v259 = vld [vmem:[%s210 + $0x2c] sm:$0x3]
      %v260 = vld [vmem:[%s210 + $0x4] sm:$0xc]
      %v261 = vld [vmem:[%s210 + $0x8] sm:$0xc]
      %v262 = vld [vmem:[%s210 + $0x2c] sm:$0xf]
      %v263 = vld [vmem:[%s210 + $0x30] sm:$0x3]
      %v264 = vld [vmem:[%s210 + $0x30] sm:$0x7]
      %v265 = vld [vmem:[%s210 + $0x8] sm:$0x8]
      %v276 = vunpack.c.l.b16 %v244
      %v277 = vunpack.c.l.b16 %v245
      %v278 = vunpack.c.l.b16 %v246
      %v279 = vunpack.c.l.b16 %v247
      %v280 = vunpack.c.l.b16 %v248
      %v281 = vunpack.c.l.b16 %v249
      %v282 = vunpack.c.l.b16 %v250
      %v283 = vunpack.c.l.b16 %v251
      %v284 = vunpack.c.l.b16 %v252
      %v285 = vunpack.c.l.b16 %v253
      %v286 = vpack.c.b16 %v277, %v276
      %v287 = vpack.c.b16 %v279, %v278
      %v288 = vpack.c.b16 %v281, %v280
      %v289 = vpack.c.b16 %v283, %v282
      %v290 = vpack.c.b16 %v285, %v284
      %v292 = vunpack.c.l.b16 %v254
      %v293 = vpack.c.b16 %v292, %v292
      %vm294 = vsmask.f32 7424
      %v296 = vshrl.u32 %v286, 16
      %v298 = vshll.u32 %v286, 16
      %v300 = vrot.slane %v298, 1
      %v301 = vor.u32 %v296, %v300
      %v303 = vshll.u32 %v287, 16
      %v305 = vrot.slane %v303, 1
      %v306 = vsel %vm294, %v301, %v305
      %v307 = vshrl.u32 %v287, 16
      %v309 = vor.u32 %v307, %v305
      %v311 = vshll.u32 %v288, 16
      %v313 = vrot.slane %v311, 1
      %v314 = vsel %vm294, %v309, %v313
      %v315 = vshrl.u32 %v288, 16
      %v317 = vor.u32 %v315, %v313
      %v319 = vshll.u32 %v289, 16
      %v321 = vrot.slane %v319, 1
      %v322 = vsel %vm294, %v317, %v321
      %v323 = vshrl.u32 %v289, 16
      %v325 = vor.u32 %v323, %v321
      %v327 = vshll.u32 %v290, 16
      %v329 = vrot.slane %v327, 1
      %v330 = vsel %vm294, %v325, %v329
      %v331 = vshrl.u32 %v290, 16
      %v333 = vor.u32 %v331, %v329
      %v335 = vshll.u32 %v293, 16
      %v337 = vrot.slane %v335, 1
      %v338 = vsel %vm294, %v333, %v337
      %339 = vrot.lane.b32.xlu0 %v306, 4
      %v340 = vpop.permute.xlu0 %339
      %341 = vrot.lane.b32.xlu0 %v314, 4
      %v342 = vpop.permute.xlu0 %341
      %343 = vrot.lane.b32.xlu0 %v322, 4
      %v344 = vpop.permute.xlu0 %343
      %345 = vrot.lane.b32.xlu0 %v330, 4
      %v346 = vpop.permute.xlu0 %345
      %347 = vrot.lane.b32.xlu0 %v338, 4
      %v348 = vpop.permute.xlu0 %347
      %v350 = vunpack.c.l.b16 %v255
      %v351 = vpack.c.b16 %v277, %v350
      %vm352 = vcmask 1046528
      %v353 = vrot.slane %v351, 1
      %v354 = vrot.slane %v287, 1
      %v355 = vsel %vm352, %v353, %v354
      %v356 = vrot.slane %v288, 1
      %v357 = vsel %vm352, %v354, %v356
      %v358 = vrot.slane %v289, 1
      %v359 = vsel %vm352, %v356, %v358
      %v360 = vrot.slane %v290, 1
      %v361 = vsel %vm352, %v358, %v360
      %v362 = vrot.slane %v293, 1
      %v363 = vsel %vm352, %v360, %v362
      %364 = vrot.lane.b32.xlu0 %v355, 8
      %v365 = vpop.permute.xlu0 %364
      %366 = vrot.lane.b32.xlu0 %v357, 8
      %v367 = vpop.permute.xlu0 %366
      %368 = vrot.lane.b32.xlu0 %v359, 8
      %v369 = vpop.permute.xlu0 %368
      %370 = vrot.lane.b32.xlu0 %v361, 8
      %v371 = vpop.permute.xlu0 %370
      %372 = vrot.lane.b32.xlu0 %v363, 8
      %v373 = vpop.permute.xlu0 %372
      %v377 = vunpack.c.l.b16 %v256
      %v378 = vunpack.c.l.b16 %v257
      %v379 = vunpack.c.l.b16 %v258
      %v380 = vpack.c.b16 %v278, %v377
      %v381 = vpack.c.b16 %v280, %v279
      %v382 = vpack.c.b16 %v282, %v281
      %v383 = vpack.c.b16 %v284, %v283
      %v384 = vpack.c.b16 %v378, %v285
      %v385 = vpack.c.b16 %v379, %v379
      %v386 = vrot.slane %v380, 1
      %v387 = vrot.slane %v381, 1
      %v388 = vsel %vm352, %v386, %v387
      %v389 = vrot.slane %v382, 1
      %v390 = vsel %vm352, %v387, %v389
      %v391 = vrot.slane %v383, 1
      %v392 = vsel %vm352, %v389, %v391
      %v393 = vrot.slane %v384, 1
      %v394 = vsel %vm352, %v391, %v393
      %v395 = vrot.slane %v385, 1
      %v396 = vsel %vm352, %v393, %v395
      %397 = vrot.lane.b32.xlu0 %v388, 12
      %v398 = vpop.permute.xlu0 %397
      %399 = vrot.lane.b32.xlu0 %v390, 12
      %v400 = vpop.permute.xlu0 %399
      %401 = vrot.lane.b32.xlu0 %v392, 12
      %v402 = vpop.permute.xlu0 %401
      %403 = vrot.lane.b32.xlu0 %v394, 12
      %v404 = vpop.permute.xlu0 %403
      %405 = vrot.lane.b32.xlu0 %v396, 12
      %v406 = vpop.permute.xlu0 %405
      %v408 = vunpack.c.l.b16 %v259
      %v409 = vpack.c.b16 %v408, %v408
      %vm410 = vsmask.f32 6400
      %v412 = vshrl.u32 %v380, 16
      %v414 = vrot.slane %v412, 1
      %v415 = vshll.u32 %v380, 16
      %v417 = vrot.slane %v415, 2
      %v418 = vor.u32 %v414, %v417
      %v420 = vshrl.u32 %v381, 16
      %v422 = vrot.slane %v420, 1
      %v423 = vshll.u32 %v381, 16
      %v425 = vrot.slane %v423, 2
      %v426 = vor.u32 %v422, %v425
      %v427 = vsel %vm410, %v418, %v426
      %v429 = vshrl.u32 %v382, 16
      %v431 = vrot.slane %v429, 1
      %v432 = vshll.u32 %v382, 16
      %v434 = vrot.slane %v432, 2
      %v435 = vor.u32 %v431, %v434
      %v436 = vsel %vm410, %v426, %v435
      %v438 = vshrl.u32 %v383, 16
      %v440 = vrot.slane %v438, 1
      %v441 = vshll.u32 %v383, 16
      %v443 = vrot.slane %v441, 2
      %v444 = vor.u32 %v440, %v443
      %v445 = vsel %vm410, %v435, %v444
      %v447 = vshrl.u32 %v384, 16
      %v449 = vrot.slane %v447, 1
      %v450 = vshll.u32 %v384, 16
      %v452 = vrot.slane %v450, 2
      %v453 = vor.u32 %v449, %v452
      %v454 = vsel %vm410, %v444, %v453
      %v456 = vshrl.u32 %v409, 16
      %v458 = vrot.slane %v456, 1
      %v459 = vshll.u32 %v409, 16
      %v461 = vrot.slane %v459, 2
      %v462 = vor.u32 %v458, %v461
      %v463 = vsel %vm410, %v453, %v462
      %464 = vrot.lane.b32.xlu0 %v427, 16
      %v465 = vpop.permute.xlu0 %464
      %466 = vrot.lane.b32.xlu0 %v436, 16
      %v467 = vpop.permute.xlu0 %466
      %468 = vrot.lane.b32.xlu0 %v445, 16
      %v469 = vpop.permute.xlu0 %468
      %470 = vrot.lane.b32.xlu0 %v454, 16
      %v471 = vpop.permute.xlu0 %470
      %472 = vrot.lane.b32.xlu0 %v463, 16
      %v473 = vpop.permute.xlu0 %472
      %v475 = vunpack.c.l.b16 %v260
      %v476 = vpack.c.b16 %v278, %v475
      %vm477 = vcmask 1045504
      %v478 = vrot.slane %v476, 2
      %v479 = vrot.slane %v381, 2
      %v480 = vsel %vm477, %v478, %v479
      %v481 = vrot.slane %v382, 2
      %v482 = vsel %vm477, %v479, %v481
      %v483 = vrot.slane %v383, 2
      %v484 = vsel %vm477, %v481, %v483
      %v485 = vrot.slane %v384, 2
      %v486 = vsel %vm477, %v483, %v485
      %v487 = vrot.slane %v409, 2
      %v488 = vsel %vm477, %v485, %v487
      %489 = vrot.lane.b32.xlu0 %v480, 20
      %v490 = vpop.permute.xlu0 %489
      %491 = vrot.lane.b32.xlu0 %v482, 20
      %v492 = vpop.permute.xlu0 %491
      %493 = vrot.lane.b32.xlu0 %v484, 20
      %v494 = vpop.permute.xlu0 %493
      %495 = vrot.lane.b32.xlu0 %v486, 20
      %v496 = vpop.permute.xlu0 %495
      %497 = vrot.lane.b32.xlu0 %v488, 20
      %v498 = vpop.permute.xlu0 %497
      %v502 = vunpack.c.l.b16 %v261
      %v503 = vunpack.c.l.b16 %v262
      %v504 = vunpack.c.l.b16 %v263
      %v505 = vpack.c.b16 %v279, %v502
      %v506 = vpack.c.b16 %v503, %v378
      %v507 = vpack.c.b16 %v504, %v504
      %v508 = vrot.slane %v505, 2
      %v509 = vrot.slane %v288, 2
      %v510 = vsel %vm477, %v508, %v509
      %v511 = vrot.slane %v289, 2
      %v512 = vsel %vm477, %v509, %v511
      %v513 = vrot.slane %v290, 2
      %v514 = vsel %vm477, %v511, %v513
      %v515 = vrot.slane %v506, 2
      %v516 = vsel %vm477, %v513, %v515
      %v517 = vrot.slane %v507, 2
      %v518 = vsel %vm477, %v515, %v517
      %519 = vrot.lane.b32.xlu0 %v510, 24
      %v520 = vpop.permute.xlu0 %519
      %521 = vrot.lane.b32.xlu0 %v512, 24
      %v522 = vpop.permute.xlu0 %521
      %523 = vrot.lane.b32.xlu0 %v514, 24
      %v524 = vpop.permute.xlu0 %523
      %525 = vrot.lane.b32.xlu0 %v516, 24
      %v526 = vpop.permute.xlu0 %525
      %527 = vrot.lane.b32.xlu0 %v518, 24
      %v528 = vpop.permute.xlu0 %527
      %v530 = vunpack.c.l.b16 %v264
      %v531 = vpack.c.b16 %v530, %v530
      %vm532 = vsmask.f32 5376
      %v534 = vshrl.u32 %v505, 16
      %v536 = vrot.slane %v534, 2
      %v537 = vshll.u32 %v505, 16
      %v539 = vrot.slane %v537, 3
      %v540 = vor.u32 %v536, %v539
      %v541 = vrot.slane %v315, 2
      %v542 = vrot.slane %v311, 3
      %v543 = vor.u32 %v541, %v542
      %v544 = vsel %vm532, %v540, %v543
      %v545 = vrot.slane %v323, 2
      %v546 = vrot.slane %v319, 3
      %v547 = vor.u32 %v545, %v546
      %v548 = vsel %vm532, %v543, %v547
      %v549 = vrot.slane %v331, 2
      %v550 = vrot.slane %v327, 3
      %v551 = vor.u32 %v549, %v550
      %v552 = vsel %vm532, %v547, %v551
      %v554 = vshrl.u32 %v506, 16
      %v556 = vrot.slane %v554, 2
      %v557 = vshll.u32 %v506, 16
      %v559 = vrot.slane %v557, 3
      %v560 = vor.u32 %v556, %v559
      %v561 = vsel %vm532, %v551, %v560
      %v563 = vshrl.u32 %v531, 16
      %v565 = vrot.slane %v563, 2
      %v566 = vshll.u32 %v531, 16
      %v568 = vrot.slane %v566, 3
      %v569 = vor.u32 %v565, %v568
      %v570 = vsel %vm532, %v560, %v569
      %571 = vrot.lane.b32.xlu0 %v544, 28
      %v572 = vpop.permute.xlu0 %571
      %573 = vrot.lane.b32.xlu0 %v548, 28
      %v574 = vpop.permute.xlu0 %573
      %575 = vrot.lane.b32.xlu0 %v552, 28
      %v576 = vpop.permute.xlu0 %575
      %577 = vrot.lane.b32.xlu0 %v561, 28
      %v578 = vpop.permute.xlu0 %577
      %579 = vrot.lane.b32.xlu0 %v570, 28
      %v580 = vpop.permute.xlu0 %579
      %v582 = vunpack.c.l.b16 %v265
      %v583 = vpack.c.b16 %v279, %v582
      %vm584 = vcmask 1044480
      %v585 = vrot.slane %v583, 3
      %v586 = vrot.slane %v288, 3
      %v587 = vsel %vm584, %v585, %v586
      %v588 = vrot.slane %v289, 3
      %v589 = vsel %vm584, %v586, %v588
      %v590 = vrot.slane %v290, 3
      %v591 = vsel %vm584, %v588, %v590
      %v592 = vrot.slane %v506, 3
      %v593 = vsel %vm584, %v590, %v592
      %v594 = vrot.slane %v531, 3
      %v595 = vsel %vm584, %v592, %v594
      %596 = vrot.lane.b32.xlu0 %v587, 32
      %v597 = vpop.permute.xlu0 %596
      %598 = vrot.lane.b32.xlu0 %v589, 32
      %v599 = vpop.permute.xlu0 %598
      %600 = vrot.lane.b32.xlu0 %v591, 32
      %v601 = vpop.permute.xlu0 %600
      %602 = vrot.lane.b32.xlu0 %v593, 32
      %v603 = vpop.permute.xlu0 %602
      %604 = vrot.lane.b32.xlu0 %v595, 32
      %v605 = vpop.permute.xlu0 %604
      %vm606 = vcmask 31744
      %v608 = vsel %vm606, %v286, %v340
      %v610 = vsel %vm606, %v287, %v342
      %v612 = vsel %vm606, %v288, %v344
      %v614 = vsel %vm606, %v289, %v346
      %v616 = vsel %vm606, %v290, %v348
      %vm617 = vcmask 64512
      %v619 = vsel %vm617, %v608, %v365
      %v621 = vsel %vm617, %v610, %v367
      %v623 = vsel %vm617, %v612, %v369
      %v625 = vsel %vm617, %v614, %v371
      %v627 = vsel %vm617, %v616, %v373
      %vm628 = vcmask 97280
      %v630 = vsel %vm628, %v619, %v398
      %v632 = vsel %vm628, %v621, %v400
      %v634 = vsel %vm628, %v623, %v402
      %v636 = vsel %vm628, %v625, %v404
      %v638 = vsel %vm628, %v627, %v406
      %vm639 = vcmask 130048
      %v641 = vsel %vm639, %v630, %v465
      %v643 = vsel %vm639, %v632, %v467
      %v645 = vsel %vm639, %v634, %v469
      %v647 = vsel %vm639, %v636, %v471
      %v649 = vsel %vm639, %v638, %v473
      %vm650 = vcmask 162816
      %v652 = vsel %vm650, %v641, %v490
      %v654 = vsel %vm650, %v643, %v492
      %v656 = vsel %vm650, %v645, %v494
      %v658 = vsel %vm650, %v647, %v496
      %v660 = vsel %vm650, %v649, %v498
      %vm661 = vcmask 195584
      %v663 = vsel %vm661, %v652, %v520
      %v665 = vsel %vm661, %v654, %v522
      %v667 = vsel %vm661, %v656, %v524
      %v669 = vsel %vm661, %v658, %v526
      %v671 = vsel %vm661, %v660, %v528
      %vm672 = vcmask 228352
      %v674 = vsel %vm672, %v663, %v572
      %v676 = vsel %vm672, %v665, %v574
      %v678 = vsel %vm672, %v667, %v576
      %v680 = vsel %vm672, %v669, %v578
      %v682 = vsel %vm672, %v671, %v580
      %vm683 = vcmask 261120
      %v685 = vsel %vm683, %v674, %v597
      %v687 = vsel %vm683, %v676, %v599
      %v689 = vsel %vm683, %v678, %v601
      %v691 = vsel %vm683, %v680, %v603
      %v693 = vsel %vm683, %v682, %v605
      %v694 = vld [vmem:[%s220] sm:$0xff]
      %v695 = vld [vmem:[%s220 + $0x8] sm:$0xff]
      %v696 = vld [vmem:[%s220 + $0x10] sm:$0xff]
      %v697 = vld [vmem:[%s220 + $0x18] sm:$0xff]
      %v698 = vld [vmem:[%s220 + $0x20] sm:$0xff]
      %v699 = vld [vmem:[%s220 + $0x28] sm:$0xff]
      %v700 = vld [vmem:[%s220 + $0x30] sm:$0xff]
      %v701 = vld [vmem:[%s220 + $0x38] sm:$0xff]
      %v702 = vld [vmem:[%s220 + $0x40] sm:$0xff]
      %v703 = vld [vmem:[%s220 + $0x48] sm:$0xff]
      %s704 = smul.u32 %s21, 5
      %s705 = smul.addr %s704, 4
      %s706 = scalar_lea.vmem %s1, %s705
      %v707 = vld [vmem:[%s706] sm:$0xf]
      %v708 = vld [vmem:[%s706 + $0x4] sm:$0xf]
      %v709 = vld [vmem:[%s706 + $0x8] sm:$0xf]
      %v710 = vld [vmem:[%s706 + $0xc] sm:$0xf]
      %v711 = vld [vmem:[%s706 + $0x10] sm:$0x3]
      %v717 = vunpack.c.l.b16 %v707
      %v718 = vunpack.c.l.b16 %v708
      %v719 = vunpack.c.l.b16 %v709
      %v720 = vunpack.c.l.b16 %v710
      %v721 = vunpack.c.l.b16 %v711
      %v722 = vpack.c.b16 %v718, %v717
      %v723 = vpack.c.b16 %v720, %v719
      %v724 = vpack.c.b16 %v721, %v721
      %vm727 = vcmask 293888
      %v728 = vsel %vm727, %v685, 0
      %v730 = vsel %vm727, %v687, 0
      %v732 = vsel %vm727, %v689, 0
      %v734 = vsel %vm727, %v691, 0
      %v736 = vsel %vm727, %v693, 0
      %vm738 = vcmask 1041408
      %v740 = vsel %vm738, %v724, 0
      %742 = vmatprep.subr.bf16.mxu0 0
      %743 = vmatpush1.bf16.msra.mxu0 0
      %744 = vmatprep.subr.bf16.mxu0 0
      %745 = vmatpush1.bf16.msra.mxu0 0
      %746 = vmatprep.subr.bf16.mxu0 0
      %747 = vmatpush1.bf16.msra.mxu0 0
      %748 = vmatprep.subr.bf16.mxu0 0
      %749 = vmatpush1.bf16.msra.mxu0 0
      %750 = vmatprep.subr.bf16.mxu0 0
      %751 = vmatpush1.bf16.msra.mxu0 0
      %752 = vmatprep.subr.bf16.mxu0 0
      %753 = vmatpush1.bf16.msra.mxu0 %v740
      %754 = vmatprep.subr.bf16.mxu0 0
      %755 = vmatpush1.bf16.msra.mxu0 %v723
      %756 = vmatprep.subr.bf16.mxu0 0
      %757 = vmatpush1.bf16.msra.mxu0 %v722
      %758 = vmatprep.subr.bf16.mxu0 0
      %759 = vmatpush2.bf16.msra.mxu0 0
      %760 = vmatprep.subr.bf16.mxu0 0
      %761 = vmatpush2.bf16.msra.mxu0 0
      %762 = vmatprep.subr.bf16.mxu0 0
      %763 = vmatpush2.bf16.msra.mxu0 0
      %764 = vmatprep.subr.bf16.mxu0 0
      %765 = vmatpush2.bf16.msra.mxu0 0
      %766 = vmatprep.subr.bf16.mxu0 0
      %767 = vmatpush2.bf16.msra.mxu0 0
      %768 = vmatprep.subr.bf16.mxu0 0
      %769 = vmatpush2.bf16.msra.mxu0 0
      %770 = vmatprep.subr.bf16.mxu0 0
      %771 = vmatpush2.bf16.msra.mxu0 0
      %772 = vmatprep.subr.bf16.mxu0 0
      %773 = vmatpush2.bf16.msra.mxu0 0
      %774 = vmatprep.mubr.bf16.mxu0 0
      %775 = vmatmul.mubr.bf16.gmra.mxu0 %v728
      %v776 = vpop.f32.mrf.mxu0
      %v777 = vadd.f32 0.0, %v776
      %v778 = vpop.f32.mrf.mxu0
      %v779 = vpop.f32.mrf.mxu0
      %v780 = vadd.f32 0.0, %v779
      %v781 = vpop.f32.mrf.mxu0
      %782 = vmatprep.mubr.bf16.mxu0 0
      %783 = vmatmul.mubr.bf16.gmra.mxu0 %v730
      %v784 = vpop.f32.mrf.mxu0
      %v785 = vadd.f32 0.0, %v784
      %v786 = vpop.f32.mrf.mxu0
      %v787 = vpop.f32.mrf.mxu0
      %v788 = vadd.f32 0.0, %v787
      %v789 = vpop.f32.mrf.mxu0
      %790 = vmatprep.mubr.bf16.mxu0 0
      %791 = vmatmul.mubr.bf16.gmra.mxu0 %v732
      %v792 = vpop.f32.mrf.mxu0
      %v793 = vadd.f32 0.0, %v792
      %v794 = vpop.f32.mrf.mxu0
      %v795 = vpop.f32.mrf.mxu0
      %v796 = vadd.f32 0.0, %v795
      %v797 = vpop.f32.mrf.mxu0
      %798 = vmatprep.mubr.bf16.mxu0 0
      %799 = vmatmul.mubr.bf16.gmra.mxu0 %v734
      %v800 = vpop.f32.mrf.mxu0
      %v801 = vadd.f32 0.0, %v800
      %v802 = vpop.f32.mrf.mxu0
      %v803 = vpop.f32.mrf.mxu0
      %v804 = vadd.f32 0.0, %v803
      %v805 = vpop.f32.mrf.mxu0
      %806 = vmatprep.mubr.bf16.mxu0 0
      %807 = vmatmul.mubr.bf16.gmra.mxu0 %v736
      %v808 = vpop.f32.mrf.mxu0
      %v809 = vadd.f32 0.0, %v808
      %v810 = vpop.f32.mrf.mxu0
      %v811 = vpop.f32.mrf.mxu0
      %v812 = vadd.f32 0.0, %v811
      %v813 = vpop.f32.mrf.mxu0
      %814 = vdwg.mxu0
      %v815 = vadd.f32 %v694, %v777
      %v816 = vadd.f32 %v695, %v780
      %v817 = vadd.f32 %v696, %v785
      %v818 = vadd.f32 %v697, %v788
      %v819 = vadd.f32 %v698, %v793
      %v820 = vadd.f32 %v699, %v796
      %v821 = vadd.f32 %v700, %v801
      %v822 = vadd.f32 %v701, %v804
      %v823 = vadd.f32 %v702, %v809
      %v824 = vadd.f32 %v703, %v812
      %825 = vst.msk [vmem:[%s220] sm:$0xff] %vm617, %v815
      %826 = vst.msk [vmem:[%s220 + $0x8] sm:$0xff] %vm617, %v816
      %827 = vst.msk [vmem:[%s220 + $0x10] sm:$0xff] %vm617, %v817
      %828 = vst.msk [vmem:[%s220 + $0x18] sm:$0xff] %vm617, %v818
      %829 = vst.msk [vmem:[%s220 + $0x20] sm:$0xff] %vm617, %v819
      %830 = vst.msk [vmem:[%s220 + $0x28] sm:$0xff] %vm617, %v820
      %831 = vst.msk [vmem:[%s220 + $0x30] sm:$0xff] %vm617, %v821
      %832 = vst.msk [vmem:[%s220 + $0x38] sm:$0xff] %vm617, %v822
      %833 = vst.msk [vmem:[%s220 + $0x40] sm:$0xff] %vm617, %v823
      %834 = vst.msk [vmem:[%s220 + $0x48] sm:$0xff] %vm617, %v824
      %p835 = scmp.eq.s32.totalorder %s21, 2
      // Predicated region
      $region37: #{inception_pallas.4} parent=31 // pred_check
        %p836 = pneg %p835
      $region38: #{inception_pallas.4} parent=31 // pred_check_branch
        %838 = sbr.rel (%p836) target = $region40
      $region39: #{inception_pallas.4} parent=31 // pred_region
        %v839 = vld [vmem:[%s220] sm:$0xff]
        %v840 = vld [vmem:[%s220 + $0x8] sm:$0xff]
        %v841 = vld [vmem:[%s220 + $0x10] sm:$0xff]
        %v842 = vld [vmem:[%s220 + $0x18] sm:$0xff]
        %v843 = vld [vmem:[%s220 + $0x20] sm:$0xff]
        %v844 = vld [vmem:[%s220 + $0x28] sm:$0xff]
        %v845 = vld [vmem:[%s220 + $0x30] sm:$0xff]
        %v846 = vld [vmem:[%s220 + $0x38] sm:$0xff]
        %v847 = vld [vmem:[%s220 + $0x40] sm:$0xff]
        %v848 = vld [vmem:[%s220 + $0x48] sm:$0xff]
        %v849 = vmax.f32 %v839, 0.0
        %v850 = vmax.f32 %v840, 0.0
        %v851 = vmax.f32 %v841, 0.0
        %v852 = vmax.f32 %v842, 0.0
        %v853 = vmax.f32 %v843, 0.0
        %v854 = vmax.f32 %v844, 0.0
        %v855 = vmax.f32 %v845, 0.0
        %v856 = vmax.f32 %v846, 0.0
        %v857 = vmax.f32 %v847, 0.0
        %v858 = vmax.f32 %v848, 0.0
        %859 = vst.msk [vmem:[%s220] sm:$0xff] %vm617, %v849
        %860 = vst.msk [vmem:[%s220 + $0x8] sm:$0xff] %vm617, %v850
        %861 = vst.msk [vmem:[%s220 + $0x10] sm:$0xff] %vm617, %v851
        %862 = vst.msk [vmem:[%s220 + $0x18] sm:$0xff] %vm617, %v852
        %863 = vst.msk [vmem:[%s220 + $0x20] sm:$0xff] %vm617, %v853
        %864 = vst.msk [vmem:[%s220 + $0x28] sm:$0xff] %vm617, %v854
        %865 = vst.msk [vmem:[%s220 + $0x30] sm:$0xff] %vm617, %v855
        %866 = vst.msk [vmem:[%s220 + $0x38] sm:$0xff] %vm617, %v856
        %867 = vst.msk [vmem:[%s220 + $0x40] sm:$0xff] %vm617, %v857
        %868 = vst.msk [vmem:[%s220 + $0x48] sm:$0xff] %vm617, %v858
      $region40: #{inception_pallas.4} parent=31 // pred_fallthru
        _
      %p869 = scmp.lt.s32.totalorder %s19, 1
      %s870 = scalar_select %p869, %s19, 1
      %p871 = scmp.lt.s32.totalorder %s20, 7
      %s872 = scalar_select %p871, %s20, 7
      %s873 = smul.addr %s872, 10
      %s874 = smul.addr %s870, 80
      %s875 = sadd.s32 %s873, %s874
      %s876 = smul.addr %s875, 8
      %s877 = scalar_lea.vmem %s3, %s876
      // Predicated region
      $region41: #{inception_pallas.4} parent=31 // pred_check
        %p878 = pneg %p125
      $region42: #{inception_pallas.4} parent=31 // pred_check_branch
        %880 = sbr.rel (%p878) target = $region44
      $region43: #{inception_pallas.4} parent=31 // pred_region
        _
      $region44: #{inception_pallas.4} parent=31 // pred_fallthru
        _
    $region32: #{inception_pallas.4} parent=5 // pred_fallthru
      _
    %p881 = scmp.le.s32.totalorder 2, %s9
    // Predicated region
    $region45: #{inception_pallas.4} parent=5 // pred_check
      %p882 = pneg %p881
    $region46: #{inception_pallas.4} parent=5 // pred_check_branch
      %884 = sbr.rel (%p882) target = $region48
    $region47: #{inception_pallas.4} parent=5 // pred_region
      %s885 = ssub.s32 %s9, 2
      // Predicated region
      $region49: #{inception_pallas.4} parent=47 // pred_check
        %p886 = pneg %p131
      $region50: #{inception_pallas.4} parent=47 // pred_check_branch
        %888 = sbr.rel (%p886) target = $region52
      $region51: #{inception_pallas.4} parent=47 // pred_region
        %p889 = scmp.lt.s32.totalorder %s22, 1
        %s890 = scalar_select %p889, %s22, 1
        %p891 = scmp.lt.s32.totalorder %s23, 7
        %s892 = scalar_select %p891, %s23, 7
        %s893 = smul.addr %s892, 10
        %s894 = smul.addr %s890, 80
        %s895 = sadd.s32 %s893, %s894
        %s896 = smul.addr %s895, 8
        %s897 = scalar_lea.vmem %s3, %s896
      $region52: #{inception_pallas.4} parent=47 // pred_fallthru
        _
    $region48: #{inception_pallas.4} parent=5 // pred_fallthru
      _
  $region6: #{inception_pallas.4} parent=0 // loop_footer
    %s13 = sadd.s32 1, %s9
  $region7: #{inception_pallas.4} parent=0 // loop_footer_branch
    %8 = sbr.rel target = $region3
  $region8: #{inception_pallas.4} parent=0 // loop_exit
    _

// kernel: inception_pallas.5
$region0: #{inception_pallas.5}
  #allocation0 [shape = 'u32[]', space=smem, size = 0x4, offset = 0x4, fixed_abs, tag = 'smem constant byte address 0x4 - core index']
  #allocation1 [shape = 'u32[144,128]{1,0:T(1,128)}', space=vmem, size = 0x12000, scoped, tag = 'internal scratch']
  %s0 = inlined_call_operand.vmem [shape: bf16[2,12,156,2], index: 0, kind: input, shape index: {}]
  %s1 = inlined_call_operand.vmem [shape: bf16[5,50,4], index: 1, kind: input, shape index: {}]
  %s2 = inlined_call_operand.vmem [shape: f32[1,4], index: 2, kind: input, shape index: {}]
  %s3 = inlined_call_operand.vmem [shape: f32[2,8,96,4], index: 3, kind: output, shape index: {}]
  %s4 = sld [smem:[#allocation0]]
  $region53: #{inception_pallas.5} parent=0
    _
  %s6 = ssub.s32 1, %s4
  %s7 = scalar_select 0, %s6, %s4
  loop: start=0, step=1, limit=82
  $region2: #{inception_pallas.5} parent=0 // loop_pre_header
    _
  $region3: #{inception_pallas.5} parent=0 // loop_header
    %s9 = sphi 0, %s13
    %p10 = scmp.ge.s32.totalorder %s9, 82
    %s16 = sphi 0, %s35
    %s17 = sphi 0, %s31
    %s18 = sphi 0, %s27
    %s19 = sphi 0, %s16
    %s20 = sphi 0, %s17
    %s21 = sphi 0, %s18
    %s22 = sphi 0, %s19
    %s23 = sphi 0, %s20
    %s24 = sphi 0, %s21
    %s42 = sphi 0, %s44
    %s45 = sphi 0, %s42
    %s46 = sphi 0, %s45
    %s62 = sphi 0, %s46
    %s66 = sphi 0, %s66
    %s68 = sphi 0, %s66
    %s69 = sphi 0, %s68
    %s83 = sphi 0, %s69
    %s87 = sphi 0, %s87
    %s89 = sphi 0, %s87
    %s90 = sphi 0, %s89
    %s104 = sphi 0, %s90
    %s112 = sphi 0, %s114
    %s115 = sphi 0, %s112
    %s116 = sphi 0, %s115
    %s132 = sphi 0, %s116
  $region4: #{inception_pallas.5} parent=0 // loop_header_branch
    %12 = sbr.rel (%p10) target = $region8
  $region5: #{inception_pallas.5} parent=0 // loop_body
    %s14 = ssub.s32 %s9, 1
    %s15 = ssub.s32 %s9, 2
    %s25 = sadd.s32 1, %s18
    %p26 = scmp.ge.s32.totalorder %s25, 5
    %s27 = scalar_select %p26, 0, %s25
    %s28 = sadd.s32 1, %s17
    %s29 = scalar_select %p26, %s28, %s17
    %p30 = scmp.ge.s32.totalorder %s29, 8
    %s31 = scalar_select %p30, 0, %s29
    %s32 = sadd.s32 1, %s16
    %s33 = scalar_select %p30, %s32, %s16
    %p34 = scmp.ge.s32.totalorder %s33, 2
    %s35 = scalar_select %p34, 0, %s33
    %s36 = sadd.s32 %s17, %s18
    %s37 = sadd.s32 %s31, %s27
    %s38 = ssub.s32 %s16, %s35
    %s39 = ssub.s32 %s36, %s37
    %s40 = sor.u32 %s38, %s39
    %p41 = scmp.eq.s32.totalorder %s40, 0
    %s43 = sadd.s32 %s42, 1
    %s44 = scalar_select %p41, %s42, %s43
    %p47 = pneg %p41
    %p48 = scmp.eq.s32.totalorder %s9, 79
    %p49 = por %p47, %p48
    %p50 = scmp.ne.s32.totalorder %s42, %s45
    %p51 = scmp.eq.s32.totalorder %s9, 0
    %p52 = por %p50, %p51
    %p53 = scmp.ne.s32.totalorder %s42, %s45
    %p54 = scmp.eq.s32.totalorder %s14, 79
    %p55 = por %p53, %p54
    %p56 = scmp.ne.s32.totalorder %s45, %s46
    %p57 = scmp.eq.s32.totalorder %s14, 0
    %p58 = por %p56, %p57
    %p59 = scmp.ne.s32.totalorder %s45, %s46
    %p60 = scmp.eq.s32.totalorder %s15, 79
    %p61 = por %p59, %p60
    %p63 = scmp.ne.s32.totalorder %s46, %s62
    %p64 = scmp.eq.s32.totalorder %s15, 0
    %p65 = por %p63, %p64
    %s67 = sadd.s32 %s66, 1
    %p70 = scmp.eq.s32.totalorder %s9, 79
    %p71 = scmp.ne.s32.totalorder %s66, %s68
    %p72 = scmp.eq.s32.totalorder %s9, 0
    %p73 = por %p71, %p72
    %p74 = scmp.ne.s32.totalorder %s66, %s68
    %p75 = scmp.eq.s32.totalorder %s14, 79
    %p76 = por %p74, %p75
    %p77 = scmp.ne.s32.totalorder %s68, %s69
    %p78 = scmp.eq.s32.totalorder %s14, 0
    %p79 = por %p77, %p78
    %p80 = scmp.ne.s32.totalorder %s68, %s69
    %p81 = scmp.eq.s32.totalorder %s15, 79
    %p82 = por %p80, %p81
    %p84 = scmp.ne.s32.totalorder %s69, %s83
    %p85 = scmp.eq.s32.totalorder %s15, 0
    %p86 = por %p84, %p85
    %s88 = sadd.s32 %s87, 1
    %p91 = scmp.eq.s32.totalorder %s9, 79
    %p92 = scmp.ne.s32.totalorder %s87, %s89
    %p93 = scmp.eq.s32.totalorder %s9, 0
    %p94 = por %p92, %p93
    %p95 = scmp.ne.s32.totalorder %s87, %s89
    %p96 = scmp.eq.s32.totalorder %s14, 79
    %p97 = por %p95, %p96
    %p98 = scmp.ne.s32.totalorder %s89, %s90
    %p99 = scmp.eq.s32.totalorder %s14, 0
    %p100 = por %p98, %p99
    %p101 = scmp.ne.s32.totalorder %s89, %s90
    %p102 = scmp.eq.s32.totalorder %s15, 79
    %p103 = por %p101, %p102
    %p105 = scmp.ne.s32.totalorder %s90, %s104
    %p106 = scmp.eq.s32.totalorder %s15, 0
    %p107 = por %p105, %p106
    %s108 = ssub.s32 %s16, %s35
    %s109 = ssub.s32 %s17, %s31
    %s110 = sor.u32 %s108, %s109
    %p111 = scmp.eq.s32.totalorder %s110, 0
    %s113 = sadd.s32 %s112, 1
    %s114 = scalar_select %p111, %s112, %s113
    %p117 = pneg %p111
    %p118 = scmp.eq.s32.totalorder %s9, 79
    %p119 = por %p117, %p118
    %p120 = scmp.ne.s32.totalorder %s112, %s115
    %p121 = scmp.eq.s32.totalorder %s9, 0
    %p122 = por %p120, %p121
    %p123 = scmp.ne.s32.totalorder %s112, %s115
    %p124 = scmp.eq.s32.totalorder %s14, 79
    %p125 = por %p123, %p124
    %p126 = scmp.ne.s32.totalorder %s115, %s116
    %p127 = scmp.eq.s32.totalorder %s14, 0
    %p128 = por %p126, %p127
    %p129 = scmp.ne.s32.totalorder %s115, %s116
    %p130 = scmp.eq.s32.totalorder %s15, 79
    %p131 = por %p129, %p130
    %p133 = scmp.ne.s32.totalorder %s116, %s132
    %p134 = scmp.eq.s32.totalorder %s15, 0
    %p135 = por %p133, %p134
    %p136 = scmp.le.s32.totalorder 1, %s9
    %p137 = scmp.lt.s32.totalorder %s9, 81
    %p138 = pnand %p136, %p137
    %p139 = pneg %p138
    // Predicated region
    $region9: #{inception_pallas.5} parent=5 // pred_check
      _
    $region10: #{inception_pallas.5} parent=5 // pred_check_branch
      %141 = sbr.rel (%p138) target = $region12
    $region11: #{inception_pallas.5} parent=5 // pred_region
      %s142 = ssub.s32 %s9, 1
      // Predicated region
      $region13: #{inception_pallas.5} parent=11 // pred_check
        %p143 = pneg %p79
      $region14: #{inception_pallas.5} parent=11 // pred_check_branch
        %145 = sbr.rel (%p143) target = $region16
      $region15: #{inception_pallas.5} parent=11 // pred_region
        _
      $region16: #{inception_pallas.5} parent=11 // pred_fallthru
        _
      // Predicated region
      $region17: #{inception_pallas.5} parent=11 // pred_check
        %p146 = pneg %p100
      $region18: #{inception_pallas.5} parent=11 // pred_check_branch
        %148 = sbr.rel (%p146) target = $region20
      $region19: #{inception_pallas.5} parent=11 // pred_region
        _
      $region20: #{inception_pallas.5} parent=11 // pred_fallthru
        _
    $region12: #{inception_pallas.5} parent=5 // pred_fallthru
      _
    %p149 = scmp.lt.s32.totalorder %s9, 80
    // Predicated region
    $region21: #{inception_pallas.5} parent=5 // pred_check
      %p150 = pneg %p149
    $region22: #{inception_pallas.5} parent=5 // pred_check_branch
      %152 = sbr.rel (%p150) target = $region24
    $region23: #{inception_pallas.5} parent=5 // pred_region
      // Predicated region
      $region25: #{inception_pallas.5} parent=23 // pred_check
        %p153 = pneg %p52
      $region26: #{inception_pallas.5} parent=23 // pred_check_branch
        %155 = sbr.rel (%p153) target = $region28
      $region27: #{inception_pallas.5} parent=23 // pred_region
        %s156 = sadd.s32 %s17, %s18
        %p157 = scmp.lt.s32.totalorder %s16, 1
        %s158 = scalar_select %p157, %s16, 1
        %p159 = scmp.lt.s32.totalorder %s156, 11
        %s160 = scalar_select %p159, %s156, 11
        %s161 = smul.addr %s160, 20
        %s162 = smul.addr %s158, 240
        %s163 = sadd.s32 %s161, %s162
        %s164 = smul.addr %s163, 4
        %s165 = scalar_lea.vmem %s0, %s164
        %s166 = sadd.s32 %s17, %s18
      $region28: #{inception_pallas.5} parent=23 // pred_fallthru
        _
    $region24: #{inception_pallas.5} parent=5 // pred_fallthru
      _
    %p167 = scmp.le.s32.totalorder 1, %s9
    %p168 = scmp.lt.s32.totalorder %s9, 81
    %p169 = pnand %p167, %p168
    %p170 = pneg %p169
    // Predicated region
    $region29: #{inception_pallas.5} parent=5 // pred_check
      _
    $region30: #{inception_pallas.5} parent=5 // pred_check_branch
      %172 = sbr.rel (%p169) target = $region32
    $region31: #{inception_pallas.5} parent=5 // pred_region
      %s173 = ssub.s32 %s9, 1
      %s174 = sadd.s32 %s20, %s21
      %p175 = scmp.lt.s32.totalorder %s19, 1
      %s176 = scalar_select %p175, %s19, 1
      %p177 = scmp.lt.s32.totalorder %s174, 11
      %s178 = scalar_select %p177, %s174, 11
      %s179 = smul.addr %s178, 20
      %s180 = smul.addr %s176, 240
      %s181 = sadd.s32 %s179, %s180
      %s182 = smul.addr %s181, 4
      %s183 = scalar_lea.vmem %s0, %s182
      %p184 = pneg %p58
      %p185 = pneg %p55
      %p186 = pneg %p79
      %p187 = pneg %p76
      %p188 = pneg %p100
      %p189 = pneg %p97
      %p190 = pneg %p128
      %p191 = pneg %p125
      %p192 = scmp.lt.s32.totalorder %s19, 1
      %s193 = scalar_select %p192, %s19, 1
      %p194 = scmp.lt.s32.totalorder %s20, 7
      %s195 = scalar_select %p194, %s20, 7
      %s196 = smul.addr %s195, 12
      %s197 = smul.addr %s193, 96
      %s198 = sadd.s32 %s196, %s197
      %s199 = smul.addr %s198, 8
      %s200 = scalar_lea.vmem %s3, %s199
      %s201 = sadd.s32 %s20, %s21
      %p202 = scmp.lt.s32.totalorder %s19, 1
      %s203 = scalar_select %p202, %s19, 1
      %p204 = scmp.lt.s32.totalorder %s201, 11
      %s205 = scalar_select %p204, %s201, 11
      %s206 = smul.addr %s205, 20
      %s207 = smul.addr %s203, 240
      %s208 = sadd.s32 %s206, %s207
      %s209 = smul.addr %s208, 4
      %s210 = scalar_lea.vmem %s0, %s209
      %s211 = sadd.s32 %s20, %s21
      %p212 = scmp.lt.s32.totalorder %s19, 1
      %s213 = scalar_select %p212, %s19, 1
      %p214 = scmp.lt.s32.totalorder %s20, 7
      %s215 = scalar_select %p214, %s20, 7
      %s216 = smul.addr %s215, 12
      %s217 = smul.addr %s213, 96
      %s218 = sadd.s32 %s216, %s217
      %s219 = smul.addr %s218, 8
      %s220 = scalar_lea.vmem %s3, %s219
      %p222 = scmp.eq.s32.totalorder %s21, 0
      // Predicated region
      $region33: #{inception_pallas.5} parent=31 // pred_check
        %p223 = pneg %p222
      $region34: #{inception_pallas.5} parent=31 // pred_check_branch
        %225 = sbr.rel (%p223) target = $region36
      $region35: #{inception_pallas.5} parent=31 // pred_region
        %v226 = vld [vmem:[%s2] sm:$0x1]
        %v228 = vlaneseq
        %v229 = vshrl.u32 %v228, 7
        %v230 = vsub.s32 0, %v229
        %v231 = vrot.slane %v226, %v230
        %vm233 = vcmask 31744
        %234 = vst.msk [vmem:[%s220] sm:$0xff] %vm233, %v231
        %235 = vst.msk [vmem:[%s220 + $0x8] sm:$0xff] %vm233, %v231
        %236 = vst.msk [vmem:[%s220 + $0x10] sm:$0xff] %vm233, %v231
        %237 = vst.msk [vmem:[%s220 + $0x18] sm:$0xff] %vm233, %v231
        %238 = vst.msk [vmem:[%s220 + $0x20] sm:$0xff] %vm233, %v231
        %239 = vst.msk [vmem:[%s220 + $0x28] sm:$0xff] %vm233, %v231
        %240 = vst.msk [vmem:[%s220 + $0x30] sm:$0xff] %vm233, %v231
        %241 = vst.msk [vmem:[%s220 + $0x38] sm:$0xff] %vm233, %v231
        %242 = vst.msk [vmem:[%s220 + $0x40] sm:$0xff] %vm233, %v231
        %243 = vst.msk [vmem:[%s220 + $0x48] sm:$0xff] %vm233, %v231
        %244 = vst.msk [vmem:[%s220 + $0x50] sm:$0xff] %vm233, %v231
        %245 = vst.msk [vmem:[%s220 + $0x58] sm:$0xff] %vm233, %v231
      $region36: #{inception_pallas.5} parent=31 // pred_fallthru
        _
      %v246 = vld [vmem:[%s210] sm:$0xf]
      %v247 = vld [vmem:[%s210 + $0x4] sm:$0xf]
      %v248 = vld [vmem:[%s210 + $0x8] sm:$0xf]
      %v249 = vld [vmem:[%s210 + $0xc] sm:$0xf]
      %v250 = vld [vmem:[%s210 + $0x10] sm:$0xf]
      %v251 = vld [vmem:[%s210 + $0x14] sm:$0xf]
      %v252 = vld [vmem:[%s210 + $0x18] sm:$0xf]
      %v253 = vld [vmem:[%s210 + $0x1c] sm:$0xf]
      %v254 = vld [vmem:[%s210 + $0x20] sm:$0xf]
      %v255 = vld [vmem:[%s210 + $0x24] sm:$0xf]
      %v256 = vld [vmem:[%s210 + $0x28] sm:$0xf]
      %v257 = vld [vmem:[%s210 + $0x2c] sm:$0xf]
      %v258 = vld [vmem:[%s210 + $0x30] sm:$0x1]
      %v259 = vld [vmem:[%s210] sm:$0xe]
      %v260 = vld [vmem:[%s210 + $0x30] sm:$0x3]
      %v261 = vld [vmem:[%s210] sm:$0xc]
      %v262 = vld [vmem:[%s210 + $0x4] sm:$0xc]
      %v263 = vld [vmem:[%s210 + $0x30] sm:$0xf]
      %v264 = vld [vmem:[%s210 + $0x34] sm:$0x3]
      %v265 = vld [vmem:[%s210 + $0x34] sm:$0x7]
      %v266 = vld [vmem:[%s210 + $0x4] sm:$0x8]
      %v267 = vld [vmem:[%s210 + $0x34] sm:$0xf]
      %v268 = vld [vmem:[%s210 + $0x38] sm:$0xf]
      %v269 = vld [vmem:[%s210 + $0x3c] sm:$0x1]
      %v270 = vld [vmem:[%s210 + $0xc] sm:$0xe]
      %v271 = vld [vmem:[%s210 + $0x3c] sm:$0x3]
      %v272 = vld [vmem:[%s210 + $0xc] sm:$0xc]
      %v273 = vld [vmem:[%s210 + $0x10] sm:$0xc]
      %v274 = vld [vmem:[%s210 + $0x3c] sm:$0xf]
      %v275 = vld [vmem:[%s210 + $0x40] sm:$0x3]
      %v276 = vld [vmem:[%s210 + $0x40] sm:$0x7]
      %v277 = vld [vmem:[%s210 + $0x10] sm:$0x8]
      %v278 = vld [vmem:[%s210 + $0x40] sm:$0xf]
      %v279 = vld [vmem:[%s210 + $0x44] sm:$0xf]
      %v280 = vld [vmem:[%s210 + $0x48] sm:$0x1]
      %v281 = vld [vmem:[%s210 + $0x18] sm:$0xe]
      %v282 = vld [vmem:[%s210 + $0x48] sm:$0x3]
      %v283 = vld [vmem:[%s210 + $0x18] sm:$0xc]
      %v296 = vunpack.c.l.b16 %v246
      %v297 = vunpack.c.l.b16 %v247
      %v298 = vunpack.c.l.b16 %v248
      %v299 = vunpack.c.l.b16 %v249
      %v300 = vunpack.c.l.b16 %v250
      %v301 = vunpack.c.l.b16 %v251
      %v302 = vunpack.c.l.b16 %v252
      %v303 = vunpack.c.l.b16 %v253
      %v304 = vunpack.c.l.b16 %v254
      %v305 = vunpack.c.l.b16 %v255
      %v306 = vunpack.c.l.b16 %v256
      %v307 = vunpack.c.l.b16 %v257
      %v308 = vpack.c.b16 %v297, %v296
      %v309 = vpack.c.b16 %v299, %v298
      %v310 = vpack.c.b16 %v301, %v300
      %v311 = vpack.c.b16 %v303, %v302
      %v312 = vpack.c.b16 %v305, %v304
      %v313 = vpack.c.b16 %v307, %v306
      %v315 = vunpack.c.l.b16 %v258
      %v316 = vpack.c.b16 %v315, %v315
      %vm317 = vsmask.f32 7424
      %v319 = vshrl.u32 %v308, 16
      %v321 = vshll.u32 %v308, 16
      %v323 = vrot.slane %v321, 1
      %v324 = vor.u32 %v319, %v323
      %v326 = vshll.u32 %v309, 16
      %v328 = vrot.slane %v326, 1
      %v329 = vsel %vm317, %v324, %v328
      %v330 = vshrl.u32 %v309, 16
      %v332 = vor.u32 %v330, %v328
      %v334 = vshll.u32 %v310, 16
      %v336 = vrot.slane %v334, 1
      %v337 = vsel %vm317, %v332, %v336
      %v338 = vshrl.u32 %v310, 16
      %v340 = vor.u32 %v338, %v336
      %v342 = vshll.u32 %v311, 16
      %v344 = vrot.slane %v342, 1
      %v345 = vsel %vm317, %v340, %v344
      %v346 = vshrl.u32 %v311, 16
      %v348 = vor.u32 %v346, %v344
      %v350 = vshll.u32 %v312, 16
      %v352 = vrot.slane %v350, 1
      %v353 = vsel %vm317, %v348, %v352
      %v354 = vshrl.u32 %v312, 16
      %v356 = vor.u32 %v354, %v352
      %v358 = vshll.u32 %v313, 16
      %v360 = vrot.slane %v358, 1
      %v361 = vsel %vm317, %v356, %v360
      %v362 = vshrl.u32 %v313, 16
      %v364 = vor.u32 %v362, %v360
      %v366 = vshll.u32 %v316, 16
      %v368 = vrot.slane %v366, 1
      %v369 = vsel %vm317, %v364, %v368
      %370 = vrot.lane.b32.xlu0 %v329, 2
      %v371 = vpop.permute.xlu0 %370
      %372 = vrot.lane.b32.xlu0 %v337, 2
      %v373 = vpop.permute.xlu0 %372
      %374 = vrot.lane.b32.xlu0 %v345, 2
      %v375 = vpop.permute.xlu0 %374
      %376 = vrot.lane.b32.xlu0 %v353, 2
      %v377 = vpop.permute.xlu0 %376
      %378 = vrot.lane.b32.xlu0 %v361, 2
      %v379 = vpop.permute.xlu0 %378
      %380 = vrot.lane.b32.xlu0 %v369, 2
      %v381 = vpop.permute.xlu0 %380
      %v383 = vunpack.c.l.b16 %v259
      %v384 = vpack.c.b16 %v297, %v383
      %vm385 = vcmask 1046528
      %v386 = vrot.slane %v384, 1
      %v387 = vrot.slane %v309, 1
      %v388 = vsel %vm385, %v386, %v387
      %v389 = vrot.slane %v310, 1
      %v390 = vsel %vm385, %v387, %v389
      %v391 = vrot.slane %v311, 1
      %v392 = vsel %vm385, %v389, %v391
      %v393 = vrot.slane %v312, 1
      %v394 = vsel %vm385, %v391, %v393
      %v395 = vrot.slane %v313, 1
      %v396 = vsel %vm385, %v393, %v395
      %v397 = vrot.slane %v316, 1
      %v398 = vsel %vm385, %v395, %v397
      %399 = vrot.lane.b32.xlu0 %v388, 4
      %v400 = vpop.permute.xlu0 %399
      %401 = vrot.lane.b32.xlu0 %v390, 4
      %v402 = vpop.permute.xlu0 %401
      %403 = vrot.lane.b32.xlu0 %v392, 4
      %v404 = vpop.permute.xlu0 %403
      %405 = vrot.lane.b32.xlu0 %v394, 4
      %v406 = vpop.permute.xlu0 %405
      %407 = vrot.lane.b32.xlu0 %v396, 4
      %v408 = vpop.permute.xlu0 %407
      %409 = vrot.lane.b32.xlu0 %v398, 4
      %v410 = vpop.permute.xlu0 %409
      %v412 = vunpack.c.l.b16 %v260
      %v413 = vpack.c.b16 %v412, %v412
      %vm414 = vsmask.f32 6400
      %v416 = vshrl.u32 %v384, 16
      %v418 = vrot.slane %v416, 1
      %v419 = vshll.u32 %v384, 16
      %v421 = vrot.slane %v419, 2
      %v422 = vor.u32 %v418, %v421
      %v423 = vrot.slane %v330, 1
      %v424 = vrot.slane %v326, 2
      %v425 = vor.u32 %v423, %v424
      %v426 = vsel %vm414, %v422, %v425
      %v427 = vrot.slane %v338, 1
      %v428 = vrot.slane %v334, 2
      %v429 = vor.u32 %v427, %v428
      %v430 = vsel %vm414, %v425, %v429
      %v431 = vrot.slane %v346, 1
      %v432 = vrot.slane %v342, 2
      %v433 = vor.u32 %v431, %v432
      %v434 = vsel %vm414, %v429, %v433
      %v435 = vrot.slane %v354, 1
      %v436 = vrot.slane %v350, 2
      %v437 = vor.u32 %v435, %v436
      %v438 = vsel %vm414, %v433, %v437
      %v439 = vrot.slane %v362, 1
      %v440 = vrot.slane %v358, 2
      %v441 = vor.u32 %v439, %v440
      %v442 = vsel %vm414, %v437, %v441
      %v444 = vshrl.u32 %v413, 16
      %v446 = vrot.slane %v444, 1
      %v447 = vshll.u32 %v413, 16
      %v449 = vrot.slane %v447, 2
      %v450 = vor.u32 %v446, %v449
      %v451 = vsel %vm414, %v441, %v450
      %452 = vrot.lane.b32.xlu0 %v426, 6
      %v453 = vpop.permute.xlu0 %452
      %454 = vrot.lane.b32.xlu0 %v430, 6
      %v455 = vpop.permute.xlu0 %454
      %456 = vrot.lane.b32.xlu0 %v434, 6
      %v457 = vpop.permute.xlu0 %456
      %458 = vrot.lane.b32.xlu0 %v438, 6
      %v459 = vpop.permute.xlu0 %458
      %460 = vrot.lane.b32.xlu0 %v442, 6
      %v461 = vpop.permute.xlu0 %460
      %462 = vrot.lane.b32.xlu0 %v451, 6
      %v463 = vpop.permute.xlu0 %462
      %v465 = vunpack.c.l.b16 %v261
      %v466 = vpack.c.b16 %v297, %v465
      %vm467 = vcmask 1045504
      %v468 = vrot.slane %v466, 2
      %v469 = vrot.slane %v309, 2
      %v470 = vsel %vm467, %v468, %v469
      %v471 = vrot.slane %v310, 2
      %v472 = vsel %vm467, %v469, %v471
      %v473 = vrot.slane %v311, 2
      %v474 = vsel %vm467, %v471, %v473
      %v475 = vrot.slane %v312, 2
      %v476 = vsel %vm467, %v473, %v475
      %v477 = vrot.slane %v313, 2
      %v478 = vsel %vm467, %v475, %v477
      %v479 = vrot.slane %v413, 2
      %v480 = vsel %vm467, %v477, %v479
      %481 = vrot.lane.b32.xlu0 %v470, 8
      %v482 = vpop.permute.xlu0 %481
      %483 = vrot.lane.b32.xlu0 %v472, 8
      %v484 = vpop.permute.xlu0 %483
      %485 = vrot.lane.b32.xlu0 %v474, 8
      %v486 = vpop.permute.xlu0 %485
      %487 = vrot.lane.b32.xlu0 %v476, 8
      %v488 = vpop.permute.xlu0 %487
      %489 = vrot.lane.b32.xlu0 %v478, 8
      %v490 = vpop.permute.xlu0 %489
      %491 = vrot.lane.b32.xlu0 %v480, 8
      %v492 = vpop.permute.xlu0 %491
      %v496 = vunpack.c.l.b16 %v262
      %v497 = vunpack.c.l.b16 %v263
      %v498 = vunpack.c.l.b16 %v264
      %v499 = vpack.c.b16 %v298, %v496
      %v500 = vpack.c.b16 %v300, %v299
      %v501 = vpack.c.b16 %v302, %v301
      %v502 = vpack.c.b16 %v304, %v303
      %v503 = vpack.c.b16 %v306, %v305
      %v504 = vpack.c.b16 %v497, %v307
      %v505 = vpack.c.b16 %v498, %v498
      %v506 = vrot.slane %v499, 2
      %v507 = vrot.slane %v500, 2
      %v508 = vsel %vm467, %v506, %v507
      %v509 = vrot.slane %v501, 2
      %v510 = vsel %vm467, %v507, %v509
      %v511 = vrot.slane %v502, 2
      %v512 = vsel %vm467, %v509, %v511
      %v513 = vrot.slane %v503, 2
      %v514 = vsel %vm467, %v511, %v513
      %v515 = vrot.slane %v504, 2
      %v516 = vsel %vm467, %v513, %v515
      %v517 = vrot.slane %v505, 2
      %v518 = vsel %vm467, %v515, %v517
      %519 = vrot.lane.b32.xlu0 %v508, 10
      %v520 = vpop.permute.xlu0 %519
      %521 = vrot.lane.b32.xlu0 %v510, 10
      %v522 = vpop.permute.xlu0 %521
      %523 = vrot.lane.b32.xlu0 %v512, 10
      %v524 = vpop.permute.xlu0 %523
      %525 = vrot.lane.b32.xlu0 %v514, 10
      %v526 = vpop.permute.xlu0 %525
      %527 = vrot.lane.b32.xlu0 %v516, 10
      %v528 = vpop.permute.xlu0 %527
      %529 = vrot.lane.b32.xlu0 %v518, 10
      %v530 = vpop.permute.xlu0 %529
      %v532 = vunpack.c.l.b16 %v265
      %v533 = vpack.c.b16 %v532, %v532
      %vm534 = vsmask.f32 5376
      %v536 = vshrl.u32 %v499, 16
      %v538 = vrot.slane %v536, 2
      %v539 = vshll.u32 %v499, 16
      %v541 = vrot.slane %v539, 3
      %v542 = vor.u32 %v538, %v541
      %v544 = vshrl.u32 %v500, 16
      %v546 = vrot.slane %v544, 2
      %v547 = vshll.u32 %v500, 16
      %v549 = vrot.slane %v547, 3
      %v550 = vor.u32 %v546, %v549
      %v551 = vsel %vm534, %v542, %v550
      %v553 = vshrl.u32 %v501, 16
      %v555 = vrot.slane %v553, 2
      %v556 = vshll.u32 %v501, 16
      %v558 = vrot.slane %v556, 3
      %v559 = vor.u32 %v555, %v558
      %v560 = vsel %vm534, %v550, %v559
      %v562 = vshrl.u32 %v502, 16
      %v564 = vrot.slane %v562, 2
      %v565 = vshll.u32 %v502, 16
      %v567 = vrot.slane %v565, 3
      %v568 = vor.u32 %v564, %v567
      %v569 = vsel %vm534, %v559, %v568
      %v571 = vshrl.u32 %v503, 16
      %v573 = vrot.slane %v571, 2
      %v574 = vshll.u32 %v503, 16
      %v576 = vrot.slane %v574, 3
      %v577 = vor.u32 %v573, %v576
      %v578 = vsel %vm534, %v568, %v577
      %v580 = vshrl.u32 %v504, 16
      %v582 = vrot.slane %v580, 2
      %v583 = vshll.u32 %v504, 16
      %v585 = vrot.slane %v583, 3
      %v586 = vor.u32 %v582, %v585
      %v587 = vsel %vm534, %v577, %v586
      %v589 = vshrl.u32 %v533, 16
      %v591 = vrot.slane %v589, 2
      %v592 = vshll.u32 %v533, 16
      %v594 = vrot.slane %v592, 3
      %v595 = vor.u32 %v591, %v594
      %v596 = vsel %vm534, %v586, %v595
      %597 = vrot.lane.b32.xlu0 %v551, 12
      %v598 = vpop.permute.xlu0 %597
      %599 = vrot.lane.b32.xlu0 %v560, 12
      %v600 = vpop.permute.xlu0 %599
      %601 = vrot.lane.b32.xlu0 %v569, 12
      %v602 = vpop.permute.xlu0 %601
      %603 = vrot.lane.b32.xlu0 %v578, 12
      %v604 = vpop.permute.xlu0 %603
      %605 = vrot.lane.b32.xlu0 %v587, 12
      %v606 = vpop.permute.xlu0 %605
      %607 = vrot.lane.b32.xlu0 %v596, 12
      %v608 = vpop.permute.xlu0 %607
      %v610 = vunpack.c.l.b16 %v266
      %v611 = vpack.c.b16 %v298, %v610
      %vm612 = vcmask 1044480
      %v613 = vrot.slane %v611, 3
      %v614 = vrot.slane %v500, 3
      %v615 = vsel %vm612, %v613, %v614
      %v616 = vrot.slane %v501, 3
      %v617 = vsel %vm612, %v614, %v616
      %v618 = vrot.slane %v502, 3
      %v619 = vsel %vm612, %v616, %v618
      %v620 = vrot.slane %v503, 3
      %v621 = vsel %vm612, %v618, %v620
      %v622 = vrot.slane %v504, 3
      %v623 = vsel %vm612, %v620, %v622
      %v624 = vrot.slane %v533, 3
      %v625 = vsel %vm612, %v622, %v624
      %626 = vrot.lane.b32.xlu0 %v615, 14
      %v627 = vpop.permute.xlu0 %626
      %628 = vrot.lane.b32.xlu0 %v617, 14
      %v629 = vpop.permute.xlu0 %628
      %630 = vrot.lane.b32.xlu0 %v619, 14
      %v631 = vpop.permute.xlu0 %630
      %632 = vrot.lane.b32.xlu0 %v621, 14
      %v633 = vpop.permute.xlu0 %632
      %634 = vrot.lane.b32.xlu0 %v623, 14
      %v635 = vpop.permute.xlu0 %634
      %636 = vrot.lane.b32.xlu0 %v625, 14
      %v637 = vpop.permute.xlu0 %636
      %v639 = vunpack.c.l.b16 %v267
      %v640 = vpack.c.b16 %v639, %v639
      %vm641 = vsmask.f32 4352
      %v643 = vshrl.u32 %v611, 16
      %v645 = vrot.slane %v643, 3
      %v646 = vshll.u32 %v611, 16
      %v648 = vrot.slane %v646, 4
      %v649 = vor.u32 %v645, %v648
      %v650 = vrot.slane %v544, 3
      %v651 = vrot.slane %v547, 4
      %v652 = vor.u32 %v650, %v651
      %v653 = vsel %vm641, %v649, %v652
      %v654 = vrot.slane %v553, 3
      %v655 = vrot.slane %v556, 4
      %v656 = vor.u32 %v654, %v655
      %v657 = vsel %vm641, %v652, %v656
      %v658 = vrot.slane %v562, 3
      %v659 = vrot.slane %v565, 4
      %v660 = vor.u32 %v658, %v659
      %v661 = vsel %vm641, %v656, %v660
      %v662 = vrot.slane %v571, 3
      %v663 = vrot.slane %v574, 4
      %v664 = vor.u32 %v662, %v663
      %v665 = vsel %vm641, %v660, %v664
      %v666 = vrot.slane %v580, 3
      %v667 = vrot.slane %v583, 4
      %v668 = vor.u32 %v666, %v667
      %v669 = vsel %vm641, %v664, %v668
      %v671 = vshrl.u32 %v640, 16
      %v673 = vrot.slane %v671, 3
      %v674 = vshll.u32 %v640, 16
      %v676 = vrot.slane %v674, 4
      %v677 = vor.u32 %v673, %v676
      %v678 = vsel %vm641, %v668, %v677
      %679 = vrot.lane.b32.xlu0 %v653, 16
      %v680 = vpop.permute.xlu0 %679
      %681 = vrot.lane.b32.xlu0 %v657, 16
      %v682 = vpop.permute.xlu0 %681
      %683 = vrot.lane.b32.xlu0 %v661, 16
      %v684 = vpop.permute.xlu0 %683
      %685 = vrot.lane.b32.xlu0 %v665, 16
      %v686 = vpop.permute.xlu0 %685
      %687 = vrot.lane.b32.xlu0 %v669, 16
      %v688 = vpop.permute.xlu0 %687
      %689 = vrot.lane.b32.xlu0 %v678, 16
      %v690 = vpop.permute.xlu0 %689
      %v691 = vpack.c.b16 %v639, %v497
      %692 = vrot.lane.b32.xlu0 %v309, 18
      %v693 = vpop.permute.xlu0 %692
      %694 = vrot.lane.b32.xlu0 %v310, 18
      %v695 = vpop.permute.xlu0 %694
      %696 = vrot.lane.b32.xlu0 %v311, 18
      %v697 = vpop.permute.xlu0 %696
      %698 = vrot.lane.b32.xlu0 %v312, 18
      %v699 = vpop.permute.xlu0 %698
      %700 = vrot.lane.b32.xlu0 %v313, 18
      %v701 = vpop.permute.xlu0 %700
      %702 = vrot.lane.b32.xlu0 %v691, 18
      %v703 = vpop.permute.xlu0 %702
      %v705 = vunpack.c.l.b16 %v268
      %v706 = vpack.c.b16 %v705, %v639
      %707 = vrot.lane.b32.xlu0 %v500, 20
      %v708 = vpop.permute.xlu0 %707
      %709 = vrot.lane.b32.xlu0 %v501, 20
      %v710 = vpop.permute.xlu0 %709
      %711 = vrot.lane.b32.xlu0 %v502, 20
      %v712 = vpop.permute.xlu0 %711
      %713 = vrot.lane.b32.xlu0 %v503, 20
      %v714 = vpop.permute.xlu0 %713
      %715 = vrot.lane.b32.xlu0 %v504, 20
      %v716 = vpop.permute.xlu0 %715
      %717 = vrot.lane.b32.xlu0 %v706, 20
      %v718 = vpop.permute.xlu0 %717
      %v720 = vunpack.c.l.b16 %v269
      %v721 = vpack.c.b16 %v720, %v720
      %v722 = vrot.slane %v547, 1
      %v723 = vor.u32 %v544, %v722
      %v724 = vrot.slane %v556, 1
      %v725 = vsel %vm317, %v723, %v724
      %v726 = vor.u32 %v553, %v724
      %v727 = vrot.slane %v565, 1
      %v728 = vsel %vm317, %v726, %v727
      %v729 = vor.u32 %v562, %v727
      %v730 = vrot.slane %v574, 1
      %v731 = vsel %vm317, %v729, %v730
      %v732 = vor.u32 %v571, %v730
      %v733 = vrot.slane %v583, 1
      %v734 = vsel %vm317, %v732, %v733
      %v735 = vor.u32 %v580, %v733
      %v737 = vshll.u32 %v706, 16
      %v739 = vrot.slane %v737, 1
      %v740 = vsel %vm317, %v735, %v739
      %v741 = vshrl.u32 %v706, 16
      %v743 = vor.u32 %v741, %v739
      %v745 = vshll.u32 %v721, 16
      %v747 = vrot.slane %v745, 1
      %v748 = vsel %vm317, %v743, %v747
      %749 = vrot.lane.b32.xlu0 %v725, 22
      %v750 = vpop.permute.xlu0 %749
      %751 = vrot.lane.b32.xlu0 %v728, 22
      %v752 = vpop.permute.xlu0 %751
      %753 = vrot.lane.b32.xlu0 %v731, 22
      %v754 = vpop.permute.xlu0 %753
      %755 = vrot.lane.b32.xlu0 %v734, 22
      %v756 = vpop.permute.xlu0 %755
      %757 = vrot.lane.b32.xlu0 %v740, 22
      %v758 = vpop.permute.xlu0 %757
      %759 = vrot.lane.b32.xlu0 %v748, 22
      %v760 = vpop.permute.xlu0 %759
      %v762 = vunpack.c.l.b16 %v270
      %v763 = vpack.c.b16 %v300, %v762
      %v764 = vrot.slane %v763, 1
      %v765 = vrot.slane %v501, 1
      %v766 = vsel %vm385, %v764, %v765
      %v767 = vrot.slane %v502, 1
      %v768 = vsel %vm385, %v765, %v767
      %v769 = vrot.slane %v503, 1
      %v770 = vsel %vm385, %v767, %v769
      %v771 = vrot.slane %v504, 1
      %v772 = vsel %vm385, %v769, %v771
      %v773 = vrot.slane %v706, 1
      %v774 = vsel %vm385, %v771, %v773
      %v775 = vrot.slane %v721, 1
      %v776 = vsel %vm385, %v773, %v775
      %777 = vrot.lane.b32.xlu0 %v766, 24
      %v778 = vpop.permute.xlu0 %777
      %779 = vrot.lane.b32.xlu0 %v768, 24
      %v780 = vpop.permute.xlu0 %779
      %781 = vrot.lane.b32.xlu0 %v770, 24
      %v782 = vpop.permute.xlu0 %781
      %783 = vrot.lane.b32.xlu0 %v772, 24
      %v784 = vpop.permute.xlu0 %783
      %785 = vrot.lane.b32.xlu0 %v774, 24
      %v786 = vpop.permute.xlu0 %785
      %787 = vrot.lane.b32.xlu0 %v776, 24
      %v788 = vpop.permute.xlu0 %787
      %v790 = vunpack.c.l.b16 %v271
      %v791 = vpack.c.b16 %v790, %v790
      %v793 = vshrl.u32 %v763, 16
      %v795 = vrot.slane %v793, 1
      %v796 = vshll.u32 %v763, 16
      %v798 = vrot.slane %v796, 2
      %v799 = vor.u32 %v795, %v798
      %v800 = vrot.slane %v553, 1
      %v801 = vrot.slane %v556, 2
      %v802 = vor.u32 %v800, %v801
      %v803 = vsel %vm414, %v799, %v802
      %v804 = vrot.slane %v562, 1
      %v805 = vrot.slane %v565, 2
      %v806 = vor.u32 %v804, %v805
      %v807 = vsel %vm414, %v802, %v806
      %v808 = vrot.slane %v571, 1
      %v809 = vrot.slane %v574, 2
      %v810 = vor.u32 %v808, %v809
      %v811 = vsel %vm414, %v806, %v810
      %v812 = vrot.slane %v580, 1
      %v813 = vrot.slane %v583, 2
      %v814 = vor.u32 %v812, %v813
      %v815 = vsel %vm414, %v810, %v814
      %v816 = vrot.slane %v741, 1
      %v817 = vrot.slane %v737, 2
      %v818 = vor.u32 %v816, %v817
      %v819 = vsel %vm414, %v814, %v818
      %v821 = vshrl.u32 %v791, 16
      %v823 = vrot.slane %v821, 1
      %v824 = vshll.u32 %v791, 16
      %v826 = vrot.slane %v824, 2
      %v827 = vor.u32 %v823, %v826
      %v828 = vsel %vm414, %v818, %v827
      %829 = vrot.lane.b32.xlu0 %v803, 26
      %v830 = vpop.permute.xlu0 %829
      %831 = vrot.lane.b32.xlu0 %v807, 26
      %v832 = vpop.permute.xlu0 %831
      %833 = vrot.lane.b32.xlu0 %v811, 26
      %v834 = vpop.permute.xlu0 %833
      %835 = vrot.lane.b32.xlu0 %v815, 26
      %v836 = vpop.permute.xlu0 %835
      %837 = vrot.lane.b32.xlu0 %v819, 26
      %v838 = vpop.permute.xlu0 %837
      %839 = vrot.lane.b32.xlu0 %v828, 26
      %v840 = vpop.permute.xlu0 %839
      %v842 = vunpack.c.l.b16 %v272
      %v843 = vpack.c.b16 %v300, %v842
      %v844 = vrot.slane %v843, 2
      %v845 = vsel %vm467, %v844, %v509
      %v846 = vrot.slane %v706, 2
      %v847 = vsel %vm467, %v515, %v846
      %v848 = vrot.slane %v791, 2
      %v849 = vsel %vm467, %v846, %v848
      %850 = vrot.lane.b32.xlu0 %v845, 28
      %v851 = vpop.permute.xlu0 %850
      %852 = vrot.lane.b32.xlu0 %v512, 28
      %v853 = vpop.permute.xlu0 %852
      %854 = vrot.lane.b32.xlu0 %v514, 28
      %v855 = vpop.permute.xlu0 %854
      %856 = vrot.lane.b32.xlu0 %v516, 28
      %v857 = vpop.permute.xlu0 %856
      %858 = vrot.lane.b32.xlu0 %v847, 28
      %v859 = vpop.permute.xlu0 %858
      %860 = vrot.lane.b32.xlu0 %v849, 28
      %v861 = vpop.permute.xlu0 %860
      %v865 = vunpack.c.l.b16 %v273
      %v866 = vunpack.c.l.b16 %v274
      %v867 = vunpack.c.l.b16 %v275
      %v868 = vpack.c.b16 %v301, %v865
      %v869 = vpack.c.b16 %v866, %v705
      %v870 = vpack.c.b16 %v867, %v867
      %v871 = vrot.slane %v868, 2
      %v872 = vsel %vm467, %v871, %v473
      %v873 = vrot.slane %v691, 2
      %v874 = vsel %vm467, %v477, %v873
      %v875 = vrot.slane %v869, 2
      %v876 = vsel %vm467, %v873, %v875
      %v877 = vrot.slane %v870, 2
      %v878 = vsel %vm467, %v875, %v877
      %879 = vrot.lane.b32.xlu0 %v872, 30
      %v880 = vpop.permute.xlu0 %879
      %881 = vrot.lane.b32.xlu0 %v476, 30
      %v882 = vpop.permute.xlu0 %881
      %883 = vrot.lane.b32.xlu0 %v478, 30
      %v884 = vpop.permute.xlu0 %883
      %885 = vrot.lane.b32.xlu0 %v874, 30
      %v886 = vpop.permute.xlu0 %885
      %887 = vrot.lane.b32.xlu0 %v876, 30
      %v888 = vpop.permute.xlu0 %887
      %889 = vrot.lane.b32.xlu0 %v878, 30
      %v890 = vpop.permute.xlu0 %889
      %vm891 = vcmask 15360
      %v893 = vsel %vm891, %v308, %v371
      %v895 = vsel %vm891, %v309, %v373
      %v897 = vsel %vm891, %v310, %v375
      %v899 = vsel %vm891, %v311, %v377
      %v901 = vsel %vm891, %v312, %v379
      %v903 = vsel %vm891, %v313, %v381
      %vm904 = vcmask 31744
      %v906 = vsel %vm904, %v893, %v400
      %v908 = vsel %vm904, %v895, %v402
      %v910 = vsel %vm904, %v897, %v404
      %v912 = vsel %vm904, %v899, %v406
      %v914 = vsel %vm904, %v901, %v408
      %v916 = vsel %vm904, %v903, %v410
      %vm917 = vcmask 48128
      %v919 = vsel %vm917, %v906, %v453
      %v921 = vsel %vm917, %v908, %v455
      %v923 = vsel %vm917, %v910, %v457
      %v925 = vsel %vm917, %v912, %v459
      %v927 = vsel %vm917, %v914, %v461
      %v929 = vsel %vm917, %v916, %v463
      %vm930 = vcmask 64512
      %v932 = vsel %vm930, %v919, %v482
      %v934 = vsel %vm930, %v921, %v484
      %v936 = vsel %vm930, %v923, %v486
      %v938 = vsel %vm930, %v925, %v488
      %v940 = vsel %vm930, %v927, %v490
      %v942 = vsel %vm930, %v929, %v492
      %vm943 = vcmask 80896
      %v945 = vsel %vm943, %v932, %v520
      %v947 = vsel %vm943, %v934, %v522
      %v949 = vsel %vm943, %v936, %v524
      %v951 = vsel %vm943, %v938, %v526
      %v953 = vsel %vm943, %v940, %v528
      %v955 = vsel %vm943, %v942, %v530
      %vm956 = vcmask 97280
      %v958 = vsel %vm956, %v945, %v598
      %v960 = vsel %vm956, %v947, %v600
      %v962 = vsel %vm956, %v949, %v602
      %v964 = vsel %vm956, %v951, %v604
      %v966 = vsel %vm956, %v953, %v606
      %v968 = vsel %vm956, %v955, %v608
      %vm969 = vcmask 113664
      %v971 = vsel %vm969, %v958, %v627
      %v973 = vsel %vm969, %v960, %v629
      %v975 = vsel %vm969, %v962, %v631
      %v977 = vsel %vm969, %v964, %v633
      %v979 = vsel %vm969, %v966, %v635
      %v981 = vsel %vm969, %v968, %v637
      %vm982 = vcmask 130048
      %v984 = vsel %vm982, %v971, %v680
      %v986 = vsel %vm982, %v973, %v682
      %v988 = vsel %vm982, %v975, %v684
      %v990 = vsel %vm982, %v977, %v686
      %v992 = vsel %vm982, %v979, %v688
      %v994 = vsel %vm982, %v981, %v690
      %vm995 = vcmask 146432
      %v997 = vsel %vm995, %v984, %v693
      %v999 = vsel %vm995, %v986, %v695
      %v1001 = vsel %vm995, %v988, %v697
      %v1003 = vsel %vm995, %v990, %v699
      %v1005 = vsel %vm995, %v992, %v701
      %v1007 = vsel %vm995, %v994, %v703
      %vm1008 = vcmask 162816
      %v1010 = vsel %vm1008, %v997, %v708
      %v1012 = vsel %vm1008, %v999, %v710
      %v1014 = vsel %vm1008, %v1001, %v712
      %v1016 = vsel %vm1008, %v1003, %v714
      %v1018 = vsel %vm1008, %v1005, %v716
      %v1020 = vsel %vm1008, %v1007, %v718
      %vm1021 = vcmask 179200
      %v1023 = vsel %vm1021, %v1010, %v750
      %v1025 = vsel %vm1021, %v1012, %v752
      %v1027 = vsel %vm1021, %v1014, %v754
      %v1029 = vsel %vm1021, %v1016, %v756
      %v1031 = vsel %vm1021, %v1018, %v758
      %v1033 = vsel %vm1021, %v1020, %v760
      %vm1034 = vcmask 195584
      %v1036 = vsel %vm1034, %v1023, %v778
      %v1038 = vsel %vm1034, %v1025, %v780
      %v1040 = vsel %vm1034, %v1027, %v782
      %v1042 = vsel %vm1034, %v1029, %v784
      %v1044 = vsel %vm1034, %v1031, %v786
      %v1046 = vsel %vm1034, %v1033, %v788
      %vm1047 = vcmask 211968
      %v1049 = vsel %vm1047, %v1036, %v830
      %v1051 = vsel %vm1047, %v1038, %v832
      %v1053 = vsel %vm1047, %v1040, %v834
      %v1055 = vsel %vm1047, %v1042, %v836
      %v1057 = vsel %vm1047, %v1044, %v838
      %v1059 = vsel %vm1047, %v1046, %v840
      %vm1060 = vcmask 228352
      %v1062 = vsel %vm1060, %v1049, %v851
      %v1064 = vsel %vm1060, %v1051, %v853
      %v1066 = vsel %vm1060, %v1053, %v855
      %v1068 = vsel %vm1060, %v1055, %v857
      %v1070 = vsel %vm1060, %v1057, %v859
      %v1072 = vsel %vm1060, %v1059, %v861
      %vm1073 = vcmask 244736
      %v1075 = vsel %vm1073, %v1062, %v880
      %v1077 = vsel %vm1073, %v1064, %v882
      %v1079 = vsel %vm1073, %v1066, %v884
      %v1081 = vsel %vm1073, %v1068, %v886
      %v1083 = vsel %vm1073, %v1070, %v888
      %v1085 = vsel %vm1073, %v1072, %v890
      %v1087 = vunpack.c.l.b16 %v276
      %v1088 = vpack.c.b16 %v1087, %v1087
      %v1090 = vunpack.c.l.b16 %v277
      %v1091 = vpack.c.b16 %v301, %v1090
      %v1093 = vshrl.u32 %v1091, 16
      %v1095 = vshll.u32 %v1091, 16
      %v1097 = vrot.slane %v1095, 1
      %v1098 = vor.u32 %v1093, %v1097
      %v1099 = vsel %vm317, %v1098, %v344
      %v1101 = vshll.u32 %v691, 16
      %v1103 = vrot.slane %v1101, 1
      %v1104 = vsel %vm317, %v364, %v1103
      %v1105 = vshrl.u32 %v691, 16
      %v1107 = vor.u32 %v1105, %v1103
      %v1109 = vshll.u32 %v869, 16
      %v1111 = vrot.slane %v1109, 1
      %v1112 = vsel %vm317, %v1107, %v1111
      %v1113 = vshrl.u32 %v869, 16
      %v1115 = vor.u32 %v1113, %v1111
      %v1117 = vshll.u32 %v1088, 16
      %v1119 = vrot.slane %v1117, 1
      %v1120 = vsel %vm317, %v1115, %v1119
      %v1121 = vshrl.u32 %v1088, 16
      %v1123 = vor.u32 %v1121, %v1119
      %1124 = vrot.lane.b32.xlu0 %v1099, 2
      %v1125 = vpop.permute.xlu0 %1124
      %1126 = vrot.lane.b32.xlu0 %v1104, 2
      %v1127 = vpop.permute.xlu0 %1126
      %1128 = vrot.lane.b32.xlu0 %v1112, 2
      %v1129 = vpop.permute.xlu0 %1128
      %1130 = vrot.lane.b32.xlu0 %v1120, 2
      %v1131 = vpop.permute.xlu0 %1130
      %1132 = vrot.lane.b32.xlu0 %v1123, 2
      %v1133 = vpop.permute.xlu0 %1132
      %v1135 = vunpack.c.l.b16 %v278
      %v1136 = vpack.c.b16 %v1135, %v1135
      %v1137 = vrot.slane %v1091, 1
      %v1138 = vsel %vm385, %v1137, %v391
      %v1139 = vrot.slane %v691, 1
      %v1140 = vsel %vm385, %v395, %v1139
      %v1141 = vrot.slane %v869, 1
      %v1142 = vsel %vm385, %v1139, %v1141
      %v1143 = vrot.slane %v1136, 1
      %v1144 = vsel %vm385, %v1141, %v1143
      %1145 = vrot.lane.b32.xlu0 %v1138, 4
      %v1146 = vpop.permute.xlu0 %1145
      %1147 = vrot.lane.b32.xlu0 %v1140, 4
      %v1148 = vpop.permute.xlu0 %1147
      %1149 = vrot.lane.b32.xlu0 %v1142, 4
      %v1150 = vpop.permute.xlu0 %1149
      %1151 = vrot.lane.b32.xlu0 %v1144, 4
      %v1152 = vpop.permute.xlu0 %1151
      %1153 = vrot.lane.b32.xlu0 %v1143, 4
      %v1154 = vpop.permute.xlu0 %1153
      %v1155 = vpack.c.b16 %v1135, %v866
      %vm1156 = vsmask.f32 2304
      %v1157 = vrot.slane %v553, 5
      %v1158 = vrot.slane %v556, 6
      %v1159 = vor.u32 %v1157, %v1158
      %v1160 = vrot.slane %v562, 5
      %v1161 = vrot.slane %v565, 6
      %v1162 = vor.u32 %v1160, %v1161
      %v1163 = vsel %vm1156, %v1159, %v1162
      %v1164 = vrot.slane %v571, 5
      %v1165 = vrot.slane %v574, 6
      %v1166 = vor.u32 %v1164, %v1165
      %v1167 = vsel %vm1156, %v1162, %v1166
      %v1168 = vrot.slane %v580, 5
      %v1169 = vrot.slane %v583, 6
      %v1170 = vor.u32 %v1168, %v1169
      %v1171 = vsel %vm1156, %v1166, %v1170
      %v1172 = vrot.slane %v741, 5
      %v1173 = vrot.slane %v737, 6
      %v1174 = vor.u32 %v1172, %v1173
      %v1175 = vsel %vm1156, %v1170, %v1174
      %v1177 = vshrl.u32 %v1155, 16
      %v1179 = vrot.slane %v1177, 5
      %v1180 = vshll.u32 %v1155, 16
      %v1182 = vrot.slane %v1180, 6
      %v1183 = vor.u32 %v1179, %v1182
      %v1184 = vsel %vm1156, %v1174, %v1183
      %1185 = vrot.lane.b32.xlu0 %v1159, 6
      %v1186 = vpop.permute.xlu0 %1185
      %1187 = vrot.lane.b32.xlu0 %v1163, 6
      %v1188 = vpop.permute.xlu0 %1187
      %1189 = vrot.lane.b32.xlu0 %v1167, 6
      %v1190 = vpop.permute.xlu0 %1189
      %1191 = vrot.lane.b32.xlu0 %v1171, 6
      %v1192 = vpop.permute.xlu0 %1191
      %1193 = vrot.lane.b32.xlu0 %v1175, 6
      %v1194 = vpop.permute.xlu0 %1193
      %1195 = vrot.lane.b32.xlu0 %v1184, 6
      %v1196 = vpop.permute.xlu0 %1195
      %1197 = vrot.lane.b32.xlu0 %v1183, 6
      %v1198 = vpop.permute.xlu0 %1197
      %v1200 = vunpack.c.l.b16 %v279
      %v1201 = vpack.c.b16 %v1200, %v1135
      %v1202 = vrot.slane %v346, 5
      %v1203 = vrot.slane %v342, 6
      %v1204 = vor.u32 %v1202, %v1203
      %v1205 = vrot.slane %v354, 5
      %v1206 = vrot.slane %v350, 6
      %v1207 = vor.u32 %v1205, %v1206
      %v1208 = vsel %vm1156, %v1204, %v1207
      %v1209 = vrot.slane %v362, 5
      %v1210 = vrot.slane %v358, 6
      %v1211 = vor.u32 %v1209, %v1210
      %v1212 = vsel %vm1156, %v1207, %v1211
      %v1213 = vrot.slane %v1105, 5
      %v1214 = vrot.slane %v1101, 6
      %v1215 = vor.u32 %v1213, %v1214
      %v1216 = vsel %vm1156, %v1211, %v1215
      %v1217 = vrot.slane %v1113, 5
      %v1218 = vrot.slane %v1109, 6
      %v1219 = vor.u32 %v1217, %v1218
      %v1220 = vsel %vm1156, %v1215, %v1219
      %v1222 = vshrl.u32 %v1201, 16
      %v1224 = vrot.slane %v1222, 5
      %v1225 = vshll.u32 %v1201, 16
      %v1227 = vrot.slane %v1225, 6
      %v1228 = vor.u32 %v1224, %v1227
      %v1229 = vsel %vm1156, %v1219, %v1228
      %1230 = vrot.lane.b32.xlu0 %v1204, 8
      %v1231 = vpop.permute.xlu0 %1230
      %1232 = vrot.lane.b32.xlu0 %v1208, 8
      %v1233 = vpop.permute.xlu0 %1232
      %1234 = vrot.lane.b32.xlu0 %v1212, 8
      %v1235 = vpop.permute.xlu0 %1234
      %1236 = vrot.lane.b32.xlu0 %v1216, 8
      %v1237 = vpop.permute.xlu0 %1236
      %1238 = vrot.lane.b32.xlu0 %v1220, 8
      %v1239 = vpop.permute.xlu0 %1238
      %1240 = vrot.lane.b32.xlu0 %v1229, 8
      %v1241 = vpop.permute.xlu0 %1240
      %1242 = vrot.lane.b32.xlu0 %v1228, 8
      %v1243 = vpop.permute.xlu0 %1242
      %v1245 = vunpack.c.l.b16 %v280
      %v1246 = vpack.c.b16 %v1245, %v1245
      %vm1247 = vcmask 1041408
      %v1248 = vrot.slane %v311, 6
      %v1249 = vrot.slane %v312, 6
      %v1250 = vsel %vm1247, %v1248, %v1249
      %v1251 = vrot.slane %v313, 6
      %v1252 = vsel %vm1247, %v1249, %v1251
      %v1253 = vrot.slane %v691, 6
      %v1254 = vsel %vm1247, %v1251, %v1253
      %v1255 = vrot.slane %v869, 6
      %v1256 = vsel %vm1247, %v1253, %v1255
      %v1257 = vrot.slane %v1201, 6
      %v1258 = vsel %vm1247, %v1255, %v1257
      %v1259 = vrot.slane %v1246, 6
      %v1260 = vsel %vm1247, %v1257, %v1259
      %1261 = vrot.lane.b32.xlu0 %v1248, 10
      %v1262 = vpop.permute.xlu0 %1261
      %1263 = vrot.lane.b32.xlu0 %v1250, 10
      %v1264 = vpop.permute.xlu0 %1263
      %1265 = vrot.lane.b32.xlu0 %v1252, 10
      %v1266 = vpop.permute.xlu0 %1265
      %1267 = vrot.lane.b32.xlu0 %v1254, 10
      %v1268 = vpop.permute.xlu0 %1267
      %1269 = vrot.lane.b32.xlu0 %v1256, 10
      %v1270 = vpop.permute.xlu0 %1269
      %1271 = vrot.lane.b32.xlu0 %v1258, 10
      %v1272 = vpop.permute.xlu0 %1271
      %1273 = vrot.lane.b32.xlu0 %v1260, 10
      %v1274 = vpop.permute.xlu0 %1273
      %v1276 = vunpack.c.l.b16 %v281
      %v1277 = vpack.c.b16 %v303, %v1276
      %vm1278 = vsmask.f32 1280
      %v1280 = vshrl.u32 %v1277, 16
      %v1282 = vrot.slane %v1280, 6
      %v1283 = vshll.u32 %v1277, 16
      %v1285 = vrot.slane %v1283, 7
      %v1286 = vor.u32 %v1282, %v1285
      %v1287 = vrot.slane %v354, 6
      %v1288 = vrot.slane %v350, 7
      %v1289 = vor.u32 %v1287, %v1288
      %v1290 = vsel %vm1278, %v1286, %v1289
      %v1291 = vrot.slane %v362, 6
      %v1292 = vrot.slane %v358, 7
      %v1293 = vor.u32 %v1291, %v1292
      %v1294 = vsel %vm1278, %v1289, %v1293
      %v1295 = vrot.slane %v1105, 6
      %v1296 = vrot.slane %v1101, 7
      %v1297 = vor.u32 %v1295, %v1296
      %v1298 = vsel %vm1278, %v1293, %v1297
      %v1299 = vrot.slane %v1113, 6
      %v1300 = vrot.slane %v1109, 7
      %v1301 = vor.u32 %v1299, %v1300
      %v1302 = vsel %vm1278, %v1297, %v1301
      %v1303 = vrot.slane %v1222, 6
      %v1304 = vrot.slane %v1225, 7
      %v1305 = vor.u32 %v1303, %v1304
      %v1306 = vsel %vm1278, %v1301, %v1305
      %v1308 = vshrl.u32 %v1246, 16
      %v1310 = vrot.slane %v1308, 6
      %v1311 = vshll.u32 %v1246, 16
      %v1313 = vrot.slane %v1311, 7
      %v1314 = vor.u32 %v1310, %v1313
      %v1315 = vsel %vm1278, %v1305, %v1314
      %1316 = vrot.lane.b32.xlu0 %v1286, 12
      %v1317 = vpop.permute.xlu0 %1316
      %1318 = vrot.lane.b32.xlu0 %v1290, 12
      %v1319 = vpop.permute.xlu0 %1318
      %1320 = vrot.lane.b32.xlu0 %v1294, 12
      %v1321 = vpop.permute.xlu0 %1320
      %1322 = vrot.lane.b32.xlu0 %v1298, 12
      %v1323 = vpop.permute.xlu0 %1322
      %1324 = vrot.lane.b32.xlu0 %v1302, 12
      %v1325 = vpop.permute.xlu0 %1324
      %1326 = vrot.lane.b32.xlu0 %v1306, 12
      %v1327 = vpop.permute.xlu0 %1326
      %1328 = vrot.lane.b32.xlu0 %v1315, 12
      %v1329 = vpop.permute.xlu0 %1328
      %v1331 = vunpack.c.l.b16 %v282
      %v1332 = vpack.c.b16 %v1331, %v1331
      %vm1333 = vcmask 1040384
      %v1334 = vrot.slane %v1277, 7
      %v1335 = vrot.slane %v312, 7
      %v1336 = vsel %vm1333, %v1334, %v1335
      %v1337 = vrot.slane %v313, 7
      %v1338 = vsel %vm1333, %v1335, %v1337
      %v1339 = vrot.slane %v691, 7
      %v1340 = vsel %vm1333, %v1337, %v1339
      %v1341 = vrot.slane %v869, 7
      %v1342 = vsel %vm1333, %v1339, %v1341
      %v1343 = vrot.slane %v1201, 7
      %v1344 = vsel %vm1333, %v1341, %v1343
      %v1345 = vrot.slane %v1332, 7
      %v1346 = vsel %vm1333, %v1343, %v1345
      %1347 = vrot.lane.b32.xlu0 %v1334, 14
      %v1348 = vpop.permute.xlu0 %1347
      %1349 = vrot.lane.b32.xlu0 %v1336, 14
      %v1350 = vpop.permute.xlu0 %1349
      %1351 = vrot.lane.b32.xlu0 %v1338, 14
      %v1352 = vpop.permute.xlu0 %1351
      %1353 = vrot.lane.b32.xlu0 %v1340, 14
      %v1354 = vpop.permute.xlu0 %1353
      %1355 = vrot.lane.b32.xlu0 %v1342, 14
      %v1356 = vpop.permute.xlu0 %1355
      %1357 = vrot.lane.b32.xlu0 %v1344, 14
      %v1358 = vpop.permute.xlu0 %1357
      %1359 = vrot.lane.b32.xlu0 %v1346, 14
      %v1360 = vpop.permute.xlu0 %1359
      %v1362 = vunpack.c.l.b16 %v283
      %v1363 = vpack.c.b16 %v303, %v1362
      %vm1364 = vsmask.f32 256
      %v1366 = vshrl.u32 %v1363, 16
      %v1368 = vrot.slane %v1366, 7
      %v1369 = vshll.u32 %v1363, 16
      %v1371 = vor.u32 %v1368, %v1369
      %v1372 = vrot.slane %v354, 7
      %v1373 = vor.u32 %v1372, %v350
      %v1374 = vsel %vm1364, %v1368, %v1373
      %v1375 = vrot.slane %v362, 7
      %v1376 = vor.u32 %v1375, %v358
      %v1377 = vsel %vm1364, %v1372, %v1376
      %v1378 = vrot.slane %v1105, 7
      %v1379 = vor.u32 %v1378, %v1101
      %v1380 = vsel %vm1364, %v1375, %v1379
      %v1381 = vrot.slane %v1113, 7
      %v1382 = vor.u32 %v1381, %v1109
      %v1383 = vsel %vm1364, %v1378, %v1382
      %v1384 = vrot.slane %v1222, 7
      %v1385 = vor.u32 %v1384, %v1225
      %v1386 = vsel %vm1364, %v1381, %v1385
      %v1388 = vshrl.u32 %v1332, 16
      %v1390 = vrot.slane %v1388, 7
      %v1391 = vshll.u32 %v1332, 16
      %v1393 = vor.u32 %v1390, %v1391
      %v1394 = vsel %vm1364, %v1384, %v1393
      %1395 = vrot.lane.b32.xlu0 %v1371, 16
      %v1396 = vpop.permute.xlu0 %1395
      %1397 = vrot.lane.b32.xlu0 %v1374, 16
      %v1398 = vpop.permute.xlu0 %1397
      %1399 = vrot.lane.b32.xlu0 %v1377, 16
      %v1400 = vpop.permute.xlu0 %1399
      %1401 = vrot.lane.b32.xlu0 %v1380, 16
      %v1402 = vpop.permute.xlu0 %1401
      %1403 = vrot.lane.b32.xlu0 %v1383, 16
      %v1404 = vpop.permute.xlu0 %1403
      %1405 = vrot.lane.b32.xlu0 %v1386, 16
      %v1406 = vpop.permute.xlu0 %1405
      %1407 = vrot.lane.b32.xlu0 %v1394, 16
      %v1408 = vpop.permute.xlu0 %1407
      %v1411 = vsel %vm891, %v868, %v1125
      %v1413 = vsel %vm891, %v313, %v1127
      %v1415 = vsel %vm891, %v691, %v1129
      %v1417 = vsel %vm891, %v869, %v1131
      %v1419 = vsel %vm891, %v1088, %v1133
      %v1421 = vsel %vm904, %v1411, %v1146
      %v1423 = vsel %vm904, %v1413, %v1148
      %v1425 = vsel %vm904, %v1415, %v1150
      %v1427 = vsel %vm904, %v1417, %v1152
      %v1429 = vsel %vm904, %v1419, %v1154
      %v1431 = vsel %vm917, %v1421, %v1186
      %v1433 = vsel %vm917, %v912, %v1188
      %v1435 = vsel %vm917, %v914, %v1190
      %v1437 = vsel %vm917, %v1423, %v1192
      %v1439 = vsel %vm917, %v1425, %v1194
      %v1441 = vsel %vm917, %v1427, %v1196
      %v1443 = vsel %vm917, %v1429, %v1198
      %v1445 = vsel %vm930, %v1431, %v1231
      %v1447 = vsel %vm930, %v1433, %v1233
      %v1449 = vsel %vm930, %v1435, %v1235
      %v1451 = vsel %vm930, %v1437, %v1237
      %v1453 = vsel %vm930, %v1439, %v1239
      %v1455 = vsel %vm930, %v1441, %v1241
      %v1457 = vsel %vm930, %v1443, %v1243
      %v1459 = vsel %vm943, %v1445, %v1262
      %v1461 = vsel %vm943, %v1447, %v1264
      %v1463 = vsel %vm943, %v1449, %v1266
      %v1465 = vsel %vm943, %v1451, %v1268
      %v1467 = vsel %vm943, %v1453, %v1270
      %v1469 = vsel %vm943, %v1455, %v1272
      %v1471 = vsel %vm943, %v1457, %v1274
      %v1473 = vsel %vm956, %v1459, %v1317
      %v1475 = vsel %vm956, %v1461, %v1319
      %v1477 = vsel %vm956, %v1463, %v1321
      %v1479 = vsel %vm956, %v1465, %v1323
      %v1481 = vsel %vm956, %v1467, %v1325
      %v1483 = vsel %vm956, %v1469, %v1327
      %v1485 = vsel %vm956, %v1471, %v1329
      %v1487 = vsel %vm969, %v1473, %v1348
      %v1489 = vsel %vm969, %v1475, %v1350
      %v1491 = vsel %vm969, %v1477, %v1352
      %v1493 = vsel %vm969, %v1479, %v1354
      %v1495 = vsel %vm969, %v1481, %v1356
      %v1497 = vsel %vm969, %v1483, %v1358
      %v1499 = vsel %vm969, %v1485, %v1360
      %v1501 = vsel %vm982, %v1487, %v1396
      %v1503 = vsel %vm982, %v1489, %v1398
      %v1505 = vsel %vm982, %v1491, %v1400
      %v1507 = vsel %vm982, %v1493, %v1402
      %v1509 = vsel %vm982, %v1495, %v1404
      %v1511 = vsel %vm982, %v1497, %v1406
      %v1513 = vsel %vm982, %v1499, %v1408
      %v1514 = vshrl.u32 %v1501, 16
      %v1516 = vrot.slane %v1514, 2
      %v1517 = vshll.u32 %v1501, 16
      %v1519 = vrot.slane %v1517, 3
      %v1520 = vor.u32 %v1516, %v1519
      %v1521 = vshrl.u32 %v1503, 16
      %v1523 = vrot.slane %v1521, 2
      %v1524 = vshll.u32 %v1503, 16
      %v1526 = vrot.slane %v1524, 3
      %v1527 = vor.u32 %v1523, %v1526
      %v1528 = vsel %vm534, %v1520, %v1527
      %v1529 = vshrl.u32 %v1505, 16
      %v1531 = vrot.slane %v1529, 2
      %v1532 = vshll.u32 %v1505, 16
      %v1534 = vrot.slane %v1532, 3
      %v1535 = vor.u32 %v1531, %v1534
      %v1536 = vsel %vm534, %v1527, %v1535
      %v1537 = vshrl.u32 %v1507, 16
      %v1539 = vrot.slane %v1537, 2
      %v1540 = vshll.u32 %v1507, 16
      %v1542 = vrot.slane %v1540, 3
      %v1543 = vor.u32 %v1539, %v1542
      %v1544 = vsel %vm534, %v1535, %v1543
      %v1545 = vshrl.u32 %v1509, 16
      %v1547 = vrot.slane %v1545, 2
      %v1548 = vshll.u32 %v1509, 16
      %v1550 = vrot.slane %v1548, 3
      %v1551 = vor.u32 %v1547, %v1550
      %v1552 = vsel %vm534, %v1543, %v1551
      %v1553 = vshrl.u32 %v1511, 16
      %v1555 = vrot.slane %v1553, 2
      %v1556 = vshll.u32 %v1511, 16
      %v1558 = vrot.slane %v1556, 3
      %v1559 = vor.u32 %v1555, %v1558
      %v1560 = vsel %vm534, %v1551, %v1559
      %v1561 = vshrl.u32 %v1513, 16
      %v1563 = vrot.slane %v1561, 2
      %v1564 = vshll.u32 %v1513, 16
      %v1566 = vrot.slane %v1564, 3
      %v1567 = vor.u32 %v1563, %v1566
      %v1568 = vsel %vm534, %v1559, %v1567
      %1569 = vrot.lane.b32.xlu0 %v1528, 32
      %v1570 = vpop.permute.xlu0 %1569
      %1571 = vrot.lane.b32.xlu0 %v1536, 32
      %v1572 = vpop.permute.xlu0 %1571
      %1573 = vrot.lane.b32.xlu0 %v1544, 32
      %v1574 = vpop.permute.xlu0 %1573
      %1575 = vrot.lane.b32.xlu0 %v1552, 32
      %v1576 = vpop.permute.xlu0 %1575
      %1577 = vrot.lane.b32.xlu0 %v1560, 32
      %v1578 = vpop.permute.xlu0 %1577
      %1579 = vrot.lane.b32.xlu0 %v1568, 32
      %v1580 = vpop.permute.xlu0 %1579
      %vm1581 = vcmask 261120
      %v1583 = vsel %vm1581, %v1075, %v1570
      %v1585 = vsel %vm1581, %v1077, %v1572
      %v1587 = vsel %vm1581, %v1079, %v1574
      %v1589 = vsel %vm1581, %v1081, %v1576
      %v1591 = vsel %vm1581, %v1083, %v1578
      %v1593 = vsel %vm1581, %v1085, %v1580
      %v1594 = vld [vmem:[%s220] sm:$0xff]
      %v1595 = vld [vmem:[%s220 + $0x8] sm:$0xff]
      %v1596 = vld [vmem:[%s220 + $0x10] sm:$0xff]
      %v1597 = vld [vmem:[%s220 + $0x18] sm:$0xff]
      %v1598 = vld [vmem:[%s220 + $0x20] sm:$0xff]
      %v1599 = vld [vmem:[%s220 + $0x28] sm:$0xff]
      %v1600 = vld [vmem:[%s220 + $0x30] sm:$0xff]
      %v1601 = vld [vmem:[%s220 + $0x38] sm:$0xff]
      %v1602 = vld [vmem:[%s220 + $0x40] sm:$0xff]
      %v1603 = vld [vmem:[%s220 + $0x48] sm:$0xff]
      %v1604 = vld [vmem:[%s220 + $0x50] sm:$0xff]
      %v1605 = vld [vmem:[%s220 + $0x58] sm:$0xff]
      %s1606 = smul.u32 %s21, 7
      %s1607 = smul.addr %s1606, 4
      %s1608 = scalar_lea.vmem %s1, %s1607
      %v1609 = vld [vmem:[%s1608] sm:$0xf]
      %v1610 = vld [vmem:[%s1608 + $0x4] sm:$0xf]
      %v1611 = vld [vmem:[%s1608 + $0x8] sm:$0xf]
      %v1612 = vld [vmem:[%s1608 + $0xc] sm:$0xf]
      %v1613 = vld [vmem:[%s1608 + $0x10] sm:$0xf]
      %v1614 = vld [vmem:[%s1608 + $0x14] sm:$0xf]
      %v1615 = vld [vmem:[%s1608 + $0x18] sm:$0x1]
      %v1623 = vunpack.c.l.b16 %v1609
      %v1624 = vunpack.c.l.b16 %v1610
      %v1625 = vunpack.c.l.b16 %v1611
      %v1626 = vunpack.c.l.b16 %v1612
      %v1627 = vunpack.c.l.b16 %v1613
      %v1628 = vunpack.c.l.b16 %v1614
      %v1629 = vunpack.c.l.b16 %v1615
      %v1630 = vpack.c.b16 %v1624, %v1623
      %v1631 = vpack.c.b16 %v1626, %v1625
      %v1632 = vpack.c.b16 %v1628, %v1627
      %v1633 = vpack.c.b16 %v1629, %v1629
      %vm1637 = vcmask 408576
      %v1638 = vsel %vm1637, %v1583, 0
      %v1640 = vsel %vm1637, %v1585, 0
      %v1642 = vsel %vm1637, %v1587, 0
      %v1644 = vsel %vm1637, %v1589, 0
      %v1646 = vsel %vm1637, %v1591, 0
      %v1648 = vsel %vm1637, %v1593, 0
      %vm1650 = vcmask 1040384
      %v1652 = vsel %vm1650, %v1633, 0
      %1654 = vmatprep.subr.bf16.mxu0 0
      %1655 = vmatpush1.bf16.msra.mxu0 0
      %1656 = vmatprep.subr.bf16.mxu0 0
      %1657 = vmatpush1.bf16.msra.mxu0 0
      %1658 = vmatprep.subr.bf16.mxu0 0
      %1659 = vmatpush1.bf16.msra.mxu0 0
      %1660 = vmatprep.subr.bf16.mxu0 0
      %1661 = vmatpush1.bf16.msra.mxu0 0
      %1662 = vmatprep.subr.bf16.mxu0 0
      %1663 = vmatpush1.bf16.msra.mxu0 %v1652
      %1664 = vmatprep.subr.bf16.mxu0 0
      %1665 = vmatpush1.bf16.msra.mxu0 %v1632
      %1666 = vmatprep.subr.bf16.mxu0 0
      %1667 = vmatpush1.bf16.msra.mxu0 %v1631
      %1668 = vmatprep.subr.bf16.mxu0 0
      %1669 = vmatpush1.bf16.msra.mxu0 %v1630
      %1670 = vmatprep.subr.bf16.mxu0 0
      %1671 = vmatpush2.bf16.msra.mxu0 0
      %1672 = vmatprep.subr.bf16.mxu0 0
      %1673 = vmatpush2.bf16.msra.mxu0 0
      %1674 = vmatprep.subr.bf16.mxu0 0
      %1675 = vmatpush2.bf16.msra.mxu0 0
      %1676 = vmatprep.subr.bf16.mxu0 0
      %1677 = vmatpush2.bf16.msra.mxu0 0
      %1678 = vmatprep.subr.bf16.mxu0 0
      %1679 = vmatpush2.bf16.msra.mxu0 0
      %1680 = vmatprep.subr.bf16.mxu0 0
      %1681 = vmatpush2.bf16.msra.mxu0 0
      %1682 = vmatprep.subr.bf16.mxu0 0
      %1683 = vmatpush2.bf16.msra.mxu0 0
      %1684 = vmatprep.subr.bf16.mxu0 0
      %1685 = vmatpush2.bf16.msra.mxu0 0
      %1686 = vmatprep.mubr.bf16.mxu0 0
      %1687 = vmatmul.mubr.bf16.gmra.mxu0 %v1638
      %v1688 = vpop.f32.mrf.mxu0
      %v1689 = vadd.f32 0.0, %v1688
      %v1690 = vpop.f32.mrf.mxu0
      %v1691 = vpop.f32.mrf.mxu0
      %v1692 = vadd.f32 0.0, %v1691
      %v1693 = vpop.f32.mrf.mxu0
      %1694 = vmatprep.mubr.bf16.mxu0 0
      %1695 = vmatmul.mubr.bf16.gmra.mxu0 %v1640
      %v1696 = vpop.f32.mrf.mxu0
      %v1697 = vadd.f32 0.0, %v1696
      %v1698 = vpop.f32.mrf.mxu0
      %v1699 = vpop.f32.mrf.mxu0
      %v1700 = vadd.f32 0.0, %v1699
      %v1701 = vpop.f32.mrf.mxu0
      %1702 = vmatprep.mubr.bf16.mxu0 0
      %1703 = vmatmul.mubr.bf16.gmra.mxu0 %v1642
      %v1704 = vpop.f32.mrf.mxu0
      %v1705 = vadd.f32 0.0, %v1704
      %v1706 = vpop.f32.mrf.mxu0
      %v1707 = vpop.f32.mrf.mxu0
      %v1708 = vadd.f32 0.0, %v1707
      %v1709 = vpop.f32.mrf.mxu0
      %1710 = vmatprep.mubr.bf16.mxu0 0
      %1711 = vmatmul.mubr.bf16.gmra.mxu0 %v1644
      %v1712 = vpop.f32.mrf.mxu0
      %v1713 = vadd.f32 0.0, %v1712
      %v1714 = vpop.f32.mrf.mxu0
      %v1715 = vpop.f32.mrf.mxu0
      %v1716 = vadd.f32 0.0, %v1715
      %v1717 = vpop.f32.mrf.mxu0
      %1718 = vmatprep.mubr.bf16.mxu0 0
      %1719 = vmatmul.mubr.bf16.gmra.mxu0 %v1646
      %v1720 = vpop.f32.mrf.mxu0
      %v1721 = vadd.f32 0.0, %v1720
      %v1722 = vpop.f32.mrf.mxu0
      %v1723 = vpop.f32.mrf.mxu0
      %v1724 = vadd.f32 0.0, %v1723
      %v1725 = vpop.f32.mrf.mxu0
      %1726 = vmatprep.mubr.bf16.mxu0 0
      %1727 = vmatmul.mubr.bf16.gmra.mxu0 %v1648
      %v1728 = vpop.f32.mrf.mxu0
      %v1729 = vadd.f32 0.0, %v1728
      %v1730 = vpop.f32.mrf.mxu0
      %v1731 = vpop.f32.mrf.mxu0
      %v1732 = vadd.f32 0.0, %v1731
      %v1733 = vpop.f32.mrf.mxu0
      %1734 = vdwg.mxu0
      %v1735 = vadd.f32 %v1594, %v1689
      %v1736 = vadd.f32 %v1595, %v1692
      %v1737 = vadd.f32 %v1596, %v1697
      %v1738 = vadd.f32 %v1597, %v1700
      %v1739 = vadd.f32 %v1598, %v1705
      %v1740 = vadd.f32 %v1599, %v1708
      %v1741 = vadd.f32 %v1600, %v1713
      %v1742 = vadd.f32 %v1601, %v1716
      %v1743 = vadd.f32 %v1602, %v1721
      %v1744 = vadd.f32 %v1603, %v1724
      %v1745 = vadd.f32 %v1604, %v1729
      %v1746 = vadd.f32 %v1605, %v1732
      %1747 = vst.msk [vmem:[%s220] sm:$0xff] %vm904, %v1735
      %1748 = vst.msk [vmem:[%s220 + $0x8] sm:$0xff] %vm904, %v1736
      %1749 = vst.msk [vmem:[%s220 + $0x10] sm:$0xff] %vm904, %v1737
      %1750 = vst.msk [vmem:[%s220 + $0x18] sm:$0xff] %vm904, %v1738
      %1751 = vst.msk [vmem:[%s220 + $0x20] sm:$0xff] %vm904, %v1739
      %1752 = vst.msk [vmem:[%s220 + $0x28] sm:$0xff] %vm904, %v1740
      %1753 = vst.msk [vmem:[%s220 + $0x30] sm:$0xff] %vm904, %v1741
      %1754 = vst.msk [vmem:[%s220 + $0x38] sm:$0xff] %vm904, %v1742
      %1755 = vst.msk [vmem:[%s220 + $0x40] sm:$0xff] %vm904, %v1743
      %1756 = vst.msk [vmem:[%s220 + $0x48] sm:$0xff] %vm904, %v1744
      %1757 = vst.msk [vmem:[%s220 + $0x50] sm:$0xff] %vm904, %v1745
      %1758 = vst.msk [vmem:[%s220 + $0x58] sm:$0xff] %vm904, %v1746
      %p1759 = scmp.eq.s32.totalorder %s21, 4
      // Predicated region
      $region37: #{inception_pallas.5} parent=31 // pred_check
        %p1760 = pneg %p1759
      $region38: #{inception_pallas.5} parent=31 // pred_check_branch
        %1762 = sbr.rel (%p1760) target = $region40
      $region39: #{inception_pallas.5} parent=31 // pred_region
        %v1763 = vld [vmem:[%s220] sm:$0xff]
        %v1764 = vld [vmem:[%s220 + $0x8] sm:$0xff]
        %v1765 = vld [vmem:[%s220 + $0x10] sm:$0xff]
        %v1766 = vld [vmem:[%s220 + $0x18] sm:$0xff]
        %v1767 = vld [vmem:[%s220 + $0x20] sm:$0xff]
        %v1768 = vld [vmem:[%s220 + $0x28] sm:$0xff]
        %v1769 = vld [vmem:[%s220 + $0x30] sm:$0xff]
        %v1770 = vld [vmem:[%s220 + $0x38] sm:$0xff]
        %v1771 = vld [vmem:[%s220 + $0x40] sm:$0xff]
        %v1772 = vld [vmem:[%s220 + $0x48] sm:$0xff]
        %v1773 = vld [vmem:[%s220 + $0x50] sm:$0xff]
        %v1774 = vld [vmem:[%s220 + $0x58] sm:$0xff]
        %v1775 = vmax.f32 %v1763, 0.0
        %v1776 = vmax.f32 %v1764, 0.0
        %v1777 = vmax.f32 %v1765, 0.0
        %v1778 = vmax.f32 %v1766, 0.0
        %v1779 = vmax.f32 %v1767, 0.0
        %v1780 = vmax.f32 %v1768, 0.0
        %v1781 = vmax.f32 %v1769, 0.0
        %v1782 = vmax.f32 %v1770, 0.0
        %v1783 = vmax.f32 %v1771, 0.0
        %v1784 = vmax.f32 %v1772, 0.0
        %v1785 = vmax.f32 %v1773, 0.0
        %v1786 = vmax.f32 %v1774, 0.0
        %1787 = vst.msk [vmem:[%s220] sm:$0xff] %vm904, %v1775
        %1788 = vst.msk [vmem:[%s220 + $0x8] sm:$0xff] %vm904, %v1776
        %1789 = vst.msk [vmem:[%s220 + $0x10] sm:$0xff] %vm904, %v1777
        %1790 = vst.msk [vmem:[%s220 + $0x18] sm:$0xff] %vm904, %v1778
        %1791 = vst.msk [vmem:[%s220 + $0x20] sm:$0xff] %vm904, %v1779
        %1792 = vst.msk [vmem:[%s220 + $0x28] sm:$0xff] %vm904, %v1780
        %1793 = vst.msk [vmem:[%s220 + $0x30] sm:$0xff] %vm904, %v1781
        %1794 = vst.msk [vmem:[%s220 + $0x38] sm:$0xff] %vm904, %v1782
        %1795 = vst.msk [vmem:[%s220 + $0x40] sm:$0xff] %vm904, %v1783
        %1796 = vst.msk [vmem:[%s220 + $0x48] sm:$0xff] %vm904, %v1784
        %1797 = vst.msk [vmem:[%s220 + $0x50] sm:$0xff] %vm904, %v1785
        %1798 = vst.msk [vmem:[%s220 + $0x58] sm:$0xff] %vm904, %v1786
      $region40: #{inception_pallas.5} parent=31 // pred_fallthru
        _
      %p1799 = scmp.lt.s32.totalorder %s19, 1
      %s1800 = scalar_select %p1799, %s19, 1
      %p1801 = scmp.lt.s32.totalorder %s20, 7
      %s1802 = scalar_select %p1801, %s20, 7
      %s1803 = smul.addr %s1802, 12
      %s1804 = smul.addr %s1800, 96
      %s1805 = sadd.s32 %s1803, %s1804
      %s1806 = smul.addr %s1805, 8
      %s1807 = scalar_lea.vmem %s3, %s1806
      // Predicated region
      $region41: #{inception_pallas.5} parent=31 // pred_check
        %p1808 = pneg %p125
      $region42: #{inception_pallas.5} parent=31 // pred_check_branch
        %1810 = sbr.rel (%p1808) target = $region44
      $region43: #{inception_pallas.5} parent=31 // pred_region
        _
      $region44: #{inception_pallas.5} parent=31 // pred_fallthru
        _
    $region32: #{inception_pallas.5} parent=5 // pred_fallthru
      _
    %p1811 = scmp.le.s32.totalorder 2, %s9
    // Predicated region
    $region45: #{inception_pallas.5} parent=5 // pred_check
      %p1812 = pneg %p1811
    $region46: #{inception_pallas.5} parent=5 // pred_check_branch
      %1814 = sbr.rel (%p1812) target = $region48
    $region47: #{inception_pallas.5} parent=5 // pred_region
      %s1815 = ssub.s32 %s9, 2
      // Predicated region
      $region49: #{inception_pallas.5} parent=47 // pred_check
        %p1816 = pneg %p131
      $region50: #{inception_pallas.5} parent=47 // pred_check_branch
        %1818 = sbr.rel (%p1816) target = $region52
      $region51: #{inception_pallas.5} parent=47 // pred_region
        %p1819 = scmp.lt.s32.totalorder %s22, 1
        %s1820 = scalar_select %p1819, %s22, 1
        %p1821 = scmp.lt.s32.totalorder %s23, 7
        %s1822 = scalar_select %p1821, %s23, 7
        %s1823 = smul.addr %s1822, 12
        %s1824 = smul.addr %s1820, 96
        %s1825 = sadd.s32 %s1823, %s1824
        %s1826 = smul.addr %s1825, 8
        %s1827 = scalar_lea.vmem %s3, %s1826
      $region52: #{inception_pallas.5} parent=47 // pred_fallthru
        _
    $region48: #{inception_pallas.5} parent=5 // pred_fallthru
      _
  $region6: #{inception_pallas.5} parent=0 // loop_footer
    %s13 = sadd.s32 1, %s9
  $region7: #{inception_pallas.5} parent=0 // loop_footer_branch
    %8 = sbr.rel target = $region3
  $region8: #{inception_pallas.5} parent=0 // loop_exit
    _

</llo_original>
